<compile_context>
chip_gen: v7x
topology: tpu7x:2x2x1
jax: 0.10.0
libtpu: 0.0.40
codegen_flags: <defaults>
</compile_context>

<pallas_src>
import jax
import jax.numpy as jnp
from jax.experimental import pallas as pl
from jax.experimental.pallas import tpu as pltpu


def _round_up(v, m):
    return ((v + m - 1) // m) * m


def _pale_mlp_kernel(x_ref, w1_ref, b1_ref, w2_ref, b2_ref, o_ref, acc_ref):
    """One (batch-tile, hidden-chunk) grid step.

    grid = (num_batch_tiles, num_hidden_chunks). The hidden axis is the
    reduction axis of the second Linear; partial products are accumulated in
    an f32 VMEM scratch and finalized (bias + normalize) at the last chunk.
    """
    k = pl.program_id(1)

    @pl.when(k == 0)
    def _():
        acc_ref[...] = jnp.zeros_like(acc_ref)

    # ---- Linear 1 chunk (D -> TILE_K): bf16 MXU inputs, f32 accumulation ----
    h = jnp.dot(x_ref[...].astype(jnp.bfloat16), w1_ref[...],
                preferred_element_type=jnp.float32)
    z = h + b1_ref[...]
    # sigmoid(z) == 0.5 * tanh(0.5 * z) + 0.5  (single EUP push per element
    # instead of exp + reciprocal; exact same math).
    a = 0.5 * jnp.tanh(0.5 * z) + 0.5

    # ---- Linear 2 partial (TILE_K -> D), accumulated over hidden chunks ----
    acc_ref[...] += jnp.dot(a.astype(jnp.bfloat16), w2_ref[...],
                            preferred_element_type=jnp.float32)

    @pl.when(k == pl.num_programs(1) - 1)
    def _():
        y = acc_ref[...] + b2_ref[...]
        # F.normalize(dim=1): y / max(||y||, 1e-12) == y * rsqrt(max(||y||^2, 1e-24))
        sq = jnp.sum(y * y, axis=1, keepdims=True)
        inv = jax.lax.rsqrt(jnp.maximum(sq, 1e-24))
        o_ref[...] = (y * inv).astype(o_ref.dtype)


def _vmem_bytes(tile_n, d, tile_k, num_k, x_itemsize, out_itemsize, x_buffers):
    """Rough per-TensorCore VMEM footprint (bytes) for the chosen tiling."""
    x_buf = tile_n * d * x_itemsize * x_buffers          # pipelined x tiles
    out_buf = tile_n * d * out_itemsize * 2               # output double-buffer
    acc = tile_n * d * 4                                  # f32 accumulator
    w_bufs = 1 if num_k == 1 else 2                       # resident vs pipelined
    weights = 2 * (d * tile_k * 2) * w_bufs               # W1 + W2 chunks (bf16)
    biases = (tile_k * w_bufs + d) * 4
    hidden = tile_n * tile_k * (4 + 2)                     # f32 h + bf16 cast copy
    return x_buf + out_buf + acc + weights + biases + hidden


def pale_mapping_mlp_forward(x, w1, b1, w2, b2, *, tile_n=512, hidden_tile=None,
                             x_buffers=2):
    """x: (N, D) f32, w1: (D, 2D), b1: (2D,), w2: (2D, D), b2: (D,).

    Weights are the transposed nn.Linear weights (in_features, out_features).
    Set x_buffers=3 if profiling shows exposed x-tile DMA on v6e/v7x.
    """
    n, d = x.shape
    hidden = w1.shape[1]
    assert w1.shape == (d, hidden) and w2.shape == (hidden, d)
    assert b1.shape == (hidden,) and b2.shape == (d,)

    x_itemsize = jnp.dtype(x.dtype).itemsize
    out_itemsize = x_itemsize

    try:
        phys_vmem = int(pltpu.get_tpu_info().vmem_capacity_bytes)
    except Exception:
        phys_vmem = 64 * 1024 * 1024      # be conservative: v7x per-TC size

    # --- batch tile: large for HBM roofline, but keep >= 2 grid steps so the
    #     "parallel" batch axis can shard across v7x's two TensorCores. ---
    tile_n = min(tile_n, _round_up(n, 8))
    if n > 16:
        tile_n = min(tile_n, _round_up(-(-n // 2), 8))
    tile_n = _round_up(max(tile_n, 8), 8)

    # --- hidden chunk: keep the whole hidden dim (weights VMEM-resident,
    #     single-buffered) when it fits comfortably; otherwise tile it as an
    #     "arbitrary" reduction axis with the f32 accumulator. ---
    if hidden_tile is None:
        hidden_tile = hidden
        budget = phys_vmem // 2           # conservative so it also fits v7x
        while (_vmem_bytes(tile_n, d, hidden_tile, hidden // hidden_tile,
                           x_itemsize, out_itemsize, x_buffers) > budget
               and hidden_tile % 2 == 0 and (hidden_tile // 2) % 128 == 0):
            hidden_tile //= 2
    assert hidden % hidden_tile == 0, "hidden_tile must divide the hidden dim"

    num_n = pl.cdiv(n, tile_n)
    num_k = hidden // hidden_tile
    resident = num_k == 1

    need = _vmem_bytes(tile_n, d, hidden_tile, num_k,
                       x_itemsize, out_itemsize, x_buffers)
    vmem_limit = min(int(0.75 * phys_vmem),                 # headroom for Mosaic
                     max(32 * 1024 * 1024, int(1.5 * need) + (4 << 20)))

    # bf16 weights: MXU peak throughput + half the resident VMEM footprint.
    w1_bf = w1.astype(jnp.bfloat16)
    w2_bf = w2.astype(jnp.bfloat16)
    b1_2d = b1.reshape(1, hidden).astype(jnp.float32)
    b2_2d = b2.reshape(1, d).astype(jnp.float32)

    cost = pl.CostEstimate(
        flops=4 * n * d * hidden,                            # two matmuls
        transcendentals=n * hidden + n,                      # tanh + rsqrt
        bytes_accessed=(x.size * x_itemsize + (w1.size + w2.size) * 2
                        + (hidden + d) * 4 + n * d * out_itemsize),
    )

    def _call(use_pipeline_mode):
        def spec(shape, imap, mode=None):
            if mode is not None and use_pipeline_mode:
                return pl.BlockSpec(shape, imap, pipeline_mode=mode)
            return pl.BlockSpec(shape, imap)

        # Resident weights (constant index map) need only one buffer; when the
        # hidden axis is tiled they change with k -> keep default 2 buffers.
        w_mode = pl.Buffered(1) if resident else None
        x_mode = pl.Buffered(x_buffers) if x_buffers != 2 else None

        grid_spec = pltpu.PrefetchScalarGridSpec(
            num_scalar_prefetch=0,
            grid=(num_n, num_k),
            in_specs=[
                spec((tile_n, d), lambda i, k: (i, 0), x_mode),        # x
                spec((d, hidden_tile), lambda i, k: (0, k), w_mode),   # W1 chunk
                spec((1, hidden_tile), lambda i, k: (0, k), w_mode),   # b1 chunk
                spec((hidden_tile, d), lambda i, k: (k, 0), w_mode),   # W2 chunk
                spec((1, d), lambda i, k: (0, 0), pl.Buffered(1)),     # b2
            ],
            out_specs=pl.BlockSpec((tile_n, d), lambda i, k: (i, 0)),
            scratch_shapes=[pltpu.VMEM((tile_n, d), jnp.float32)],
        )
        return pl.pallas_call(
            _pale_mlp_kernel,
            out_shape=jax.ShapeDtypeStruct((n, d), x.dtype),
            grid_spec=grid_spec,
            compiler_params=pltpu.CompilerParams(
                dimension_semantics=("parallel", "arbitrary"),
                vmem_limit_bytes=vmem_limit,
            ),
            cost_estimate=cost,
        )(x, w1_bf, b1_2d, w2_bf, b2_2d)

    try:
        return _call(True)
    except Exception:
        # Fallback for jax builds whose TPU pallas_call lowering does not
        # support BlockSpec.pipeline_mode: use default double-buffering.
        return _call(False)


def _reference_forward(x, w1, b1, w2, b2):
    h = jax.nn.sigmoid(x @ w1 + b1)
    y = h @ w2 + b2
    norm = jnp.sqrt(jnp.sum(y * y, axis=1, keepdims=True))
    return y / jnp.maximum(norm, 1e-12)


if __name__ == "__main__":
    embedding_dim = 128          # multiple of 128 -> lane-dense stores
    hidden_dim = 2 * embedding_dim
    batch = 512                  # -> 2 batch tiles (dual-TC friendly on v7x)

    key = jax.random.PRNGKey(0)
    kx, kw1, kb1, kw2, kb2 = jax.random.split(key, 5)

    x = jax.random.normal(kx, (batch, embedding_dim), dtype=jnp.float32)
    # nn.Linear weights are (out, in); stored here transposed as (in, out).
    w1 = jax.random.normal(kw1, (embedding_dim, hidden_dim), dtype=jnp.float32) * 0.1
    b1 = jax.random.normal(kb1, (hidden_dim,), dtype=jnp.float32) * 0.1
    w2 = jax.random.normal(kw2, (hidden_dim, embedding_dim), dtype=jnp.float32) * 0.1
    b2 = jax.random.normal(kb2, (embedding_dim,), dtype=jnp.float32) * 0.1

    ref = _reference_forward(x, w1, b1, w2, b2)

    # Path 1: auto config -> weights fully VMEM-resident (single hidden step).
    out_resident = jax.block_until_ready(
        pale_mapping_mlp_forward(x, w1, b1, w2, b2))
    # Path 2: force hidden-dim tiling (2 chunks) to exercise the accumulator
    # path used at production widths on v7x.
    out_tiled = jax.block_until_ready(
        pale_mapping_mlp_forward(x, w1, b1, w2, b2, hidden_tile=128))

    for out in (out_resident, out_tiled):
        assert out.shape == (batch, embedding_dim)
        max_err = float(jnp.max(jnp.abs(out - ref)))
        # bf16 MXU inputs (f32 accumulation) vs full-f32 reference.
        assert max_err < 2e-2, f"mismatch vs reference: max abs err {max_err}"

    print("KERNEL_OK")
</pallas_src>

<mosaic_0001>
module attributes {stable_mosaic.version = 11 : i64} {
  func.func @_pale_mlp_kernel(%arg0: i32, %arg1: i32, %arg2: memref<256x128xf32, #tpu.memory_space<vmem>>, %arg3: memref<128x256xbf16, #tpu.memory_space<vmem>>, %arg4: memref<1x256xf32, #tpu.memory_space<vmem>>, %arg5: memref<256x128xbf16, #tpu.memory_space<vmem>>, %arg6: memref<1x128xf32, #tpu.memory_space<vmem>>, %arg7: memref<256x128xf32, #tpu.memory_space<vmem>>, %arg8: memref<256x128xf32, #tpu.memory_space<vmem>>) attributes {dimension_semantics = [#tpu.dimension_semantics<parallel>, #tpu.dimension_semantics<arbitrary>], iteration_bounds = array<i64: 2, 1>, scalar_prefetch = 0 : i64, scratch_operands = 1 : i64, tpu.core_type = #tpu.core_type<tc>, window_params = [{transform_indices = @transform_0, window_bounds = array<i64: 256, 128>}, {pipeline_mode = #tpu.pipeline_mode<synchronous>, transform_indices = @transform_1, window_bounds = array<i64: 128, 256>}, {pipeline_mode = #tpu.pipeline_mode<synchronous>, transform_indices = @transform_2, window_bounds = array<i64: 1, 256>}, {pipeline_mode = #tpu.pipeline_mode<synchronous>, transform_indices = @transform_3, window_bounds = array<i64: 256, 128>}, {pipeline_mode = #tpu.pipeline_mode<synchronous>, transform_indices = @transform_4, window_bounds = array<i64: 1, 128>}, {transform_indices = @transform_5, window_bounds = array<i64: 256, 128>}]} {
    %c0_i32 = arith.constant 0 : i32
    %0 = arith.cmpi eq, %arg1, %c0_i32 : i32
    %1 = arith.extui %0 : i1 to i32
    %c0_i32_0 = arith.constant 0 : i32
    %2 = arith.cmpi ne, %1, %c0_i32_0 : i32
    scf.if %2 {
      %cst_18 = arith.constant 0.000000e+00 : f32
      %26 = vector.broadcast %cst_18 : f32 to vector<256x128xf32>
      %c0_19 = arith.constant 0 : index
      %c0_20 = arith.constant 0 : index
      %27 = vector.load %arg8[%c0_19, %c0_20] : memref<256x128xf32, #tpu.memory_space<vmem>>, vector<256x128xf32>
      tpu.vector_store %arg8[%c0_19, %c0_20], %26 {strides = array<i32>} : memref<256x128xf32, #tpu.memory_space<vmem>>, vector<256x128xf32>,
    } else {
    }
    %c0 = arith.constant 0 : index
    %c0_1 = arith.constant 0 : index
    %3 = vector.load %arg2[%c0, %c0_1] : memref<256x128xf32, #tpu.memory_space<vmem>>, vector<256x128xf32>
    %4 = arith.truncf %3 : vector<256x128xf32> to vector<256x128xbf16>
    %c0_2 = arith.constant 0 : index
    %c0_3 = arith.constant 0 : index
    %5 = vector.load %arg3[%c0_2, %c0_3] : memref<128x256xbf16, #tpu.memory_space<vmem>>, vector<128x256xbf16>
    %cst = arith.constant dense<0.000000e+00> : vector<256x256xf32>
    %6 = tpu.matmul %4, %5, %cst {dimension_numbers = #tpu.dot_dimension_numbers<[1], [0], [0], [1], [0, 0, 1, 1], [], []>} : vector<256x128xbf16>, vector<128x256xbf16>, vector<256x256xf32> -> vector<256x256xf32>
    %c0_4 = arith.constant 0 : index
    %c0_5 = arith.constant 0 : index
    %7 = vector.load %arg4[%c0_4, %c0_5] : memref<1x256xf32, #tpu.memory_space<vmem>>, vector<1x256xf32>
    %8 = vector.broadcast %7 : vector<1x256xf32> to vector<256x256xf32>
    %9 = arith.addf %6, %8 : vector<256x256xf32>
    %cst_6 = arith.constant 5.000000e-01 : f32
    %10 = vector.broadcast %cst_6 : f32 to vector<256x256xf32>
    %11 = arith.mulf %10, %9 : vector<256x256xf32>
    %12 = math.tanh %11 : vector<256x256xf32>
    %cst_7 = arith.constant 5.000000e-01 : f32
    %13 = vector.broadcast %cst_7 : f32 to vector<256x256xf32>
    %14 = arith.mulf %13, %12 : vector<256x256xf32>
    %cst_8 = arith.constant 5.000000e-01 : f32
    %15 = vector.broadcast %cst_8 : f32 to vector<256x256xf32>
    %16 = arith.addf %14, %15 : vector<256x256xf32>
    %c0_9 = arith.constant 0 : index
    %c0_10 = arith.constant 0 : index
    %17 = vector.load %arg8[%c0_9, %c0_10] : memref<256x128xf32, #tpu.memory_space<vmem>>, vector<256x128xf32>
    %18 = arith.truncf %16 : vector<256x256xf32> to vector<256x256xbf16>
    %c0_11 = arith.constant 0 : index
    %c0_12 = arith.constant 0 : index
    %19 = vector.load %arg5[%c0_11, %c0_12] : memref<256x128xbf16, #tpu.memory_space<vmem>>, vector<256x128xbf16>
    %cst_13 = arith.constant dense<0.000000e+00> : vector<256x128xf32>
    %20 = tpu.matmul %18, %19, %cst_13 {dimension_numbers = #tpu.dot_dimension_numbers<[1], [0], [0], [1], [0, 0, 1, 1], [], []>} : vector<256x256xbf16>, vector<256x128xbf16>, vector<256x128xf32> -> vector<256x128xf32>
    %21 = arith.addf %17, %20 : vector<256x128xf32>
    %c0_14 = arith.constant 0 : index
    %c0_15 = arith.constant 0 : index
    %22 = vector.load %arg8[%c0_14, %c0_15] : memref<256x128xf32, #tpu.memory_space<vmem>>, vector<256x128xf32>
    tpu.vector_store %arg8[%c0_14, %c0_15], %21 {strides = array<i32>} : memref<256x128xf32, #tpu.memory_space<vmem>>, vector<256x128xf32>,
    %c0_i32_16 = arith.constant 0 : i32
    %23 = arith.cmpi eq, %arg1, %c0_i32_16 : i32
    %24 = arith.extui %23 : i1 to i32
    %c0_i32_17 = arith.constant 0 : i32
    %25 = arith.cmpi ne, %24, %c0_i32_17 : i32
    scf.if %25 {
      %c0_18 = arith.constant 0 : index
      %c0_19 = arith.constant 0 : index
      %26 = vector.load %arg8[%c0_18, %c0_19] : memref<256x128xf32, #tpu.memory_space<vmem>>, vector<256x128xf32>
      %c0_20 = arith.constant 0 : index
      %c0_21 = arith.constant 0 : index
      %27 = vector.load %arg6[%c0_20, %c0_21] : memref<1x128xf32, #tpu.memory_space<vmem>>, vector<1x128xf32>
      %28 = vector.broadcast %27 : vector<1x128xf32> to vector<256x128xf32>
      %29 = arith.addf %26, %28 : vector<256x128xf32>
      %30 = arith.mulf %29, %29 : vector<256x128xf32>
      %cst_22 = arith.constant dense<0.000000e+00> : vector<256xf32>
      %31 = vector.multi_reduction <add>, %30, %cst_22 [1] : vector<256x128xf32> to vector<256xf32>
      %32 = vector.shape_cast %31 : vector<256xf32> to vector<256x1xf32>
      %cst_23 = arith.constant 1.000000e-24 : f32
      %33 = vector.broadcast %cst_23 : f32 to vector<256x1xf32>
      %34 = arith.maximumf %32, %33 : vector<256x1xf32>
      %35 = math.rsqrt %34 : vector<256x1xf32>
      %36 = vector.broadcast %35 : vector<256x1xf32> to vector<256x128xf32>
      %37 = arith.mulf %29, %36 : vector<256x128xf32>
      %c0_24 = arith.constant 0 : index
      %c0_25 = arith.constant 0 : index
      %38 = vector.load %arg7[%c0_24, %c0_25] : memref<256x128xf32, #tpu.memory_space<vmem>>, vector<256x128xf32>
      tpu.vector_store %arg7[%c0_24, %c0_25], %37 {strides = array<i32>} : memref<256x128xf32, #tpu.memory_space<vmem>>, vector<256x128xf32>,
    } else {
    }
    return
  }
  func.func @transform_0(%arg0: i32, %arg1: i32) -> (i32, i32) {
    %c0_i32 = arith.constant 0 : i32
    %c0_i32_0 = arith.constant 0 : i32
    return %arg0, %c0_i32 : i32, i32
  }
  func.func @transform_1(%arg0: i32, %arg1: i32) -> (i32, i32) {
    %c0_i32 = arith.constant 0 : i32
    %c0_i32_0 = arith.constant 0 : i32
    return %c0_i32, %arg1 : i32, i32
  }
  func.func @transform_2(%arg0: i32, %arg1: i32) -> (i32, i32) {
    %c0_i32 = arith.constant 0 : i32
    %c0_i32_0 = arith.constant 0 : i32
    return %c0_i32, %arg1 : i32, i32
  }
  func.func @transform_3(%arg0: i32, %arg1: i32) -> (i32, i32) {
    %c0_i32 = arith.constant 0 : i32
    %c0_i32_0 = arith.constant 0 : i32
    return %arg1, %c0_i32 : i32, i32
  }
  func.func @transform_4(%arg0: i32, %arg1: i32) -> (i32, i32) {
    %c0_i32 = arith.constant 0 : i32
    %c0_i32_0 = arith.constant 0 : i32
    %c0_i32_1 = arith.constant 0 : i32
    return %c0_i32, %c0_i32_0 : i32, i32
  }
  func.func @transform_5(%arg0: i32, %arg1: i32) -> (i32, i32) {
    %c0_i32 = arith.constant 0 : i32
    %c0_i32_0 = arith.constant 0 : i32
    return %arg0, %c0_i32 : i32, i32
  }
}

module attributes {stable_mosaic.version = 11 : i64} {
  func.func @_pale_mlp_kernel(%arg0: i32, %arg1: i32, %arg2: memref<256x128xf32, #tpu.memory_space<vmem>>, %arg3: memref<128x256xbf16, #tpu.memory_space<vmem>>, %arg4: memref<1x256xf32, #tpu.memory_space<vmem>>, %arg5: memref<256x128xbf16, #tpu.memory_space<vmem>>, %arg6: memref<1x128xf32, #tpu.memory_space<vmem>>, %arg7: memref<256x128xf32, #tpu.memory_space<vmem>>, %arg8: memref<256x128xf32, #tpu.memory_space<vmem>>) attributes {dimension_semantics = [#tpu.dimension_semantics<parallel>, #tpu.dimension_semantics<arbitrary>], iteration_bounds = array<i64: 2, 1>, scalar_prefetch = 0 : i64, scratch_operands = 1 : i64, tpu.core_type = #tpu.core_type<tc>, window_params = [{transform_indices = @transform_0, window_bounds = array<i64: 256, 128>}, {transform_indices = @transform_1, window_bounds = array<i64: 128, 256>}, {transform_indices = @transform_2, window_bounds = array<i64: 1, 256>}, {transform_indices = @transform_3, window_bounds = array<i64: 256, 128>}, {pipeline_mode = #tpu.pipeline_mode<synchronous>, transform_indices = @transform_4, window_bounds = array<i64: 1, 128>}, {transform_indices = @transform_5, window_bounds = array<i64: 256, 128>}]} {
    %c0_i32 = arith.constant 0 : i32
    %0 = arith.cmpi eq, %arg1, %c0_i32 : i32
    %1 = arith.extui %0 : i1 to i32
    %c0_i32_0 = arith.constant 0 : i32
    %2 = arith.cmpi ne, %1, %c0_i32_0 : i32
    scf.if %2 {
      %cst_18 = arith.constant 0.000000e+00 : f32
      %26 = vector.broadcast %cst_18 : f32 to vector<256x128xf32>
      %c0_19 = arith.constant 0 : index
      %c0_20 = arith.constant 0 : index
      %27 = vector.load %arg8[%c0_19, %c0_20] : memref<256x128xf32, #tpu.memory_space<vmem>>, vector<256x128xf32>
      tpu.vector_store %arg8[%c0_19, %c0_20], %26 {strides = array<i32>} : memref<256x128xf32, #tpu.memory_space<vmem>>, vector<256x128xf32>,
    } else {
    }
    %c0 = arith.constant 0 : index
    %c0_1 = arith.constant 0 : index
    %3 = vector.load %arg2[%c0, %c0_1] : memref<256x128xf32, #tpu.memory_space<vmem>>, vector<256x128xf32>
    %4 = arith.truncf %3 : vector<256x128xf32> to vector<256x128xbf16>
    %c0_2 = arith.constant 0 : index
    %c0_3 = arith.constant 0 : index
    %5 = vector.load %arg3[%c0_2, %c0_3] : memref<128x256xbf16, #tpu.memory_space<vmem>>, vector<128x256xbf16>
    %cst = arith.constant dense<0.000000e+00> : vector<256x256xf32>
    %6 = tpu.matmul %4, %5, %cst {dimension_numbers = #tpu.dot_dimension_numbers<[1], [0], [0], [1], [0, 0, 1, 1], [], []>} : vector<256x128xbf16>, vector<128x256xbf16>, vector<256x256xf32> -> vector<256x256xf32>
    %c0_4 = arith.constant 0 : index
    %c0_5 = arith.constant 0 : index
    %7 = vector.load %arg4[%c0_4, %c0_5] : memref<1x256xf32, #tpu.memory_space<vmem>>, vector<1x256xf32>
    %8 = vector.broadcast %7 : vector<1x256xf32> to vector<256x256xf32>
    %9 = arith.addf %6, %8 : vector<256x256xf32>
    %cst_6 = arith.constant 5.000000e-01 : f32
    %10 = vector.broadcast %cst_6 : f32 to vector<256x256xf32>
    %11 = arith.mulf %10, %9 : vector<256x256xf32>
    %12 = math.tanh %11 : vector<256x256xf32>
    %cst_7 = arith.constant 5.000000e-01 : f32
    %13 = vector.broadcast %cst_7 : f32 to vector<256x256xf32>
    %14 = arith.mulf %13, %12 : vector<256x256xf32>
    %cst_8 = arith.constant 5.000000e-01 : f32
    %15 = vector.broadcast %cst_8 : f32 to vector<256x256xf32>
    %16 = arith.addf %14, %15 : vector<256x256xf32>
    %c0_9 = arith.constant 0 : index
    %c0_10 = arith.constant 0 : index
    %17 = vector.load %arg8[%c0_9, %c0_10] : memref<256x128xf32, #tpu.memory_space<vmem>>, vector<256x128xf32>
    %18 = arith.truncf %16 : vector<256x256xf32> to vector<256x256xbf16>
    %c0_11 = arith.constant 0 : index
    %c0_12 = arith.constant 0 : index
    %19 = vector.load %arg5[%c0_11, %c0_12] : memref<256x128xbf16, #tpu.memory_space<vmem>>, vector<256x128xbf16>
    %cst_13 = arith.constant dense<0.000000e+00> : vector<256x128xf32>
    %20 = tpu.matmul %18, %19, %cst_13 {dimension_numbers = #tpu.dot_dimension_numbers<[1], [0], [0], [1], [0, 0, 1, 1], [], []>} : vector<256x256xbf16>, vector<256x128xbf16>, vector<256x128xf32> -> vector<256x128xf32>
    %21 = arith.addf %17, %20 : vector<256x128xf32>
    %c0_14 = arith.constant 0 : index
    %c0_15 = arith.constant 0 : index
    %22 = vector.load %arg8[%c0_14, %c0_15] : memref<256x128xf32, #tpu.memory_space<vmem>>, vector<256x128xf32>
    tpu.vector_store %arg8[%c0_14, %c0_15], %21 {strides = array<i32>} : memref<256x128xf32, #tpu.memory_space<vmem>>, vector<256x128xf32>,
    %c0_i32_16 = arith.constant 0 : i32
    %23 = arith.cmpi eq, %arg1, %c0_i32_16 : i32
    %24 = arith.extui %23 : i1 to i32
    %c0_i32_17 = arith.constant 0 : i32
    %25 = arith.cmpi ne, %24, %c0_i32_17 : i32
    scf.if %25 {
      %c0_18 = arith.constant 0 : index
      %c0_19 = arith.constant 0 : index
      %26 = vector.load %arg8[%c0_18, %c0_19] : memref<256x128xf32, #tpu.memory_space<vmem>>, vector<256x128xf32>
      %c0_20 = arith.constant 0 : index
      %c0_21 = arith.constant 0 : index
      %27 = vector.load %arg6[%c0_20, %c0_21] : memref<1x128xf32, #tpu.memory_space<vmem>>, vector<1x128xf32>
      %28 = vector.broadcast %27 : vector<1x128xf32> to vector<256x128xf32>
      %29 = arith.addf %26, %28 : vector<256x128xf32>
      %30 = arith.mulf %29, %29 : vector<256x128xf32>
      %cst_22 = arith.constant dense<0.000000e+00> : vector<256xf32>
      %31 = vector.multi_reduction <add>, %30, %cst_22 [1] : vector<256x128xf32> to vector<256xf32>
      %32 = vector.shape_cast %31 : vector<256xf32> to vector<256x1xf32>
      %cst_23 = arith.constant 1.000000e-24 : f32
      %33 = vector.broadcast %cst_23 : f32 to vector<256x1xf32>
      %34 = arith.maximumf %32, %33 : vector<256x1xf32>
      %35 = math.rsqrt %34 : vector<256x1xf32>
      %36 = vector.broadcast %35 : vector<256x1xf32> to vector<256x128xf32>
      %37 = arith.mulf %29, %36 : vector<256x128xf32>
      %c0_24 = arith.constant 0 : index
      %c0_25 = arith.constant 0 : index
      %38 = vector.load %arg7[%c0_24, %c0_25] : memref<256x128xf32, #tpu.memory_space<vmem>>, vector<256x128xf32>
      tpu.vector_store %arg7[%c0_24, %c0_25], %37 {strides = array<i32>} : memref<256x128xf32, #tpu.memory_space<vmem>>, vector<256x128xf32>,
    } else {
    }
    return
  }
  func.func @transform_0(%arg0: i32, %arg1: i32) -> (i32, i32) {
    %c0_i32 = arith.constant 0 : i32
    %c0_i32_0 = arith.constant 0 : i32
    return %arg0, %c0_i32 : i32, i32
  }
  func.func @transform_1(%arg0: i32, %arg1: i32) -> (i32, i32) {
    %c0_i32 = arith.constant 0 : i32
    %c0_i32_0 = arith.constant 0 : i32
    return %c0_i32, %arg1 : i32, i32
  }
  func.func @transform_2(%arg0: i32, %arg1: i32) -> (i32, i32) {
    %c0_i32 = arith.constant 0 : i32
    %c0_i32_0 = arith.constant 0 : i32
    return %c0_i32, %arg1 : i32, i32
  }
  func.func @transform_3(%arg0: i32, %arg1: i32) -> (i32, i32) {
    %c0_i32 = arith.constant 0 : i32
    %c0_i32_0 = arith.constant 0 : i32
    return %arg1, %c0_i32 : i32, i32
  }
  func.func @transform_4(%arg0: i32, %arg1: i32) -> (i32, i32) {
    %c0_i32 = arith.constant 0 : i32
    %c0_i32_0 = arith.constant 0 : i32
    %c0_i32_1 = arith.constant 0 : i32
    return %c0_i32, %c0_i32_0 : i32, i32
  }
  func.func @transform_5(%arg0: i32, %arg1: i32) -> (i32, i32) {
    %c0_i32 = arith.constant 0 : i32
    %c0_i32_0 = arith.constant 0 : i32
    return %arg0, %c0_i32 : i32, i32
  }
}

</mosaic_0001>

<llo_original>
// kernel: tpu_custom_call.1
$region0: #{tpu_custom_call.1}
  #allocation0 [shape = 'u32[]', space=smem, size = 0x4, offset = 0x4, fixed_abs, tag = 'smem constant byte address 0x4 - core index']
  #allocation1 [shape = 'u32[144,128]{1,0:T(1,128)}', space=vmem, size = 0x12000, scoped, tag = 'internal scratch']
  #allocation2 [shape = 'f32[256,128]{1,0:T(8,128)}', space=vmem, size = 0x20000, scoped, tag = 'scratch operand']
  %s0 = inlined_call_operand.hbm [shape: f32[512,128], index: 0, kind: input, shape index: {}]
  %s1 = inlined_call_operand.hbm [shape: bf16[128,256], index: 1, kind: input, shape index: {}]
  %s2 = inlined_call_operand.vmem [shape: f32[1,256], index: 2, kind: input, shape index: {}]
  %s3 = inlined_call_operand.hbm [shape: bf16[256,128], index: 3, kind: input, shape index: {}]
  %s4 = inlined_call_operand.vmem [shape: f32[1,128], index: 4, kind: input, shape index: {}]
  %s5 = inlined_call_operand.hbm [shape: f32[512,128], index: 5, kind: output, shape index: {}]
  %s6 = sld [smem:[#allocation0]]
  $region73: #{tpu_custom_call.1} parent=0
    _
  %s8 = ssub.s32 1, %s6
  %s9 = scalar_select 0, %s8, %s6
  $region1: #{tpu_custom_call.1} parent=0
    #allocation3 [shape = 'u8[262144]{0}', space=vmem, size = 0x40000, scoped, tag = 'input window, operand 0']
    #allocation4 [shape = 's32[2]{0}', space=sflag, size = 0x8, scoped, tag = 'scoped memory for tpu_custom_call.1']
    #allocation5 [shape = 's32[2]{0}', space=sflag, size = 0x8, scoped, tag = 'scoped memory for tpu_custom_call.1']
    #allocation6 [shape = 'u8[65536]{0}', space=vmem, size = 0x10000, scoped, tag = 'input window, operand 1, single buffered']
    #allocation7 [shape = 's32[1]{0}', space=sflag, size = 0x4, scoped, tag = 'scoped memory for tpu_custom_call.1']
    #allocation8 [shape = 'u8[65536]{0}', space=vmem, size = 0x10000, scoped, tag = 'input window, operand 3, single buffered']
    #allocation9 [shape = 'u8[262144]{0}', space=vmem, size = 0x40000, scoped, tag = 'output window, operand 0']
    %10 = vsyncpa [#allocation4], 0
    %s11 = scalar_lea.sflag [#allocation4], 1
    %12 = vsyncpa %s11, 0
    %13 = vsyncpa [#allocation7], 0
    %14 = vsyncpa [#allocation5], 0
    %s15 = scalar_lea.sflag [#allocation5], 1
    %16 = vsyncpa %s15, 0
    loop: start=0, step=1, limit=4
    $region2: #{tpu_custom_call.1} parent=1 // loop_pre_header
      _
    $region3: #{tpu_custom_call.1} parent=1 // loop_header
      %s18 = sphi 0, %s22
      %p19 = scmp.ge.s32.totalorder %s18, 4
      %s25 = sphi 0, %s37
      %s26 = sphi 0, %s33
      %s27 = sphi 0, %s25
      %s28 = sphi 0, %s26
      %s29 = sphi 0, %s27
      %s30 = sphi 0, %s28
      %s40 = sphi 0, %s42
      %s43 = sphi 0, %s40
      %s44 = sphi 0, %s43
      %s60 = sphi 0, %s44
      %s66 = sphi 0, %s68
      %s69 = sphi 0, %s66
      %s70 = sphi 0, %s69
      %s86 = sphi 0, %s70
      %s92 = sphi 0, %s94
      %s95 = sphi 0, %s92
      %s96 = sphi 0, %s95
      %s112 = sphi 0, %s96
      %s118 = sphi 0, %s120
      %s121 = sphi 0, %s118
      %s122 = sphi 0, %s121
      %s138 = sphi 0, %s122
      %s142 = sphi 0, %s142
      %s144 = sphi 0, %s142
      %s145 = sphi 0, %s144
      %s159 = sphi 0, %s145
      %s165 = sphi 0, %s167
      %s168 = sphi 0, %s165
      %s169 = sphi 0, %s168
      %s185 = sphi 0, %s169
    $region4: #{tpu_custom_call.1} parent=1 // loop_header_branch
      %21 = sbr.rel (%p19) target = $region8
    $region5: #{tpu_custom_call.1} parent=1 // loop_body
      %s23 = ssub.s32 %s18, 1
      %s24 = ssub.s32 %s18, 2
      %s31 = sadd.s32 1, %s26
      %p32 = scmp.ge.s32.totalorder %s31, 1
      %s33 = scalar_select %p32, 0, %s31
      %s34 = sadd.s32 1, %s25
      %s35 = scalar_select %p32, %s34, %s25
      %p36 = scmp.ge.s32.totalorder %s35, 2
      %s37 = scalar_select %p36, 0, %s35
      %s38 = ssub.s32 %s25, %s37
      %p39 = scmp.eq.s32.totalorder %s38, 0
      %s41 = sadd.s32 %s40, 1
      %s42 = scalar_select %p39, %s40, %s41
      %p45 = pneg %p39
      %p46 = scmp.eq.s32.totalorder %s18, 1
      %p47 = por %p45, %p46
      %p48 = scmp.ne.s32.totalorder %s40, %s43
      %p49 = scmp.eq.s32.totalorder %s18, 0
      %p50 = por %p48, %p49
      %p51 = scmp.ne.s32.totalorder %s40, %s43
      %p52 = scmp.eq.s32.totalorder %s23, 1
      %p53 = por %p51, %p52
      %p54 = scmp.ne.s32.totalorder %s43, %s44
      %p55 = scmp.eq.s32.totalorder %s23, 0
      %p56 = por %p54, %p55
      %p57 = scmp.ne.s32.totalorder %s43, %s44
      %p58 = scmp.eq.s32.totalorder %s24, 1
      %p59 = por %p57, %p58
      %p61 = scmp.ne.s32.totalorder %s44, %s60
      %p62 = scmp.eq.s32.totalorder %s24, 0
      %p63 = por %p61, %p62
      %s64 = ssub.s32 %s26, %s33
      %p65 = scmp.eq.s32.totalorder %s64, 0
      %s67 = sadd.s32 %s66, 1
      %s68 = scalar_select %p65, %s66, %s67
      %p71 = pneg %p65
      %p72 = scmp.eq.s32.totalorder %s18, 1
      %p73 = por %p71, %p72
      %p74 = scmp.ne.s32.totalorder %s66, %s69
      %p75 = scmp.eq.s32.totalorder %s18, 0
      %p76 = por %p74, %p75
      %p77 = scmp.ne.s32.totalorder %s66, %s69
      %p78 = scmp.eq.s32.totalorder %s23, 1
      %p79 = por %p77, %p78
      %p80 = scmp.ne.s32.totalorder %s69, %s70
      %p81 = scmp.eq.s32.totalorder %s23, 0
      %p82 = por %p80, %p81
      %p83 = scmp.ne.s32.totalorder %s69, %s70
      %p84 = scmp.eq.s32.totalorder %s24, 1
      %p85 = por %p83, %p84
      %p87 = scmp.ne.s32.totalorder %s70, %s86
      %p88 = scmp.eq.s32.totalorder %s24, 0
      %p89 = por %p87, %p88
      %s90 = ssub.s32 %s26, %s33
      %p91 = scmp.eq.s32.totalorder %s90, 0
      %s93 = sadd.s32 %s92, 1
      %s94 = scalar_select %p91, %s92, %s93
      %p97 = pneg %p91
      %p98 = scmp.eq.s32.totalorder %s18, 1
      %p99 = por %p97, %p98
      %p100 = scmp.ne.s32.totalorder %s92, %s95
      %p101 = scmp.eq.s32.totalorder %s18, 0
      %p102 = por %p100, %p101
      %p103 = scmp.ne.s32.totalorder %s92, %s95
      %p104 = scmp.eq.s32.totalorder %s23, 1
      %p105 = por %p103, %p104
      %p106 = scmp.ne.s32.totalorder %s95, %s96
      %p107 = scmp.eq.s32.totalorder %s23, 0
      %p108 = por %p106, %p107
      %p109 = scmp.ne.s32.totalorder %s95, %s96
      %p110 = scmp.eq.s32.totalorder %s24, 1
      %p111 = por %p109, %p110
      %p113 = scmp.ne.s32.totalorder %s96, %s112
      %p114 = scmp.eq.s32.totalorder %s24, 0
      %p115 = por %p113, %p114
      %s116 = ssub.s32 %s26, %s33
      %p117 = scmp.eq.s32.totalorder %s116, 0
      %s119 = sadd.s32 %s118, 1
      %s120 = scalar_select %p117, %s118, %s119
      %p123 = pneg %p117
      %p124 = scmp.eq.s32.totalorder %s18, 1
      %p125 = por %p123, %p124
      %p126 = scmp.ne.s32.totalorder %s118, %s121
      %p127 = scmp.eq.s32.totalorder %s18, 0
      %p128 = por %p126, %p127
      %p129 = scmp.ne.s32.totalorder %s118, %s121
      %p130 = scmp.eq.s32.totalorder %s23, 1
      %p131 = por %p129, %p130
      %p132 = scmp.ne.s32.totalorder %s121, %s122
      %p133 = scmp.eq.s32.totalorder %s23, 0
      %p134 = por %p132, %p133
      %p135 = scmp.ne.s32.totalorder %s121, %s122
      %p136 = scmp.eq.s32.totalorder %s24, 1
      %p137 = por %p135, %p136
      %p139 = scmp.ne.s32.totalorder %s122, %s138
      %p140 = scmp.eq.s32.totalorder %s24, 0
      %p141 = por %p139, %p140
      %s143 = sadd.s32 %s142, 1
      %p146 = scmp.eq.s32.totalorder %s18, 1
      %p147 = scmp.ne.s32.totalorder %s142, %s144
      %p148 = scmp.eq.s32.totalorder %s18, 0
      %p149 = por %p147, %p148
      %p150 = scmp.ne.s32.totalorder %s142, %s144
      %p151 = scmp.eq.s32.totalorder %s23, 1
      %p152 = por %p150, %p151
      %p153 = scmp.ne.s32.totalorder %s144, %s145
      %p154 = scmp.eq.s32.totalorder %s23, 0
      %p155 = por %p153, %p154
      %p156 = scmp.ne.s32.totalorder %s144, %s145
      %p157 = scmp.eq.s32.totalorder %s24, 1
      %p158 = por %p156, %p157
      %p160 = scmp.ne.s32.totalorder %s145, %s159
      %p161 = scmp.eq.s32.totalorder %s24, 0
      %p162 = por %p160, %p161
      %s163 = ssub.s32 %s25, %s37
      %p164 = scmp.eq.s32.totalorder %s163, 0
      %s166 = sadd.s32 %s165, 1
      %s167 = scalar_select %p164, %s165, %s166
      %p170 = pneg %p164
      %p171 = scmp.eq.s32.totalorder %s18, 1
      %p172 = por %p170, %p171
      %p173 = scmp.ne.s32.totalorder %s165, %s168
      %p174 = scmp.eq.s32.totalorder %s18, 0
      %p175 = por %p173, %p174
      %p176 = scmp.ne.s32.totalorder %s165, %s168
      %p177 = scmp.eq.s32.totalorder %s23, 1
      %p178 = por %p176, %p177
      %p179 = scmp.ne.s32.totalorder %s168, %s169
      %p180 = scmp.eq.s32.totalorder %s23, 0
      %p181 = por %p179, %p180
      %p182 = scmp.ne.s32.totalorder %s168, %s169
      %p183 = scmp.eq.s32.totalorder %s24, 1
      %p184 = por %p182, %p183
      %p186 = scmp.ne.s32.totalorder %s169, %s185
      %p187 = scmp.eq.s32.totalorder %s24, 0
      %p188 = por %p186, %p187
      %p189 = scmp.le.s32.totalorder 1, %s18
      %p190 = scmp.lt.s32.totalorder %s18, 3
      %p191 = pnand %p189, %p190
      %p192 = pneg %p191
      // Predicated region
      $region9: #{tpu_custom_call.1} parent=5 // pred_check
        _
      $region10: #{tpu_custom_call.1} parent=5 // pred_check_branch
        %194 = sbr.rel (%p191) target = $region12
      $region11: #{tpu_custom_call.1} parent=5 // pred_region
        %s195 = ssub.s32 %s18, 1
        // Predicated region
        $region13: #{tpu_custom_call.1} parent=11 // pred_check
          %p196 = pneg %p82
        $region14: #{tpu_custom_call.1} parent=11 // pred_check_branch
          %198 = sbr.rel (%p196) target = $region16
        $region15: #{tpu_custom_call.1} parent=11 // pred_region
          %s199 = smul.u32 2, %s28
          %s201 = ssub.s32 2048, 2048
          %202 = vsyncadd [#allocation7], %s201
          %s203 = smul.addr %s199, 64
          %s204 = scalar_lea.hbm %s1, %s203
          %s205 = sshll.u32 [#allocation6], 4
          %s206 = int_to_ptr.vmem [resolvable:$true] %s205
          %211 = dma.hbm_to_vmem [thread:$0]  %s204, 2048, %s206, [#allocation7], 128, 128, 8
        $region16: #{tpu_custom_call.1} parent=11 // pred_fallthru
          _
        // Predicated region
        $region17: #{tpu_custom_call.1} parent=11 // pred_check
          %p212 = pneg %p108
        $region18: #{tpu_custom_call.1} parent=11 // pred_check_branch
          %214 = sbr.rel (%p212) target = $region20
        $region19: #{tpu_custom_call.1} parent=11 // pred_region
          %s215 = smul.u32 2, %s28
          %p216 = scmp.lt.s32.totalorder %s215, 1
          %s217 = scalar_select %p216, %s215, 1
          %s218 = scalar_lea.vmem %s2, %s217
          %s219 = smul.u32 2, %s28
        $region20: #{tpu_custom_call.1} parent=11 // pred_fallthru
          _
        // Predicated region
        $region21: #{tpu_custom_call.1} parent=11 // pred_check
          %p220 = pneg %p134
        $region22: #{tpu_custom_call.1} parent=11 // pred_check_branch
          %222 = sbr.rel (%p220) target = $region24
        $region23: #{tpu_custom_call.1} parent=11 // pred_region
          %s223 = smul.u32 32, %s28
          %s225 = ssub.s32 2048, 2048
          %226 = vsyncadd [#allocation7], %s225
          %s227 = smul.addr %s223, 64
          %s228 = scalar_lea.hbm %s3, %s227
          %s229 = sshll.u32 [#allocation8], 4
          %s230 = int_to_ptr.vmem [resolvable:$true] %s229
          %235 = dma.hbm_to_vmem [thread:$0]  %s228, 2048, %s230, [#allocation7], 64, 64, 4
        $region24: #{tpu_custom_call.1} parent=11 // pred_fallthru
          _
        // Predicated region
        $region25: #{tpu_custom_call.1} parent=11 // pred_check
          %p236 = pneg %p155
        $region26: #{tpu_custom_call.1} parent=11 // pred_check_branch
          %238 = sbr.rel (%p236) target = $region28
        $region27: #{tpu_custom_call.1} parent=11 // pred_region
          _
        $region28: #{tpu_custom_call.1} parent=11 // pred_fallthru
          _
      $region12: #{tpu_custom_call.1} parent=5 // pred_fallthru
        _
      %p239 = scmp.lt.s32.totalorder %s18, 2
      // Predicated region
      $region29: #{tpu_custom_call.1} parent=5 // pred_check
        %p240 = pneg %p239
      $region30: #{tpu_custom_call.1} parent=5 // pred_check_branch
        %242 = sbr.rel (%p240) target = $region32
      $region31: #{tpu_custom_call.1} parent=5 // pred_region
        // Predicated region
        $region33: #{tpu_custom_call.1} parent=31 // pred_check
          %p243 = pneg %p50
        $region34: #{tpu_custom_call.1} parent=31 // pred_check_branch
          %245 = sbr.rel (%p243) target = $region36
        $region35: #{tpu_custom_call.1} parent=31 // pred_region
          %s246 = sand.u32 %s40, 1
          %s247 = scalar_lea.sflag [#allocation4], %s246
          %s248 = sand.u32 %s40, 1
          %s249 = smul.addr %s248, 256
          %s250 = scalar_lea.vmem [#allocation3], %s249
          %s251 = smul.u32 32, %s25
          %s253 = ssub.s32 4096, 4096
          %254 = vsyncadd %s247, %s253
          %s255 = smul.addr %s251, 128
          %s256 = scalar_lea.hbm %s0, %s255
          %s257 = sshll.u32 %s250, 4
          %s258 = int_to_ptr.vmem [resolvable:$true] %s257
          %263 = dma.hbm_to_vmem [thread:$0]  %s256, 4096, %s258, %s247, 128, 128, 8
        $region36: #{tpu_custom_call.1} parent=31 // pred_fallthru
          _
      $region32: #{tpu_custom_call.1} parent=5 // pred_fallthru
        _
      %p264 = scmp.le.s32.totalorder 1, %s18
      %p265 = scmp.lt.s32.totalorder %s18, 3
      %p266 = pnand %p264, %p265
      %p267 = pneg %p266
      // Predicated region
      $region37: #{tpu_custom_call.1} parent=5 // pred_check
        _
      $region38: #{tpu_custom_call.1} parent=5 // pred_check_branch
        %269 = sbr.rel (%p266) target = $region40
      $region39: #{tpu_custom_call.1} parent=5 // pred_region
        %s270 = ssub.s32 %s18, 1
        %s271 = sand.u32 %s43, 1
        %s272 = scalar_lea.sflag [#allocation4], %s271
        %s273 = sand.u32 %s43, 1
        %s274 = smul.addr %s273, 256
        %s275 = scalar_lea.vmem [#allocation3], %s274
        // Predicated region
        $region41: #{tpu_custom_call.1} parent=39 // pred_check
          %p276 = pneg %p56
        $region42: #{tpu_custom_call.1} parent=39 // pred_check_branch
          %278 = sbr.rel (%p276) target = $region44
        $region43: #{tpu_custom_call.1} parent=39 // pred_region
          %279 = dma.done %s272, 4096
        $region44: #{tpu_custom_call.1} parent=39 // pred_fallthru
          _
        // Predicated region
        $region45: #{tpu_custom_call.1} parent=39 // pred_check
          %p280 = pneg %p82
        $region46: #{tpu_custom_call.1} parent=39 // pred_check_branch
          %282 = sbr.rel (%p280) target = $region48
        $region47: #{tpu_custom_call.1} parent=39 // pred_region
          %283 = dma.done [#allocation7], 2048
        $region48: #{tpu_custom_call.1} parent=39 // pred_fallthru
          _
        // Predicated region
        $region49: #{tpu_custom_call.1} parent=39 // pred_check
          %p284 = pneg %p134
        $region50: #{tpu_custom_call.1} parent=39 // pred_check_branch
          %286 = sbr.rel (%p284) target = $region52
        $region51: #{tpu_custom_call.1} parent=39 // pred_region
          %287 = dma.done [#allocation7], 2048
        $region52: #{tpu_custom_call.1} parent=39 // pred_fallthru
          _
        %s288 = sand.u32 %s43, 1
        %s289 = scalar_lea.sflag [#allocation4], %s288
        %s290 = sand.u32 %s43, 1
        %s291 = smul.addr %s290, 256
        %s292 = scalar_lea.vmem [#allocation3], %s291
        %p293 = pneg %p56
        %p294 = pneg %p53
        %p295 = pneg %p82
        %p296 = pneg %p79
        %s297 = smul.u32 2, %s28
        %p298 = scmp.lt.s32.totalorder %s297, 1
        %s299 = scalar_select %p298, %s297, 1
        %s300 = scalar_lea.vmem %s2, %s299
        %p301 = pneg %p108
        %p302 = pneg %p105
        %p303 = pneg %p134
        %p304 = pneg %p131
        %p305 = pneg %p155
        %p306 = pneg %p152
        %p307 = pneg %p181
        %p308 = pneg %p178
        %s309 = sand.u32 %s168, 1
        %s310 = scalar_lea.sflag [#allocation5], %s309
        %s311 = sand.u32 %s168, 1
        %s312 = smul.addr %s311, 256
        %s313 = scalar_lea.vmem [#allocation9], %s312
        %s314 = smul.u32 32, %s27
        %s315 = smul.u32 2, %s28
        %s316 = smul.u32 2, %s28
        %p317 = scmp.lt.s32.totalorder %s316, 1
        %s318 = scalar_select %p317, %s316, 1
        %s319 = scalar_lea.vmem %s2, %s318
        %s320 = smul.u32 2, %s28
        %s321 = smul.u32 32, %s28
        %s322 = smul.u32 32, %s27
        %p324 = scmp.eq.s32.totalorder %s28, 0
        // Predicated region
        $region53: #{tpu_custom_call.1} parent=39 // pred_check
          %p325 = pneg %p324
        $region54: #{tpu_custom_call.1} parent=39 // pred_check_branch
          %327 = sbr.rel (%p325) target = $region56
        $region55: #{tpu_custom_call.1} parent=39 // pred_region
          %328 = vst [vmem:[#allocation2] sm:$0xff] 0.0
          %329 = vst [vmem:[#allocation2 + $0x8] sm:$0xff] 0.0
          %330 = vst [vmem:[#allocation2 + $0x10] sm:$0xff] 0.0
          %331 = vst [vmem:[#allocation2 + $0x18] sm:$0xff] 0.0
          %332 = vst [vmem:[#allocation2 + $0x20] sm:$0xff] 0.0
          %333 = vst [vmem:[#allocation2 + $0x28] sm:$0xff] 0.0
          %334 = vst [vmem:[#allocation2 + $0x30] sm:$0xff] 0.0
          %335 = vst [vmem:[#allocation2 + $0x38] sm:$0xff] 0.0
          %336 = vst [vmem:[#allocation2 + $0x40] sm:$0xff] 0.0
          %337 = vst [vmem:[#allocation2 + $0x48] sm:$0xff] 0.0
          %338 = vst [vmem:[#allocation2 + $0x50] sm:$0xff] 0.0
          %339 = vst [vmem:[#allocation2 + $0x58] sm:$0xff] 0.0
          %340 = vst [vmem:[#allocation2 + $0x60] sm:$0xff] 0.0
          %341 = vst [vmem:[#allocation2 + $0x68] sm:$0xff] 0.0
          %342 = vst [vmem:[#allocation2 + $0x70] sm:$0xff] 0.0
          %343 = vst [vmem:[#allocation2 + $0x78] sm:$0xff] 0.0
          %344 = vst [vmem:[#allocation2 + $0x80] sm:$0xff] 0.0
          %345 = vst [vmem:[#allocation2 + $0x88] sm:$0xff] 0.0
          %346 = vst [vmem:[#allocation2 + $0x90] sm:$0xff] 0.0
          %347 = vst [vmem:[#allocation2 + $0x98] sm:$0xff] 0.0
          %348 = vst [vmem:[#allocation2 + $0xa0] sm:$0xff] 0.0
          %349 = vst [vmem:[#allocation2 + $0xa8] sm:$0xff] 0.0
          %350 = vst [vmem:[#allocation2 + $0xb0] sm:$0xff] 0.0
          %351 = vst [vmem:[#allocation2 + $0xb8] sm:$0xff] 0.0
          %352 = vst [vmem:[#allocation2 + $0xc0] sm:$0xff] 0.0
          %353 = vst [vmem:[#allocation2 + $0xc8] sm:$0xff] 0.0
          %354 = vst [vmem:[#allocation2 + $0xd0] sm:$0xff] 0.0
          %355 = vst [vmem:[#allocation2 + $0xd8] sm:$0xff] 0.0
          %356 = vst [vmem:[#allocation2 + $0xe0] sm:$0xff] 0.0
          %357 = vst [vmem:[#allocation2 + $0xe8] sm:$0xff] 0.0
          %358 = vst [vmem:[#allocation2 + $0xf0] sm:$0xff] 0.0
          %359 = vst [vmem:[#allocation2 + $0xf8] sm:$0xff] 0.0
        $region56: #{tpu_custom_call.1} parent=39 // pred_fallthru
          _
        %v360 = vld [vmem:[%s275] sm:$0xff]
        %v361 = vld [vmem:[%s275 + $0x8] sm:$0xff]
        %v362 = vld [vmem:[%s275 + $0x10] sm:$0xff]
        %v363 = vld [vmem:[%s275 + $0x18] sm:$0xff]
        %v364 = vld [vmem:[%s275 + $0x20] sm:$0xff]
        %v365 = vld [vmem:[%s275 + $0x28] sm:$0xff]
        %v366 = vld [vmem:[%s275 + $0x30] sm:$0xff]
        %v367 = vld [vmem:[%s275 + $0x38] sm:$0xff]
        %v368 = vld [vmem:[%s275 + $0x40] sm:$0xff]
        %v369 = vld [vmem:[%s275 + $0x48] sm:$0xff]
        %v370 = vld [vmem:[%s275 + $0x50] sm:$0xff]
        %v371 = vld [vmem:[%s275 + $0x58] sm:$0xff]
        %v372 = vld [vmem:[%s275 + $0x60] sm:$0xff]
        %v373 = vld [vmem:[%s275 + $0x68] sm:$0xff]
        %v374 = vld [vmem:[%s275 + $0x70] sm:$0xff]
        %v375 = vld [vmem:[%s275 + $0x78] sm:$0xff]
        %v376 = vld [vmem:[%s275 + $0x80] sm:$0xff]
        %v377 = vld [vmem:[%s275 + $0x88] sm:$0xff]
        %v378 = vld [vmem:[%s275 + $0x90] sm:$0xff]
        %v379 = vld [vmem:[%s275 + $0x98] sm:$0xff]
        %v380 = vld [vmem:[%s275 + $0xa0] sm:$0xff]
        %v381 = vld [vmem:[%s275 + $0xa8] sm:$0xff]
        %v382 = vld [vmem:[%s275 + $0xb0] sm:$0xff]
        %v383 = vld [vmem:[%s275 + $0xb8] sm:$0xff]
        %v384 = vld [vmem:[%s275 + $0xc0] sm:$0xff]
        %v385 = vld [vmem:[%s275 + $0xc8] sm:$0xff]
        %v386 = vld [vmem:[%s275 + $0xd0] sm:$0xff]
        %v387 = vld [vmem:[%s275 + $0xd8] sm:$0xff]
        %v388 = vld [vmem:[%s275 + $0xe0] sm:$0xff]
        %v389 = vld [vmem:[%s275 + $0xe8] sm:$0xff]
        %v390 = vld [vmem:[%s275 + $0xf0] sm:$0xff]
        %v391 = vld [vmem:[%s275 + $0xf8] sm:$0xff]
        %v392 = vpack.c.bf16 %v361, %v360
        %v393 = vpack.c.bf16 %v363, %v362
        %v394 = vpack.c.bf16 %v365, %v364
        %v395 = vpack.c.bf16 %v367, %v366
        %v396 = vpack.c.bf16 %v369, %v368
        %v397 = vpack.c.bf16 %v371, %v370
        %v398 = vpack.c.bf16 %v373, %v372
        %v399 = vpack.c.bf16 %v375, %v374
        %v400 = vpack.c.bf16 %v377, %v376
        %v401 = vpack.c.bf16 %v379, %v378
        %v402 = vpack.c.bf16 %v381, %v380
        %v403 = vpack.c.bf16 %v383, %v382
        %v404 = vpack.c.bf16 %v385, %v384
        %v405 = vpack.c.bf16 %v387, %v386
        %v406 = vpack.c.bf16 %v389, %v388
        %v407 = vpack.c.bf16 %v391, %v390
        %v408 = vld [vmem:[#allocation6] sm:$0xff]
        %v409 = vld [vmem:[#allocation6 + $0x8] sm:$0xff]
        %v410 = vld [vmem:[#allocation6 + $0x10] sm:$0xff]
        %v411 = vld [vmem:[#allocation6 + $0x18] sm:$0xff]
        %v412 = vld [vmem:[#allocation6 + $0x20] sm:$0xff]
        %v413 = vld [vmem:[#allocation6 + $0x28] sm:$0xff]
        %v414 = vld [vmem:[#allocation6 + $0x30] sm:$0xff]
        %v415 = vld [vmem:[#allocation6 + $0x38] sm:$0xff]
        %v416 = vld [vmem:[#allocation6 + $0x40] sm:$0xff]
        %v417 = vld [vmem:[#allocation6 + $0x48] sm:$0xff]
        %v418 = vld [vmem:[#allocation6 + $0x50] sm:$0xff]
        %v419 = vld [vmem:[#allocation6 + $0x58] sm:$0xff]
        %v420 = vld [vmem:[#allocation6 + $0x60] sm:$0xff]
        %v421 = vld [vmem:[#allocation6 + $0x68] sm:$0xff]
        %v422 = vld [vmem:[#allocation6 + $0x70] sm:$0xff]
        %v423 = vld [vmem:[#allocation6 + $0x78] sm:$0xff]
        %v424 = vld [vmem:[%s319] sm:$0x3]
        %v426 = vlaneseq
        %v427 = vshrl.u32 %v426, 7
        %v428 = vsub.s32 0, %v427
        %v429 = vrot.slane %v424, %v428
        %v430 = vlaneseq
        %v431 = vshrl.u32 %v430, 7
        %v432 = vsub.s32 1, %v431
        %v433 = vrot.slane %v424, %v432
        %v452 = vunpack.c.l.b16 %v408
        %v453 = vunpack.c.h.b16 %v408
        %v454 = vunpack.c.l.b16 %v409
        %v455 = vunpack.c.h.b16 %v409
        %v456 = vunpack.c.l.b16 %v410
        %v457 = vunpack.c.h.b16 %v410
        %v458 = vunpack.c.l.b16 %v411
        %v459 = vunpack.c.h.b16 %v411
        %v460 = vunpack.c.l.b16 %v412
        %v461 = vunpack.c.h.b16 %v412
        %v462 = vunpack.c.l.b16 %v413
        %v463 = vunpack.c.h.b16 %v413
        %v464 = vunpack.c.l.b16 %v414
        %v465 = vunpack.c.h.b16 %v414
        %v466 = vunpack.c.l.b16 %v415
        %v467 = vunpack.c.h.b16 %v415
        %v468 = vunpack.c.l.b16 %v416
        %v469 = vunpack.c.h.b16 %v416
        %v470 = vunpack.c.l.b16 %v417
        %v471 = vunpack.c.h.b16 %v417
        %v472 = vunpack.c.l.b16 %v418
        %v473 = vunpack.c.h.b16 %v418
        %v474 = vunpack.c.l.b16 %v419
        %v475 = vunpack.c.h.b16 %v419
        %v476 = vunpack.c.l.b16 %v420
        %v477 = vunpack.c.h.b16 %v420
        %v478 = vunpack.c.l.b16 %v421
        %v479 = vunpack.c.h.b16 %v421
        %v480 = vunpack.c.l.b16 %v422
        %v481 = vunpack.c.h.b16 %v422
        %v482 = vunpack.c.l.b16 %v423
        %v483 = vunpack.c.h.b16 %v423
        %v484 = vpack.c.b16 %v454, %v452
        %v485 = vpack.c.b16 %v455, %v453
        %v486 = vpack.c.b16 %v458, %v456
        %v487 = vpack.c.b16 %v459, %v457
        %v488 = vpack.c.b16 %v462, %v460
        %v489 = vpack.c.b16 %v463, %v461
        %v490 = vpack.c.b16 %v466, %v464
        %v491 = vpack.c.b16 %v467, %v465
        %v492 = vpack.c.b16 %v470, %v468
        %v493 = vpack.c.b16 %v471, %v469
        %v494 = vpack.c.b16 %v474, %v472
        %v495 = vpack.c.b16 %v475, %v473
        %v496 = vpack.c.b16 %v478, %v476
        %v497 = vpack.c.b16 %v479, %v477
        %v498 = vpack.c.b16 %v482, %v480
        %v499 = vpack.c.b16 %v483, %v481
        %516 = vmatprep.subr.bf16.mxu0 %v485
        %517 = vmatpush1.bf16.msra.mxu0 %v484
        %518 = vmatprep.subr.bf16.mxu0 %v487
        %519 = vmatpush1.bf16.msra.mxu0 %v486
        %520 = vmatprep.subr.bf16.mxu0 %v489
        %521 = vmatpush1.bf16.msra.mxu0 %v488
        %522 = vmatprep.subr.bf16.mxu0 %v491
        %523 = vmatpush1.bf16.msra.mxu0 %v490
        %524 = vmatprep.subr.bf16.mxu0 %v493
        %525 = vmatpush1.bf16.msra.mxu0 %v492
        %526 = vmatprep.subr.bf16.mxu0 %v495
        %527 = vmatpush1.bf16.msra.mxu0 %v494
        %528 = vmatprep.subr.bf16.mxu0 %v497
        %529 = vmatpush1.bf16.msra.mxu0 %v496
        %530 = vmatprep.subr.bf16.mxu0 %v499
        %531 = vmatpush1.bf16.msra.mxu0 %v498
        %532 = vmatprep.subr.bf16.mxu0 0
        %533 = vmatpush1.bf16.msra.mxu0 0
        %534 = vmatprep.subr.bf16.mxu0 0
        %535 = vmatpush1.bf16.msra.mxu0 0
        %536 = vmatprep.subr.bf16.mxu0 0
        %537 = vmatpush1.bf16.msra.mxu0 0
        %538 = vmatprep.subr.bf16.mxu0 0
        %539 = vmatpush1.bf16.msra.mxu0 0
        %540 = vmatprep.subr.bf16.mxu0 0
        %541 = vmatpush1.bf16.msra.mxu0 0
        %542 = vmatprep.subr.bf16.mxu0 0
        %543 = vmatpush1.bf16.msra.mxu0 0
        %544 = vmatprep.subr.bf16.mxu0 0
        %545 = vmatpush1.bf16.msra.mxu0 0
        %546 = vmatprep.subr.bf16.mxu0 0
        %547 = vmatpush1.bf16.msra.mxu0 0
        %548 = vmatprep.mubr.bf16.mxu0 0
        %549 = vmatmul.mubr.bf16.gmra.mrb[0].mxu0 %v392
        %v550 = vpop.f32.mrb[0].mxu0
        %v551 = vadd.f32 %v429, %v550
        %v552 = vpop.f32.mrb[0].mxu0
        %v553 = vadd.f32 %v433, %v552
        %v554 = vpop.f32.mrb[0].mxu0
        %v555 = vadd.f32 %v429, %v554
        %v556 = vpop.f32.mrb[0].mxu0
        %v557 = vadd.f32 %v433, %v556
        %558 = vmatprep.mubr.bf16.mxu0 0
        %559 = vmatmul.mubr.bf16.gmra.mrb[0].mxu0 %v393
        %v560 = vpop.f32.mrb[0].mxu0
        %v561 = vadd.f32 %v429, %v560
        %v562 = vpop.f32.mrb[0].mxu0
        %v563 = vadd.f32 %v433, %v562
        %v564 = vpop.f32.mrb[0].mxu0
        %v565 = vadd.f32 %v429, %v564
        %v566 = vpop.f32.mrb[0].mxu0
        %v567 = vadd.f32 %v433, %v566
        %568 = vmatprep.mubr.bf16.mxu0 0
        %569 = vmatmul.mubr.bf16.gmra.mrb[0].mxu0 %v394
        %v570 = vpop.f32.mrb[0].mxu0
        %v571 = vadd.f32 %v429, %v570
        %v572 = vpop.f32.mrb[0].mxu0
        %v573 = vadd.f32 %v433, %v572
        %v574 = vpop.f32.mrb[0].mxu0
        %v575 = vadd.f32 %v429, %v574
        %v576 = vpop.f32.mrb[0].mxu0
        %v577 = vadd.f32 %v433, %v576
        %578 = vmatprep.mubr.bf16.mxu0 0
        %579 = vmatmul.mubr.bf16.gmra.mrb[0].mxu0 %v395
        %v580 = vpop.f32.mrb[0].mxu0
        %v581 = vadd.f32 %v429, %v580
        %v582 = vpop.f32.mrb[0].mxu0
        %v583 = vadd.f32 %v433, %v582
        %v584 = vpop.f32.mrb[0].mxu0
        %v585 = vadd.f32 %v429, %v584
        %v586 = vpop.f32.mrb[0].mxu0
        %v587 = vadd.f32 %v433, %v586
        %588 = vmatprep.mubr.bf16.mxu0 0
        %589 = vmatmul.mubr.bf16.gmra.mrb[0].mxu0 %v396
        %v590 = vpop.f32.mrb[0].mxu0
        %v591 = vadd.f32 %v429, %v590
        %v592 = vpop.f32.mrb[0].mxu0
        %v593 = vadd.f32 %v433, %v592
        %v594 = vpop.f32.mrb[0].mxu0
        %v595 = vadd.f32 %v429, %v594
        %v596 = vpop.f32.mrb[0].mxu0
        %v597 = vadd.f32 %v433, %v596
        %598 = vmatprep.mubr.bf16.mxu0 0
        %599 = vmatmul.mubr.bf16.gmra.mrb[0].mxu0 %v397
        %v600 = vpop.f32.mrb[0].mxu0
        %v601 = vadd.f32 %v429, %v600
        %v602 = vpop.f32.mrb[0].mxu0
        %v603 = vadd.f32 %v433, %v602
        %v604 = vpop.f32.mrb[0].mxu0
        %v605 = vadd.f32 %v429, %v604
        %v606 = vpop.f32.mrb[0].mxu0
        %v607 = vadd.f32 %v433, %v606
        %608 = vmatprep.mubr.bf16.mxu0 0
        %609 = vmatmul.mubr.bf16.gmra.mrb[0].mxu0 %v398
        %v610 = vpop.f32.mrb[0].mxu0
        %v611 = vadd.f32 %v429, %v610
        %v612 = vpop.f32.mrb[0].mxu0
        %v613 = vadd.f32 %v433, %v612
        %v614 = vpop.f32.mrb[0].mxu0
        %v615 = vadd.f32 %v429, %v614
        %v616 = vpop.f32.mrb[0].mxu0
        %v617 = vadd.f32 %v433, %v616
        %618 = vmatprep.mubr.bf16.mxu0 0
        %619 = vmatmul.mubr.bf16.gmra.mrb[0].mxu0 %v399
        %v620 = vpop.f32.mrb[0].mxu0
        %v621 = vadd.f32 %v429, %v620
        %v622 = vpop.f32.mrb[0].mxu0
        %v623 = vadd.f32 %v433, %v622
        %v624 = vpop.f32.mrb[0].mxu0
        %v625 = vadd.f32 %v429, %v624
        %v626 = vpop.f32.mrb[0].mxu0
        %v627 = vadd.f32 %v433, %v626
        %628 = vmatprep.mubr.bf16.mxu0 0
        %629 = vmatmul.mubr.bf16.gmra.mrb[0].mxu0 %v400
        %v630 = vpop.f32.mrb[0].mxu0
        %v631 = vadd.f32 %v429, %v630
        %v632 = vpop.f32.mrb[0].mxu0
        %v633 = vadd.f32 %v433, %v632
        %v634 = vpop.f32.mrb[0].mxu0
        %v635 = vadd.f32 %v429, %v634
        %v636 = vpop.f32.mrb[0].mxu0
        %v637 = vadd.f32 %v433, %v636
        %638 = vmatprep.mubr.bf16.mxu0 0
        %639 = vmatmul.mubr.bf16.gmra.mrb[0].mxu0 %v401
        %v640 = vpop.f32.mrb[0].mxu0
        %v641 = vadd.f32 %v429, %v640
        %v642 = vpop.f32.mrb[0].mxu0
        %v643 = vadd.f32 %v433, %v642
        %v644 = vpop.f32.mrb[0].mxu0
        %v645 = vadd.f32 %v429, %v644
        %v646 = vpop.f32.mrb[0].mxu0
        %v647 = vadd.f32 %v433, %v646
        %648 = vmatprep.mubr.bf16.mxu0 0
        %649 = vmatmul.mubr.bf16.gmra.mrb[0].mxu0 %v402
        %v650 = vpop.f32.mrb[0].mxu0
        %v651 = vadd.f32 %v429, %v650
        %v652 = vpop.f32.mrb[0].mxu0
        %v653 = vadd.f32 %v433, %v652
        %v654 = vpop.f32.mrb[0].mxu0
        %v655 = vadd.f32 %v429, %v654
        %v656 = vpop.f32.mrb[0].mxu0
        %v657 = vadd.f32 %v433, %v656
        %658 = vmatprep.mubr.bf16.mxu0 0
        %659 = vmatmul.mubr.bf16.gmra.mrb[0].mxu0 %v403
        %v660 = vpop.f32.mrb[0].mxu0
        %v661 = vadd.f32 %v429, %v660
        %v662 = vpop.f32.mrb[0].mxu0
        %v663 = vadd.f32 %v433, %v662
        %v664 = vpop.f32.mrb[0].mxu0
        %v665 = vadd.f32 %v429, %v664
        %v666 = vpop.f32.mrb[0].mxu0
        %v667 = vadd.f32 %v433, %v666
        %668 = vmatprep.mubr.bf16.mxu0 0
        %669 = vmatmul.mubr.bf16.gmra.mrb[0].mxu0 %v404
        %v670 = vpop.f32.mrb[0].mxu0
        %v671 = vadd.f32 %v429, %v670
        %v672 = vpop.f32.mrb[0].mxu0
        %v673 = vadd.f32 %v433, %v672
        %v674 = vpop.f32.mrb[0].mxu0
        %v675 = vadd.f32 %v429, %v674
        %v676 = vpop.f32.mrb[0].mxu0
        %v677 = vadd.f32 %v433, %v676
        %678 = vmatprep.mubr.bf16.mxu0 0
        %679 = vmatmul.mubr.bf16.gmra.mrb[0].mxu0 %v405
        %v680 = vpop.f32.mrb[0].mxu0
        %v681 = vadd.f32 %v429, %v680
        %v682 = vpop.f32.mrb[0].mxu0
        %v683 = vadd.f32 %v433, %v682
        %v684 = vpop.f32.mrb[0].mxu0
        %v685 = vadd.f32 %v429, %v684
        %v686 = vpop.f32.mrb[0].mxu0
        %v687 = vadd.f32 %v433, %v686
        %688 = vmatprep.mubr.bf16.mxu0 0
        %689 = vmatmul.mubr.bf16.gmra.mrb[0].mxu0 %v406
        %v690 = vpop.f32.mrb[0].mxu0
        %v691 = vadd.f32 %v429, %v690
        %v692 = vpop.f32.mrb[0].mxu0
        %v693 = vadd.f32 %v433, %v692
        %v694 = vpop.f32.mrb[0].mxu0
        %v695 = vadd.f32 %v429, %v694
        %v696 = vpop.f32.mrb[0].mxu0
        %v697 = vadd.f32 %v433, %v696
        %698 = vmatprep.mubr.bf16.mxu0 0
        %699 = vmatmul.mubr.bf16.gmra.mrb[0].mxu0 %v407
        %v700 = vpop.f32.mrb[0].mxu0
        %v701 = vadd.f32 %v429, %v700
        %v702 = vpop.f32.mrb[0].mxu0
        %v703 = vadd.f32 %v433, %v702
        %v704 = vpop.f32.mrb[0].mxu0
        %v705 = vadd.f32 %v429, %v704
        %v706 = vpop.f32.mrb[0].mxu0
        %v707 = vadd.f32 %v433, %v706
        %708 = vdwg.mxu0
        %v709 = vmul.f32 %v551, 0.5
        %v710 = vmul.f32 %v553, 0.5
        %v711 = vmul.f32 %v555, 0.5
        %v712 = vmul.f32 %v557, 0.5
        %v713 = vmul.f32 %v561, 0.5
        %v714 = vmul.f32 %v563, 0.5
        %v715 = vmul.f32 %v565, 0.5
        %v716 = vmul.f32 %v567, 0.5
        %v717 = vmul.f32 %v571, 0.5
        %v718 = vmul.f32 %v573, 0.5
        %v719 = vmul.f32 %v575, 0.5
        %v720 = vmul.f32 %v577, 0.5
        %v721 = vmul.f32 %v581, 0.5
        %v722 = vmul.f32 %v583, 0.5
        %v723 = vmul.f32 %v585, 0.5
        %v724 = vmul.f32 %v587, 0.5
        %v725 = vmul.f32 %v591, 0.5
        %v726 = vmul.f32 %v593, 0.5
        %v727 = vmul.f32 %v595, 0.5
        %v728 = vmul.f32 %v597, 0.5
        %v729 = vmul.f32 %v601, 0.5
        %v730 = vmul.f32 %v603, 0.5
        %v731 = vmul.f32 %v605, 0.5
        %v732 = vmul.f32 %v607, 0.5
        %v733 = vmul.f32 %v611, 0.5
        %v734 = vmul.f32 %v613, 0.5
        %v735 = vmul.f32 %v615, 0.5
        %v736 = vmul.f32 %v617, 0.5
        %v737 = vmul.f32 %v621, 0.5
        %v738 = vmul.f32 %v623, 0.5
        %v739 = vmul.f32 %v625, 0.5
        %v740 = vmul.f32 %v627, 0.5
        %v741 = vmul.f32 %v631, 0.5
        %v742 = vmul.f32 %v633, 0.5
        %v743 = vmul.f32 %v635, 0.5
        %v744 = vmul.f32 %v637, 0.5
        %v745 = vmul.f32 %v641, 0.5
        %v746 = vmul.f32 %v643, 0.5
        %v747 = vmul.f32 %v645, 0.5
        %v748 = vmul.f32 %v647, 0.5
        %v749 = vmul.f32 %v651, 0.5
        %v750 = vmul.f32 %v653, 0.5
        %v751 = vmul.f32 %v655, 0.5
        %v752 = vmul.f32 %v657, 0.5
        %v753 = vmul.f32 %v661, 0.5
        %v754 = vmul.f32 %v663, 0.5
        %v755 = vmul.f32 %v665, 0.5
        %v756 = vmul.f32 %v667, 0.5
        %v757 = vmul.f32 %v671, 0.5
        %v758 = vmul.f32 %v673, 0.5
        %v759 = vmul.f32 %v675, 0.5
        %v760 = vmul.f32 %v677, 0.5
        %v761 = vmul.f32 %v681, 0.5
        %v762 = vmul.f32 %v683, 0.5
        %v763 = vmul.f32 %v685, 0.5
        %v764 = vmul.f32 %v687, 0.5
        %v765 = vmul.f32 %v691, 0.5
        %v766 = vmul.f32 %v693, 0.5
        %v767 = vmul.f32 %v695, 0.5
        %v768 = vmul.f32 %v697, 0.5
        %v769 = vmul.f32 %v701, 0.5
        %v770 = vmul.f32 %v703, 0.5
        %v771 = vmul.f32 %v705, 0.5
        %v772 = vmul.f32 %v707, 0.5
        %v773 = vtanh.pop %v709
        %v774 = vtanh.pop %v710
        %v775 = vtanh.pop %v711
        %v776 = vtanh.pop %v712
        %v777 = vtanh.pop %v713
        %v778 = vtanh.pop %v714
        %v779 = vtanh.pop %v715
        %v780 = vtanh.pop %v716
        %v781 = vtanh.pop %v717
        %v782 = vtanh.pop %v718
        %v783 = vtanh.pop %v719
        %v784 = vtanh.pop %v720
        %v785 = vtanh.pop %v721
        %v786 = vtanh.pop %v722
        %v787 = vtanh.pop %v723
        %v788 = vtanh.pop %v724
        %v789 = vtanh.pop %v725
        %v790 = vtanh.pop %v726
        %v791 = vtanh.pop %v727
        %v792 = vtanh.pop %v728
        %v793 = vtanh.pop %v729
        %v794 = vtanh.pop %v730
        %v795 = vtanh.pop %v731
        %v796 = vtanh.pop %v732
        %v797 = vtanh.pop %v733
        %v798 = vtanh.pop %v734
        %v799 = vtanh.pop %v735
        %v800 = vtanh.pop %v736
        %v801 = vtanh.pop %v737
        %v802 = vtanh.pop %v738
        %v803 = vtanh.pop %v739
        %v804 = vtanh.pop %v740
        %v805 = vtanh.pop %v741
        %v806 = vtanh.pop %v742
        %v807 = vtanh.pop %v743
        %v808 = vtanh.pop %v744
        %v809 = vtanh.pop %v745
        %v810 = vtanh.pop %v746
        %v811 = vtanh.pop %v747
        %v812 = vtanh.pop %v748
        %v813 = vtanh.pop %v749
        %v814 = vtanh.pop %v750
        %v815 = vtanh.pop %v751
        %v816 = vtanh.pop %v752
        %v817 = vtanh.pop %v753
        %v818 = vtanh.pop %v754
        %v819 = vtanh.pop %v755
        %v820 = vtanh.pop %v756
        %v821 = vtanh.pop %v757
        %v822 = vtanh.pop %v758
        %v823 = vtanh.pop %v759
        %v824 = vtanh.pop %v760
        %v825 = vtanh.pop %v761
        %v826 = vtanh.pop %v762
        %v827 = vtanh.pop %v763
        %v828 = vtanh.pop %v764
        %v829 = vtanh.pop %v765
        %v830 = vtanh.pop %v766
        %v831 = vtanh.pop %v767
        %v832 = vtanh.pop %v768
        %v833 = vtanh.pop %v769
        %v834 = vtanh.pop %v770
        %v835 = vtanh.pop %v771
        %v836 = vtanh.pop %v772
        %v837 = vmul.f32 %v773, 0.5
        %v838 = vmul.f32 %v774, 0.5
        %v839 = vmul.f32 %v775, 0.5
        %v840 = vmul.f32 %v776, 0.5
        %v841 = vmul.f32 %v777, 0.5
        %v842 = vmul.f32 %v778, 0.5
        %v843 = vmul.f32 %v779, 0.5
        %v844 = vmul.f32 %v780, 0.5
        %v845 = vmul.f32 %v781, 0.5
        %v846 = vmul.f32 %v782, 0.5
        %v847 = vmul.f32 %v783, 0.5
        %v848 = vmul.f32 %v784, 0.5
        %v849 = vmul.f32 %v785, 0.5
        %v850 = vmul.f32 %v786, 0.5
        %v851 = vmul.f32 %v787, 0.5
        %v852 = vmul.f32 %v788, 0.5
        %v853 = vmul.f32 %v789, 0.5
        %v854 = vmul.f32 %v790, 0.5
        %v855 = vmul.f32 %v791, 0.5
        %v856 = vmul.f32 %v792, 0.5
        %v857 = vmul.f32 %v793, 0.5
        %v858 = vmul.f32 %v794, 0.5
        %v859 = vmul.f32 %v795, 0.5
        %v860 = vmul.f32 %v796, 0.5
        %v861 = vmul.f32 %v797, 0.5
        %v862 = vmul.f32 %v798, 0.5
        %v863 = vmul.f32 %v799, 0.5
        %v864 = vmul.f32 %v800, 0.5
        %v865 = vmul.f32 %v801, 0.5
        %v866 = vmul.f32 %v802, 0.5
        %v867 = vmul.f32 %v803, 0.5
        %v868 = vmul.f32 %v804, 0.5
        %v869 = vmul.f32 %v805, 0.5
        %v870 = vmul.f32 %v806, 0.5
        %v871 = vmul.f32 %v807, 0.5
        %v872 = vmul.f32 %v808, 0.5
        %v873 = vmul.f32 %v809, 0.5
        %v874 = vmul.f32 %v810, 0.5
        %v875 = vmul.f32 %v811, 0.5
        %v876 = vmul.f32 %v812, 0.5
        %v877 = vmul.f32 %v813, 0.5
        %v878 = vmul.f32 %v814, 0.5
        %v879 = vmul.f32 %v815, 0.5
        %v880 = vmul.f32 %v816, 0.5
        %v881 = vmul.f32 %v817, 0.5
        %v882 = vmul.f32 %v818, 0.5
        %v883 = vmul.f32 %v819, 0.5
        %v884 = vmul.f32 %v820, 0.5
        %v885 = vmul.f32 %v821, 0.5
        %v886 = vmul.f32 %v822, 0.5
        %v887 = vmul.f32 %v823, 0.5
        %v888 = vmul.f32 %v824, 0.5
        %v889 = vmul.f32 %v825, 0.5
        %v890 = vmul.f32 %v826, 0.5
        %v891 = vmul.f32 %v827, 0.5
        %v892 = vmul.f32 %v828, 0.5
        %v893 = vmul.f32 %v829, 0.5
        %v894 = vmul.f32 %v830, 0.5
        %v895 = vmul.f32 %v831, 0.5
        %v896 = vmul.f32 %v832, 0.5
        %v897 = vmul.f32 %v833, 0.5
        %v898 = vmul.f32 %v834, 0.5
        %v899 = vmul.f32 %v835, 0.5
        %v900 = vmul.f32 %v836, 0.5
        %v901 = vadd.f32 %v837, 0.5
        %v902 = vadd.f32 %v838, 0.5
        %v903 = vadd.f32 %v839, 0.5
        %v904 = vadd.f32 %v840, 0.5
        %v905 = vadd.f32 %v841, 0.5
        %v906 = vadd.f32 %v842, 0.5
        %v907 = vadd.f32 %v843, 0.5
        %v908 = vadd.f32 %v844, 0.5
        %v909 = vadd.f32 %v845, 0.5
        %v910 = vadd.f32 %v846, 0.5
        %v911 = vadd.f32 %v847, 0.5
        %v912 = vadd.f32 %v848, 0.5
        %v913 = vadd.f32 %v849, 0.5
        %v914 = vadd.f32 %v850, 0.5
        %v915 = vadd.f32 %v851, 0.5
        %v916 = vadd.f32 %v852, 0.5
        %v917 = vadd.f32 %v853, 0.5
        %v918 = vadd.f32 %v854, 0.5
        %v919 = vadd.f32 %v855, 0.5
        %v920 = vadd.f32 %v856, 0.5
        %v921 = vadd.f32 %v857, 0.5
        %v922 = vadd.f32 %v858, 0.5
        %v923 = vadd.f32 %v859, 0.5
        %v924 = vadd.f32 %v860, 0.5
        %v925 = vadd.f32 %v861, 0.5
        %v926 = vadd.f32 %v862, 0.5
        %v927 = vadd.f32 %v863, 0.5
        %v928 = vadd.f32 %v864, 0.5
        %v929 = vadd.f32 %v865, 0.5
        %v930 = vadd.f32 %v866, 0.5
        %v931 = vadd.f32 %v867, 0.5
        %v932 = vadd.f32 %v868, 0.5
        %v933 = vadd.f32 %v869, 0.5
        %v934 = vadd.f32 %v870, 0.5
        %v935 = vadd.f32 %v871, 0.5
        %v936 = vadd.f32 %v872, 0.5
        %v937 = vadd.f32 %v873, 0.5
        %v938 = vadd.f32 %v874, 0.5
        %v939 = vadd.f32 %v875, 0.5
        %v940 = vadd.f32 %v876, 0.5
        %v941 = vadd.f32 %v877, 0.5
        %v942 = vadd.f32 %v878, 0.5
        %v943 = vadd.f32 %v879, 0.5
        %v944 = vadd.f32 %v880, 0.5
        %v945 = vadd.f32 %v881, 0.5
        %v946 = vadd.f32 %v882, 0.5
        %v947 = vadd.f32 %v883, 0.5
        %v948 = vadd.f32 %v884, 0.5
        %v949 = vadd.f32 %v885, 0.5
        %v950 = vadd.f32 %v886, 0.5
        %v951 = vadd.f32 %v887, 0.5
        %v952 = vadd.f32 %v888, 0.5
        %v953 = vadd.f32 %v889, 0.5
        %v954 = vadd.f32 %v890, 0.5
        %v955 = vadd.f32 %v891, 0.5
        %v956 = vadd.f32 %v892, 0.5
        %v957 = vadd.f32 %v893, 0.5
        %v958 = vadd.f32 %v894, 0.5
        %v959 = vadd.f32 %v895, 0.5
        %v960 = vadd.f32 %v896, 0.5
        %v961 = vadd.f32 %v897, 0.5
        %v962 = vadd.f32 %v898, 0.5
        %v963 = vadd.f32 %v899, 0.5
        %v964 = vadd.f32 %v900, 0.5
        %v965 = vld [vmem:[#allocation2] sm:$0xff]
        %v966 = vld [vmem:[#allocation2 + $0x8] sm:$0xff]
        %v967 = vld [vmem:[#allocation2 + $0x10] sm:$0xff]
        %v968 = vld [vmem:[#allocation2 + $0x18] sm:$0xff]
        %v969 = vld [vmem:[#allocation2 + $0x20] sm:$0xff]
        %v970 = vld [vmem:[#allocation2 + $0x28] sm:$0xff]
        %v971 = vld [vmem:[#allocation2 + $0x30] sm:$0xff]
        %v972 = vld [vmem:[#allocation2 + $0x38] sm:$0xff]
        %v973 = vld [vmem:[#allocation2 + $0x40] sm:$0xff]
        %v974 = vld [vmem:[#allocation2 + $0x48] sm:$0xff]
        %v975 = vld [vmem:[#allocation2 + $0x50] sm:$0xff]
        %v976 = vld [vmem:[#allocation2 + $0x58] sm:$0xff]
        %v977 = vld [vmem:[#allocation2 + $0x60] sm:$0xff]
        %v978 = vld [vmem:[#allocation2 + $0x68] sm:$0xff]
        %v979 = vld [vmem:[#allocation2 + $0x70] sm:$0xff]
        %v980 = vld [vmem:[#allocation2 + $0x78] sm:$0xff]
        %v981 = vld [vmem:[#allocation2 + $0x80] sm:$0xff]
        %v982 = vld [vmem:[#allocation2 + $0x88] sm:$0xff]
        %v983 = vld [vmem:[#allocation2 + $0x90] sm:$0xff]
        %v984 = vld [vmem:[#allocation2 + $0x98] sm:$0xff]
        %v985 = vld [vmem:[#allocation2 + $0xa0] sm:$0xff]
        %v986 = vld [vmem:[#allocation2 + $0xa8] sm:$0xff]
        %v987 = vld [vmem:[#allocation2 + $0xb0] sm:$0xff]
        %v988 = vld [vmem:[#allocation2 + $0xb8] sm:$0xff]
        %v989 = vld [vmem:[#allocation2 + $0xc0] sm:$0xff]
        %v990 = vld [vmem:[#allocation2 + $0xc8] sm:$0xff]
        %v991 = vld [vmem:[#allocation2 + $0xd0] sm:$0xff]
        %v992 = vld [vmem:[#allocation2 + $0xd8] sm:$0xff]
        %v993 = vld [vmem:[#allocation2 + $0xe0] sm:$0xff]
        %v994 = vld [vmem:[#allocation2 + $0xe8] sm:$0xff]
        %v995 = vld [vmem:[#allocation2 + $0xf0] sm:$0xff]
        %v996 = vld [vmem:[#allocation2 + $0xf8] sm:$0xff]
        %v997 = vpack.c.bf16 %v903, %v901
        %v998 = vpack.c.bf16 %v904, %v902
        %v999 = vpack.c.bf16 %v907, %v905
        %v1000 = vpack.c.bf16 %v908, %v906
        %v1001 = vpack.c.bf16 %v911, %v909
        %v1002 = vpack.c.bf16 %v912, %v910
        %v1003 = vpack.c.bf16 %v915, %v913
        %v1004 = vpack.c.bf16 %v916, %v914
        %v1005 = vpack.c.bf16 %v919, %v917
        %v1006 = vpack.c.bf16 %v920, %v918
        %v1007 = vpack.c.bf16 %v923, %v921
        %v1008 = vpack.c.bf16 %v924, %v922
        %v1009 = vpack.c.bf16 %v927, %v925
        %v1010 = vpack.c.bf16 %v928, %v926
        %v1011 = vpack.c.bf16 %v931, %v929
        %v1012 = vpack.c.bf16 %v932, %v930
        %v1013 = vpack.c.bf16 %v935, %v933
        %v1014 = vpack.c.bf16 %v936, %v934
        %v1015 = vpack.c.bf16 %v939, %v937
        %v1016 = vpack.c.bf16 %v940, %v938
        %v1017 = vpack.c.bf16 %v943, %v941
        %v1018 = vpack.c.bf16 %v944, %v942
        %v1019 = vpack.c.bf16 %v947, %v945
        %v1020 = vpack.c.bf16 %v948, %v946
        %v1021 = vpack.c.bf16 %v951, %v949
        %v1022 = vpack.c.bf16 %v952, %v950
        %v1023 = vpack.c.bf16 %v955, %v953
        %v1024 = vpack.c.bf16 %v956, %v954
        %v1025 = vpack.c.bf16 %v959, %v957
        %v1026 = vpack.c.bf16 %v960, %v958
        %v1027 = vpack.c.bf16 %v963, %v961
        %v1028 = vpack.c.bf16 %v964, %v962
        %v1029 = vld [vmem:[#allocation8] sm:$0xf]
        %v1030 = vld [vmem:[#allocation8 + $0x4] sm:$0xf]
        %v1031 = vld [vmem:[#allocation8 + $0x8] sm:$0xf]
        %v1032 = vld [vmem:[#allocation8 + $0xc] sm:$0xf]
        %v1033 = vld [vmem:[#allocation8 + $0x10] sm:$0xf]
        %v1034 = vld [vmem:[#allocation8 + $0x14] sm:$0xf]
        %v1035 = vld [vmem:[#allocation8 + $0x18] sm:$0xf]
        %v1036 = vld [vmem:[#allocation8 + $0x1c] sm:$0xf]
        %v1037 = vld [vmem:[#allocation8 + $0x20] sm:$0xf]
        %v1038 = vld [vmem:[#allocation8 + $0x24] sm:$0xf]
        %v1039 = vld [vmem:[#allocation8 + $0x28] sm:$0xf]
        %v1040 = vld [vmem:[#allocation8 + $0x2c] sm:$0xf]
        %v1041 = vld [vmem:[#allocation8 + $0x30] sm:$0xf]
        %v1042 = vld [vmem:[#allocation8 + $0x34] sm:$0xf]
        %v1043 = vld [vmem:[#allocation8 + $0x38] sm:$0xf]
        %v1044 = vld [vmem:[#allocation8 + $0x3c] sm:$0xf]
        %v1045 = vld [vmem:[#allocation8 + $0x40] sm:$0xf]
        %v1046 = vld [vmem:[#allocation8 + $0x44] sm:$0xf]
        %v1047 = vld [vmem:[#allocation8 + $0x48] sm:$0xf]
        %v1048 = vld [vmem:[#allocation8 + $0x4c] sm:$0xf]
        %v1049 = vld [vmem:[#allocation8 + $0x50] sm:$0xf]
        %v1050 = vld [vmem:[#allocation8 + $0x54] sm:$0xf]
        %v1051 = vld [vmem:[#allocation8 + $0x58] sm:$0xf]
        %v1052 = vld [vmem:[#allocation8 + $0x5c] sm:$0xf]
        %v1053 = vld [vmem:[#allocation8 + $0x60] sm:$0xf]
        %v1054 = vld [vmem:[#allocation8 + $0x64] sm:$0xf]
        %v1055 = vld [vmem:[#allocation8 + $0x68] sm:$0xf]
        %v1056 = vld [vmem:[#allocation8 + $0x6c] sm:$0xf]
        %v1057 = vld [vmem:[#allocation8 + $0x70] sm:$0xf]
        %v1058 = vld [vmem:[#allocation8 + $0x74] sm:$0xf]
        %v1059 = vld [vmem:[#allocation8 + $0x78] sm:$0xf]
        %v1060 = vld [vmem:[#allocation8 + $0x7c] sm:$0xf]
        %v1093 = vunpack.c.l.b16 %v1029
        %v1094 = vunpack.c.l.b16 %v1030
        %v1095 = vunpack.c.l.b16 %v1031
        %v1096 = vunpack.c.l.b16 %v1032
        %v1097 = vunpack.c.l.b16 %v1033
        %v1098 = vunpack.c.l.b16 %v1034
        %v1099 = vunpack.c.l.b16 %v1035
        %v1100 = vunpack.c.l.b16 %v1036
        %v1101 = vunpack.c.l.b16 %v1037
        %v1102 = vunpack.c.l.b16 %v1038
        %v1103 = vunpack.c.l.b16 %v1039
        %v1104 = vunpack.c.l.b16 %v1040
        %v1105 = vunpack.c.l.b16 %v1041
        %v1106 = vunpack.c.l.b16 %v1042
        %v1107 = vunpack.c.l.b16 %v1043
        %v1108 = vunpack.c.l.b16 %v1044
        %v1109 = vunpack.c.l.b16 %v1045
        %v1110 = vunpack.c.l.b16 %v1046
        %v1111 = vunpack.c.l.b16 %v1047
        %v1112 = vunpack.c.l.b16 %v1048
        %v1113 = vunpack.c.l.b16 %v1049
        %v1114 = vunpack.c.l.b16 %v1050
        %v1115 = vunpack.c.l.b16 %v1051
        %v1116 = vunpack.c.l.b16 %v1052
        %v1117 = vunpack.c.l.b16 %v1053
        %v1118 = vunpack.c.l.b16 %v1054
        %v1119 = vunpack.c.l.b16 %v1055
        %v1120 = vunpack.c.l.b16 %v1056
        %v1121 = vunpack.c.l.b16 %v1057
        %v1122 = vunpack.c.l.b16 %v1058
        %v1123 = vunpack.c.l.b16 %v1059
        %v1124 = vunpack.c.l.b16 %v1060
        %v1125 = vpack.c.b16 %v1094, %v1093
        %v1126 = vpack.c.b16 %v1096, %v1095
        %v1127 = vpack.c.b16 %v1098, %v1097
        %v1128 = vpack.c.b16 %v1100, %v1099
        %v1129 = vpack.c.b16 %v1102, %v1101
        %v1130 = vpack.c.b16 %v1104, %v1103
        %v1131 = vpack.c.b16 %v1106, %v1105
        %v1132 = vpack.c.b16 %v1108, %v1107
        %v1133 = vpack.c.b16 %v1110, %v1109
        %v1134 = vpack.c.b16 %v1112, %v1111
        %v1135 = vpack.c.b16 %v1114, %v1113
        %v1136 = vpack.c.b16 %v1116, %v1115
        %v1137 = vpack.c.b16 %v1118, %v1117
        %v1138 = vpack.c.b16 %v1120, %v1119
        %v1139 = vpack.c.b16 %v1122, %v1121
        %v1140 = vpack.c.b16 %v1124, %v1123
        %1157 = vmatprep.subr.bf16.mxu0 0
        %1158 = vmatpush1.bf16.msra.mxu0 %v1125
        %1159 = vmatprep.subr.bf16.mxu0 0
        %1160 = vmatpush1.bf16.msra.mxu0 %v1126
        %1161 = vmatprep.subr.bf16.mxu0 0
        %1162 = vmatpush1.bf16.msra.mxu0 %v1127
        %1163 = vmatprep.subr.bf16.mxu0 0
        %1164 = vmatpush1.bf16.msra.mxu0 %v1128
        %1165 = vmatprep.subr.bf16.mxu0 0
        %1166 = vmatpush1.bf16.msra.mxu0 %v1129
        %1167 = vmatprep.subr.bf16.mxu0 0
        %1168 = vmatpush1.bf16.msra.mxu0 %v1130
        %1169 = vmatprep.subr.bf16.mxu0 0
        %1170 = vmatpush1.bf16.msra.mxu0 %v1131
        %1171 = vmatprep.subr.bf16.mxu0 0
        %1172 = vmatpush1.bf16.msra.mxu0 %v1132
        %1173 = vmatprep.subr.bf16.mxu0 0
        %1174 = vmatpush1.bf16.msra.mxu0 %v1133
        %1175 = vmatprep.subr.bf16.mxu0 0
        %1176 = vmatpush1.bf16.msra.mxu0 %v1134
        %1177 = vmatprep.subr.bf16.mxu0 0
        %1178 = vmatpush1.bf16.msra.mxu0 %v1135
        %1179 = vmatprep.subr.bf16.mxu0 0
        %1180 = vmatpush1.bf16.msra.mxu0 %v1136
        %1181 = vmatprep.subr.bf16.mxu0 0
        %1182 = vmatpush1.bf16.msra.mxu0 %v1137
        %1183 = vmatprep.subr.bf16.mxu0 0
        %1184 = vmatpush1.bf16.msra.mxu0 %v1138
        %1185 = vmatprep.subr.bf16.mxu0 0
        %1186 = vmatpush1.bf16.msra.mxu0 %v1139
        %1187 = vmatprep.subr.bf16.mxu0 0
        %1188 = vmatpush1.bf16.msra.mxu0 %v1140
        %1189 = vmatprep.mubr.bf16.mxu0 %v998
        %1190 = vmatmul.mubr.bf16.gmra.mrb[0].mxu0 %v997
        %v1191 = vpop.f32.mrb[0].mxu0
        %v1192 = vadd.f32 0.0, %v1191
        %v1193 = vpop.f32.mrb[0].mxu0
        %v1194 = vpop.f32.mrb[0].mxu0
        %v1195 = vadd.f32 0.0, %v1194
        %v1196 = vpop.f32.mrb[0].mxu0
        %1197 = vmatprep.mubr.bf16.mxu0 %v1000
        %1198 = vmatmul.mubr.bf16.gmra.mrb[0].mxu0 %v999
        %v1199 = vpop.f32.mrb[0].mxu0
        %v1200 = vadd.f32 0.0, %v1199
        %v1201 = vpop.f32.mrb[0].mxu0
        %v1202 = vpop.f32.mrb[0].mxu0
        %v1203 = vadd.f32 0.0, %v1202
        %v1204 = vpop.f32.mrb[0].mxu0
        %1205 = vmatprep.mubr.bf16.mxu0 %v1002
        %1206 = vmatmul.mubr.bf16.gmra.mrb[0].mxu0 %v1001
        %v1207 = vpop.f32.mrb[0].mxu0
        %v1208 = vadd.f32 0.0, %v1207
        %v1209 = vpop.f32.mrb[0].mxu0
        %v1210 = vpop.f32.mrb[0].mxu0
        %v1211 = vadd.f32 0.0, %v1210
        %v1212 = vpop.f32.mrb[0].mxu0
        %1213 = vmatprep.mubr.bf16.mxu0 %v1004
        %1214 = vmatmul.mubr.bf16.gmra.mrb[0].mxu0 %v1003
        %v1215 = vpop.f32.mrb[0].mxu0
        %v1216 = vadd.f32 0.0, %v1215
        %v1217 = vpop.f32.mrb[0].mxu0
        %v1218 = vpop.f32.mrb[0].mxu0
        %v1219 = vadd.f32 0.0, %v1218
        %v1220 = vpop.f32.mrb[0].mxu0
        %1221 = vmatprep.mubr.bf16.mxu0 %v1006
        %1222 = vmatmul.mubr.bf16.gmra.mrb[0].mxu0 %v1005
        %v1223 = vpop.f32.mrb[0].mxu0
        %v1224 = vadd.f32 0.0, %v1223
        %v1225 = vpop.f32.mrb[0].mxu0
        %v1226 = vpop.f32.mrb[0].mxu0
        %v1227 = vadd.f32 0.0, %v1226
        %v1228 = vpop.f32.mrb[0].mxu0
        %1229 = vmatprep.mubr.bf16.mxu0 %v1008
        %1230 = vmatmul.mubr.bf16.gmra.mrb[0].mxu0 %v1007
        %v1231 = vpop.f32.mrb[0].mxu0
        %v1232 = vadd.f32 0.0, %v1231
        %v1233 = vpop.f32.mrb[0].mxu0
        %v1234 = vpop.f32.mrb[0].mxu0
        %v1235 = vadd.f32 0.0, %v1234
        %v1236 = vpop.f32.mrb[0].mxu0
        %1237 = vmatprep.mubr.bf16.mxu0 %v1010
        %1238 = vmatmul.mubr.bf16.gmra.mrb[0].mxu0 %v1009
        %v1239 = vpop.f32.mrb[0].mxu0
        %v1240 = vadd.f32 0.0, %v1239
        %v1241 = vpop.f32.mrb[0].mxu0
        %v1242 = vpop.f32.mrb[0].mxu0
        %v1243 = vadd.f32 0.0, %v1242
        %v1244 = vpop.f32.mrb[0].mxu0
        %1245 = vmatprep.mubr.bf16.mxu0 %v1012
        %1246 = vmatmul.mubr.bf16.gmra.mrb[0].mxu0 %v1011
        %v1247 = vpop.f32.mrb[0].mxu0
        %v1248 = vadd.f32 0.0, %v1247
        %v1249 = vpop.f32.mrb[0].mxu0
        %v1250 = vpop.f32.mrb[0].mxu0
        %v1251 = vadd.f32 0.0, %v1250
        %v1252 = vpop.f32.mrb[0].mxu0
        %1253 = vmatprep.mubr.bf16.mxu0 %v1014
        %1254 = vmatmul.mubr.bf16.gmra.mrb[0].mxu0 %v1013
        %v1255 = vpop.f32.mrb[0].mxu0
        %v1256 = vadd.f32 0.0, %v1255
        %v1257 = vpop.f32.mrb[0].mxu0
        %v1258 = vpop.f32.mrb[0].mxu0
        %v1259 = vadd.f32 0.0, %v1258
        %v1260 = vpop.f32.mrb[0].mxu0
        %1261 = vmatprep.mubr.bf16.mxu0 %v1016
        %1262 = vmatmul.mubr.bf16.gmra.mrb[0].mxu0 %v1015
        %v1263 = vpop.f32.mrb[0].mxu0
        %v1264 = vadd.f32 0.0, %v1263
        %v1265 = vpop.f32.mrb[0].mxu0
        %v1266 = vpop.f32.mrb[0].mxu0
        %v1267 = vadd.f32 0.0, %v1266
        %v1268 = vpop.f32.mrb[0].mxu0
        %1269 = vmatprep.mubr.bf16.mxu0 %v1018
        %1270 = vmatmul.mubr.bf16.gmra.mrb[0].mxu0 %v1017
        %v1271 = vpop.f32.mrb[0].mxu0
        %v1272 = vadd.f32 0.0, %v1271
        %v1273 = vpop.f32.mrb[0].mxu0
        %v1274 = vpop.f32.mrb[0].mxu0
        %v1275 = vadd.f32 0.0, %v1274
        %v1276 = vpop.f32.mrb[0].mxu0
        %1277 = vmatprep.mubr.bf16.mxu0 %v1020
        %1278 = vmatmul.mubr.bf16.gmra.mrb[0].mxu0 %v1019
        %v1279 = vpop.f32.mrb[0].mxu0
        %v1280 = vadd.f32 0.0, %v1279
        %v1281 = vpop.f32.mrb[0].mxu0
        %v1282 = vpop.f32.mrb[0].mxu0
        %v1283 = vadd.f32 0.0, %v1282
        %v1284 = vpop.f32.mrb[0].mxu0
        %1285 = vmatprep.mubr.bf16.mxu0 %v1022
        %1286 = vmatmul.mubr.bf16.gmra.mrb[0].mxu0 %v1021
        %v1287 = vpop.f32.mrb[0].mxu0
        %v1288 = vadd.f32 0.0, %v1287
        %v1289 = vpop.f32.mrb[0].mxu0
        %v1290 = vpop.f32.mrb[0].mxu0
        %v1291 = vadd.f32 0.0, %v1290
        %v1292 = vpop.f32.mrb[0].mxu0
        %1293 = vmatprep.mubr.bf16.mxu0 %v1024
        %1294 = vmatmul.mubr.bf16.gmra.mrb[0].mxu0 %v1023
        %v1295 = vpop.f32.mrb[0].mxu0
        %v1296 = vadd.f32 0.0, %v1295
        %v1297 = vpop.f32.mrb[0].mxu0
        %v1298 = vpop.f32.mrb[0].mxu0
        %v1299 = vadd.f32 0.0, %v1298
        %v1300 = vpop.f32.mrb[0].mxu0
        %1301 = vmatprep.mubr.bf16.mxu0 %v1026
        %1302 = vmatmul.mubr.bf16.gmra.mrb[0].mxu0 %v1025
        %v1303 = vpop.f32.mrb[0].mxu0
        %v1304 = vadd.f32 0.0, %v1303
        %v1305 = vpop.f32.mrb[0].mxu0
        %v1306 = vpop.f32.mrb[0].mxu0
        %v1307 = vadd.f32 0.0, %v1306
        %v1308 = vpop.f32.mrb[0].mxu0
        %1309 = vmatprep.mubr.bf16.mxu0 %v1028
        %1310 = vmatmul.mubr.bf16.gmra.mrb[0].mxu0 %v1027
        %v1311 = vpop.f32.mrb[0].mxu0
        %v1312 = vadd.f32 0.0, %v1311
        %v1313 = vpop.f32.mrb[0].mxu0
        %v1314 = vpop.f32.mrb[0].mxu0
        %v1315 = vadd.f32 0.0, %v1314
        %v1316 = vpop.f32.mrb[0].mxu0
        %1317 = vdwg.mxu0
        %v1318 = vadd.f32 %v965, %v1192
        %v1319 = vadd.f32 %v966, %v1195
        %v1320 = vadd.f32 %v967, %v1200
        %v1321 = vadd.f32 %v968, %v1203
        %v1322 = vadd.f32 %v969, %v1208
        %v1323 = vadd.f32 %v970, %v1211
        %v1324 = vadd.f32 %v971, %v1216
        %v1325 = vadd.f32 %v972, %v1219
        %v1326 = vadd.f32 %v973, %v1224
        %v1327 = vadd.f32 %v974, %v1227
        %v1328 = vadd.f32 %v975, %v1232
        %v1329 = vadd.f32 %v976, %v1235
        %v1330 = vadd.f32 %v977, %v1240
        %v1331 = vadd.f32 %v978, %v1243
        %v1332 = vadd.f32 %v979, %v1248
        %v1333 = vadd.f32 %v980, %v1251
        %v1334 = vadd.f32 %v981, %v1256
        %v1335 = vadd.f32 %v982, %v1259
        %v1336 = vadd.f32 %v983, %v1264
        %v1337 = vadd.f32 %v984, %v1267
        %v1338 = vadd.f32 %v985, %v1272
        %v1339 = vadd.f32 %v986, %v1275
        %v1340 = vadd.f32 %v987, %v1280
        %v1341 = vadd.f32 %v988, %v1283
        %v1342 = vadd.f32 %v989, %v1288
        %v1343 = vadd.f32 %v990, %v1291
        %v1344 = vadd.f32 %v991, %v1296
        %v1345 = vadd.f32 %v992, %v1299
        %v1346 = vadd.f32 %v993, %v1304
        %v1347 = vadd.f32 %v994, %v1307
        %v1348 = vadd.f32 %v995, %v1312
        %v1349 = vadd.f32 %v996, %v1315
        %1350 = vst [vmem:[#allocation2] sm:$0xff] %v1318
        %1351 = vst [vmem:[#allocation2 + $0x8] sm:$0xff] %v1319
        %1352 = vst [vmem:[#allocation2 + $0x10] sm:$0xff] %v1320
        %1353 = vst [vmem:[#allocation2 + $0x18] sm:$0xff] %v1321
        %1354 = vst [vmem:[#allocation2 + $0x20] sm:$0xff] %v1322
        %1355 = vst [vmem:[#allocation2 + $0x28] sm:$0xff] %v1323
        %1356 = vst [vmem:[#allocation2 + $0x30] sm:$0xff] %v1324
        %1357 = vst [vmem:[#allocation2 + $0x38] sm:$0xff] %v1325
        %1358 = vst [vmem:[#allocation2 + $0x40] sm:$0xff] %v1326
        %1359 = vst [vmem:[#allocation2 + $0x48] sm:$0xff] %v1327
        %1360 = vst [vmem:[#allocation2 + $0x50] sm:$0xff] %v1328
        %1361 = vst [vmem:[#allocation2 + $0x58] sm:$0xff] %v1329
        %1362 = vst [vmem:[#allocation2 + $0x60] sm:$0xff] %v1330
        %1363 = vst [vmem:[#allocation2 + $0x68] sm:$0xff] %v1331
        %1364 = vst [vmem:[#allocation2 + $0x70] sm:$0xff] %v1332
        %1365 = vst [vmem:[#allocation2 + $0x78] sm:$0xff] %v1333
        %1366 = vst [vmem:[#allocation2 + $0x80] sm:$0xff] %v1334
        %1367 = vst [vmem:[#allocation2 + $0x88] sm:$0xff] %v1335
        %1368 = vst [vmem:[#allocation2 + $0x90] sm:$0xff] %v1336
        %1369 = vst [vmem:[#allocation2 + $0x98] sm:$0xff] %v1337
        %1370 = vst [vmem:[#allocation2 + $0xa0] sm:$0xff] %v1338
        %1371 = vst [vmem:[#allocation2 + $0xa8] sm:$0xff] %v1339
        %1372 = vst [vmem:[#allocation2 + $0xb0] sm:$0xff] %v1340
        %1373 = vst [vmem:[#allocation2 + $0xb8] sm:$0xff] %v1341
        %1374 = vst [vmem:[#allocation2 + $0xc0] sm:$0xff] %v1342
        %1375 = vst [vmem:[#allocation2 + $0xc8] sm:$0xff] %v1343
        %1376 = vst [vmem:[#allocation2 + $0xd0] sm:$0xff] %v1344
        %1377 = vst [vmem:[#allocation2 + $0xd8] sm:$0xff] %v1345
        %1378 = vst [vmem:[#allocation2 + $0xe0] sm:$0xff] %v1346
        %1379 = vst [vmem:[#allocation2 + $0xe8] sm:$0xff] %v1347
        %1380 = vst [vmem:[#allocation2 + $0xf0] sm:$0xff] %v1348
        %1381 = vst [vmem:[#allocation2 + $0xf8] sm:$0xff] %v1349
        // Predicated region
        $region57: #{tpu_custom_call.1} parent=39 // pred_check
          %p1382 = pneg %p324
        $region58: #{tpu_custom_call.1} parent=39 // pred_check_branch
          %1384 = sbr.rel (%p1382) target = $region60
        $region59: #{tpu_custom_call.1} parent=39 // pred_region
          %v1385 = vld [vmem:[#allocation2] sm:$0xff]
          %v1386 = vld [vmem:[#allocation2 + $0x8] sm:$0xff]
          %v1387 = vld [vmem:[#allocation2 + $0x10] sm:$0xff]
          %v1388 = vld [vmem:[#allocation2 + $0x18] sm:$0xff]
          %v1389 = vld [vmem:[#allocation2 + $0x20] sm:$0xff]
          %v1390 = vld [vmem:[#allocation2 + $0x28] sm:$0xff]
          %v1391 = vld [vmem:[#allocation2 + $0x30] sm:$0xff]
          %v1392 = vld [vmem:[#allocation2 + $0x38] sm:$0xff]
          %v1393 = vld [vmem:[#allocation2 + $0x40] sm:$0xff]
          %v1394 = vld [vmem:[#allocation2 + $0x48] sm:$0xff]
          %v1395 = vld [vmem:[#allocation2 + $0x50] sm:$0xff]
          %v1396 = vld [vmem:[#allocation2 + $0x58] sm:$0xff]
          %v1397 = vld [vmem:[#allocation2 + $0x60] sm:$0xff]
          %v1398 = vld [vmem:[#allocation2 + $0x68] sm:$0xff]
          %v1399 = vld [vmem:[#allocation2 + $0x70] sm:$0xff]
          %v1400 = vld [vmem:[#allocation2 + $0x78] sm:$0xff]
          %v1401 = vld [vmem:[#allocation2 + $0x80] sm:$0xff]
          %v1402 = vld [vmem:[#allocation2 + $0x88] sm:$0xff]
          %v1403 = vld [vmem:[#allocation2 + $0x90] sm:$0xff]
          %v1404 = vld [vmem:[#allocation2 + $0x98] sm:$0xff]
          %v1405 = vld [vmem:[#allocation2 + $0xa0] sm:$0xff]
          %v1406 = vld [vmem:[#allocation2 + $0xa8] sm:$0xff]
          %v1407 = vld [vmem:[#allocation2 + $0xb0] sm:$0xff]
          %v1408 = vld [vmem:[#allocation2 + $0xb8] sm:$0xff]
          %v1409 = vld [vmem:[#allocation2 + $0xc0] sm:$0xff]
          %v1410 = vld [vmem:[#allocation2 + $0xc8] sm:$0xff]
          %v1411 = vld [vmem:[#allocation2 + $0xd0] sm:$0xff]
          %v1412 = vld [vmem:[#allocation2 + $0xd8] sm:$0xff]
          %v1413 = vld [vmem:[#allocation2 + $0xe0] sm:$0xff]
          %v1414 = vld [vmem:[#allocation2 + $0xe8] sm:$0xff]
          %v1415 = vld [vmem:[#allocation2 + $0xf0] sm:$0xff]
          %v1416 = vld [vmem:[#allocation2 + $0xf8] sm:$0xff]
          %v1417 = vld [vmem:[%s4] sm:$0x1]
          %v1419 = vlaneseq
          %v1420 = vshrl.u32 %v1419, 7
          %v1421 = vsub.s32 0, %v1420
          %v1422 = vrot.slane %v1417, %v1421
          %v1424 = vadd.f32 %v1385, %v1422
          %v1425 = vadd.f32 %v1386, %v1422
          %v1426 = vadd.f32 %v1387, %v1422
          %v1427 = vadd.f32 %v1388, %v1422
          %v1428 = vadd.f32 %v1389, %v1422
          %v1429 = vadd.f32 %v1390, %v1422
          %v1430 = vadd.f32 %v1391, %v1422
          %v1431 = vadd.f32 %v1392, %v1422
          %v1432 = vadd.f32 %v1393, %v1422
          %v1433 = vadd.f32 %v1394, %v1422
          %v1434 = vadd.f32 %v1395, %v1422
          %v1435 = vadd.f32 %v1396, %v1422
          %v1436 = vadd.f32 %v1397, %v1422
          %v1437 = vadd.f32 %v1398, %v1422
          %v1438 = vadd.f32 %v1399, %v1422
          %v1439 = vadd.f32 %v1400, %v1422
          %v1440 = vadd.f32 %v1401, %v1422
          %v1441 = vadd.f32 %v1402, %v1422
          %v1442 = vadd.f32 %v1403, %v1422
          %v1443 = vadd.f32 %v1404, %v1422
          %v1444 = vadd.f32 %v1405, %v1422
          %v1445 = vadd.f32 %v1406, %v1422
          %v1446 = vadd.f32 %v1407, %v1422
          %v1447 = vadd.f32 %v1408, %v1422
          %v1448 = vadd.f32 %v1409, %v1422
          %v1449 = vadd.f32 %v1410, %v1422
          %v1450 = vadd.f32 %v1411, %v1422
          %v1451 = vadd.f32 %v1412, %v1422
          %v1452 = vadd.f32 %v1413, %v1422
          %v1453 = vadd.f32 %v1414, %v1422
          %v1454 = vadd.f32 %v1415, %v1422
          %v1455 = vadd.f32 %v1416, %v1422
          %v1456 = vmul.f32 %v1424, %v1424
          %v1457 = vmul.f32 %v1425, %v1425
          %v1458 = vmul.f32 %v1426, %v1426
          %v1459 = vmul.f32 %v1427, %v1427
          %v1460 = vmul.f32 %v1428, %v1428
          %v1461 = vmul.f32 %v1429, %v1429
          %v1462 = vmul.f32 %v1430, %v1430
          %v1463 = vmul.f32 %v1431, %v1431
          %v1464 = vmul.f32 %v1432, %v1432
          %v1465 = vmul.f32 %v1433, %v1433
          %v1466 = vmul.f32 %v1434, %v1434
          %v1467 = vmul.f32 %v1435, %v1435
          %v1468 = vmul.f32 %v1436, %v1436
          %v1469 = vmul.f32 %v1437, %v1437
          %v1470 = vmul.f32 %v1438, %v1438
          %v1471 = vmul.f32 %v1439, %v1439
          %v1472 = vmul.f32 %v1440, %v1440
          %v1473 = vmul.f32 %v1441, %v1441
          %v1474 = vmul.f32 %v1442, %v1442
          %v1475 = vmul.f32 %v1443, %v1443
          %v1476 = vmul.f32 %v1444, %v1444
          %v1477 = vmul.f32 %v1445, %v1445
          %v1478 = vmul.f32 %v1446, %v1446
          %v1479 = vmul.f32 %v1447, %v1447
          %v1480 = vmul.f32 %v1448, %v1448
          %v1481 = vmul.f32 %v1449, %v1449
          %v1482 = vmul.f32 %v1450, %v1450
          %v1483 = vmul.f32 %v1451, %v1451
          %v1484 = vmul.f32 %v1452, %v1452
          %v1485 = vmul.f32 %v1453, %v1453
          %v1486 = vmul.f32 %v1454, %v1454
          %v1487 = vmul.f32 %v1455, %v1455
          %1488 = vadd.xlane.f32.xlu0 %v1456
          %v1489 = vpop.xlane.xlu0 %1488
          %1490 = vadd.xlane.f32.xlu0 %v1457
          %v1491 = vpop.xlane.xlu0 %1490
          %1492 = vadd.xlane.f32.xlu0 %v1458
          %v1493 = vpop.xlane.xlu0 %1492
          %1494 = vadd.xlane.f32.xlu0 %v1459
          %v1495 = vpop.xlane.xlu0 %1494
          %1496 = vadd.xlane.f32.xlu0 %v1460
          %v1497 = vpop.xlane.xlu0 %1496
          %1498 = vadd.xlane.f32.xlu0 %v1461
          %v1499 = vpop.xlane.xlu0 %1498
          %1500 = vadd.xlane.f32.xlu0 %v1462
          %v1501 = vpop.xlane.xlu0 %1500
          %1502 = vadd.xlane.f32.xlu0 %v1463
          %v1503 = vpop.xlane.xlu0 %1502
          %1504 = vadd.xlane.f32.xlu0 %v1464
          %v1505 = vpop.xlane.xlu0 %1504
          %1506 = vadd.xlane.f32.xlu0 %v1465
          %v1507 = vpop.xlane.xlu0 %1506
          %1508 = vadd.xlane.f32.xlu0 %v1466
          %v1509 = vpop.xlane.xlu0 %1508
          %1510 = vadd.xlane.f32.xlu0 %v1467
          %v1511 = vpop.xlane.xlu0 %1510
          %1512 = vadd.xlane.f32.xlu0 %v1468
          %v1513 = vpop.xlane.xlu0 %1512
          %1514 = vadd.xlane.f32.xlu0 %v1469
          %v1515 = vpop.xlane.xlu0 %1514
          %1516 = vadd.xlane.f32.xlu0 %v1470
          %v1517 = vpop.xlane.xlu0 %1516
          %1518 = vadd.xlane.f32.xlu0 %v1471
          %v1519 = vpop.xlane.xlu0 %1518
          %1520 = vadd.xlane.f32.xlu0 %v1472
          %v1521 = vpop.xlane.xlu0 %1520
          %1522 = vadd.xlane.f32.xlu0 %v1473
          %v1523 = vpop.xlane.xlu0 %1522
          %1524 = vadd.xlane.f32.xlu0 %v1474
          %v1525 = vpop.xlane.xlu0 %1524
          %1526 = vadd.xlane.f32.xlu0 %v1475
          %v1527 = vpop.xlane.xlu0 %1526
          %1528 = vadd.xlane.f32.xlu0 %v1476
          %v1529 = vpop.xlane.xlu0 %1528
          %1530 = vadd.xlane.f32.xlu0 %v1477
          %v1531 = vpop.xlane.xlu0 %1530
          %1532 = vadd.xlane.f32.xlu0 %v1478
          %v1533 = vpop.xlane.xlu0 %1532
          %1534 = vadd.xlane.f32.xlu0 %v1479
          %v1535 = vpop.xlane.xlu0 %1534
          %1536 = vadd.xlane.f32.xlu0 %v1480
          %v1537 = vpop.xlane.xlu0 %1536
          %1538 = vadd.xlane.f32.xlu0 %v1481
          %v1539 = vpop.xlane.xlu0 %1538
          %1540 = vadd.xlane.f32.xlu0 %v1482
          %v1541 = vpop.xlane.xlu0 %1540
          %1542 = vadd.xlane.f32.xlu0 %v1483
          %v1543 = vpop.xlane.xlu0 %1542
          %1544 = vadd.xlane.f32.xlu0 %v1484
          %v1545 = vpop.xlane.xlu0 %1544
          %1546 = vadd.xlane.f32.xlu0 %v1485
          %v1547 = vpop.xlane.xlu0 %1546
          %1548 = vadd.xlane.f32.xlu0 %v1486
          %v1549 = vpop.xlane.xlu0 %1548
          %1550 = vadd.xlane.f32.xlu0 %v1487
          %v1551 = vpop.xlane.xlu0 %1550
          %v1552 = vmax.f32 %v1489, 1e-24
          %v1553 = vmax.f32 %v1491, 1e-24
          %v1554 = vmax.f32 %v1493, 1e-24
          %v1555 = vmax.f32 %v1495, 1e-24
          %v1556 = vmax.f32 %v1497, 1e-24
          %v1557 = vmax.f32 %v1499, 1e-24
          %v1558 = vmax.f32 %v1501, 1e-24
          %v1559 = vmax.f32 %v1503, 1e-24
          %v1560 = vmax.f32 %v1505, 1e-24
          %v1561 = vmax.f32 %v1507, 1e-24
          %v1562 = vmax.f32 %v1509, 1e-24
          %v1563 = vmax.f32 %v1511, 1e-24
          %v1564 = vmax.f32 %v1513, 1e-24
          %v1565 = vmax.f32 %v1515, 1e-24
          %v1566 = vmax.f32 %v1517, 1e-24
          %v1567 = vmax.f32 %v1519, 1e-24
          %v1568 = vmax.f32 %v1521, 1e-24
          %v1569 = vmax.f32 %v1523, 1e-24
          %v1570 = vmax.f32 %v1525, 1e-24
          %v1571 = vmax.f32 %v1527, 1e-24
          %v1572 = vmax.f32 %v1529, 1e-24
          %v1573 = vmax.f32 %v1531, 1e-24
          %v1574 = vmax.f32 %v1533, 1e-24
          %v1575 = vmax.f32 %v1535, 1e-24
          %v1576 = vmax.f32 %v1537, 1e-24
          %v1577 = vmax.f32 %v1539, 1e-24
          %v1578 = vmax.f32 %v1541, 1e-24
          %v1579 = vmax.f32 %v1543, 1e-24
          %v1580 = vmax.f32 %v1545, 1e-24
          %v1581 = vmax.f32 %v1547, 1e-24
          %v1582 = vmax.f32 %v1549, 1e-24
          %v1583 = vmax.f32 %v1551, 1e-24
          %v1584 = vrsqrt.pop %v1552
          %v1585 = vrsqrt.pop %v1553
          %v1586 = vrsqrt.pop %v1554
          %v1587 = vrsqrt.pop %v1555
          %v1588 = vrsqrt.pop %v1556
          %v1589 = vrsqrt.pop %v1557
          %v1590 = vrsqrt.pop %v1558
          %v1591 = vrsqrt.pop %v1559
          %v1592 = vrsqrt.pop %v1560
          %v1593 = vrsqrt.pop %v1561
          %v1594 = vrsqrt.pop %v1562
          %v1595 = vrsqrt.pop %v1563
          %v1596 = vrsqrt.pop %v1564
          %v1597 = vrsqrt.pop %v1565
          %v1598 = vrsqrt.pop %v1566
          %v1599 = vrsqrt.pop %v1567
          %v1600 = vrsqrt.pop %v1568
          %v1601 = vrsqrt.pop %v1569
          %v1602 = vrsqrt.pop %v1570
          %v1603 = vrsqrt.pop %v1571
          %v1604 = vrsqrt.pop %v1572
          %v1605 = vrsqrt.pop %v1573
          %v1606 = vrsqrt.pop %v1574
          %v1607 = vrsqrt.pop %v1575
          %v1608 = vrsqrt.pop %v1576
          %v1609 = vrsqrt.pop %v1577
          %v1610 = vrsqrt.pop %v1578
          %v1611 = vrsqrt.pop %v1579
          %v1612 = vrsqrt.pop %v1580
          %v1613 = vrsqrt.pop %v1581
          %v1614 = vrsqrt.pop %v1582
          %v1615 = vrsqrt.pop %v1583
          %v1616 = vmul.f32 %v1424, %v1584
          %v1617 = vmul.f32 %v1425, %v1585
          %v1618 = vmul.f32 %v1426, %v1586
          %v1619 = vmul.f32 %v1427, %v1587
          %v1620 = vmul.f32 %v1428, %v1588
          %v1621 = vmul.f32 %v1429, %v1589
          %v1622 = vmul.f32 %v1430, %v1590
          %v1623 = vmul.f32 %v1431, %v1591
          %v1624 = vmul.f32 %v1432, %v1592
          %v1625 = vmul.f32 %v1433, %v1593
          %v1626 = vmul.f32 %v1434, %v1594
          %v1627 = vmul.f32 %v1435, %v1595
          %v1628 = vmul.f32 %v1436, %v1596
          %v1629 = vmul.f32 %v1437, %v1597
          %v1630 = vmul.f32 %v1438, %v1598
          %v1631 = vmul.f32 %v1439, %v1599
          %v1632 = vmul.f32 %v1440, %v1600
          %v1633 = vmul.f32 %v1441, %v1601
          %v1634 = vmul.f32 %v1442, %v1602
          %v1635 = vmul.f32 %v1443, %v1603
          %v1636 = vmul.f32 %v1444, %v1604
          %v1637 = vmul.f32 %v1445, %v1605
          %v1638 = vmul.f32 %v1446, %v1606
          %v1639 = vmul.f32 %v1447, %v1607
          %v1640 = vmul.f32 %v1448, %v1608
          %v1641 = vmul.f32 %v1449, %v1609
          %v1642 = vmul.f32 %v1450, %v1610
          %v1643 = vmul.f32 %v1451, %v1611
          %v1644 = vmul.f32 %v1452, %v1612
          %v1645 = vmul.f32 %v1453, %v1613
          %v1646 = vmul.f32 %v1454, %v1614
          %v1647 = vmul.f32 %v1455, %v1615
          %1648 = vst [vmem:[%s313] sm:$0xff] %v1616
          %1649 = vst [vmem:[%s313 + $0x8] sm:$0xff] %v1617
          %1650 = vst [vmem:[%s313 + $0x10] sm:$0xff] %v1618
          %1651 = vst [vmem:[%s313 + $0x18] sm:$0xff] %v1619
          %1652 = vst [vmem:[%s313 + $0x20] sm:$0xff] %v1620
          %1653 = vst [vmem:[%s313 + $0x28] sm:$0xff] %v1621
          %1654 = vst [vmem:[%s313 + $0x30] sm:$0xff] %v1622
          %1655 = vst [vmem:[%s313 + $0x38] sm:$0xff] %v1623
          %1656 = vst [vmem:[%s313 + $0x40] sm:$0xff] %v1624
          %1657 = vst [vmem:[%s313 + $0x48] sm:$0xff] %v1625
          %1658 = vst [vmem:[%s313 + $0x50] sm:$0xff] %v1626
          %1659 = vst [vmem:[%s313 + $0x58] sm:$0xff] %v1627
          %1660 = vst [vmem:[%s313 + $0x60] sm:$0xff] %v1628
          %1661 = vst [vmem:[%s313 + $0x68] sm:$0xff] %v1629
          %1662 = vst [vmem:[%s313 + $0x70] sm:$0xff] %v1630
          %1663 = vst [vmem:[%s313 + $0x78] sm:$0xff] %v1631
          %1664 = vst [vmem:[%s313 + $0x80] sm:$0xff] %v1632
          %1665 = vst [vmem:[%s313 + $0x88] sm:$0xff] %v1633
          %1666 = vst [vmem:[%s313 + $0x90] sm:$0xff] %v1634
          %1667 = vst [vmem:[%s313 + $0x98] sm:$0xff] %v1635
          %1668 = vst [vmem:[%s313 + $0xa0] sm:$0xff] %v1636
          %1669 = vst [vmem:[%s313 + $0xa8] sm:$0xff] %v1637
          %1670 = vst [vmem:[%s313 + $0xb0] sm:$0xff] %v1638
          %1671 = vst [vmem:[%s313 + $0xb8] sm:$0xff] %v1639
          %1672 = vst [vmem:[%s313 + $0xc0] sm:$0xff] %v1640
          %1673 = vst [vmem:[%s313 + $0xc8] sm:$0xff] %v1641
          %1674 = vst [vmem:[%s313 + $0xd0] sm:$0xff] %v1642
          %1675 = vst [vmem:[%s313 + $0xd8] sm:$0xff] %v1643
          %1676 = vst [vmem:[%s313 + $0xe0] sm:$0xff] %v1644
          %1677 = vst [vmem:[%s313 + $0xe8] sm:$0xff] %v1645
          %1678 = vst [vmem:[%s313 + $0xf0] sm:$0xff] %v1646
          %1679 = vst [vmem:[%s313 + $0xf8] sm:$0xff] %v1647
        $region60: #{tpu_custom_call.1} parent=39 // pred_fallthru
          _
        %s1680 = sand.u32 %s168, 1
        %s1681 = scalar_lea.sflag [#allocation5], %s1680
        %s1682 = sand.u32 %s168, 1
        %s1683 = smul.addr %s1682, 256
        %s1684 = scalar_lea.vmem [#allocation9], %s1683
        // Predicated region
        $region61: #{tpu_custom_call.1} parent=39 // pred_check
          %p1685 = pneg %p178
        $region62: #{tpu_custom_call.1} parent=39 // pred_check_branch
          %1687 = sbr.rel (%p1685) target = $region64
        $region63: #{tpu_custom_call.1} parent=39 // pred_region
          %s1688 = smul.u32 32, %s27
          %s1690 = ssub.s32 4096, 4096
          %1691 = vsyncadd %s1681, %s1690
          %s1692 = smul.addr %s1688, 128
          %s1693 = scalar_lea.hbm %s5, %s1692
          %s1694 = sshll.u32 %s1684, 4
          %s1695 = int_to_ptr.vmem [resolvable:$true] %s1694
          %1700 = dma.vmem_to_hbm [thread:$0]  %s1695, 4096, %s1693, %s1681, 128, 128, 8
        $region64: #{tpu_custom_call.1} parent=39 // pred_fallthru
          _
      $region40: #{tpu_custom_call.1} parent=5 // pred_fallthru
        _
      %p1701 = scmp.le.s32.totalorder 2, %s18
      // Predicated region
      $region65: #{tpu_custom_call.1} parent=5 // pred_check
        %p1702 = pneg %p1701
      $region66: #{tpu_custom_call.1} parent=5 // pred_check_branch
        %1704 = sbr.rel (%p1702) target = $region68
      $region67: #{tpu_custom_call.1} parent=5 // pred_region
        %s1705 = ssub.s32 %s18, 2
        // Predicated region
        $region69: #{tpu_custom_call.1} parent=67 // pred_check
          %p1706 = pneg %p184
        $region70: #{tpu_custom_call.1} parent=67 // pred_check_branch
          %1708 = sbr.rel (%p1706) target = $region72
        $region71: #{tpu_custom_call.1} parent=67 // pred_region
          %s1709 = sand.u32 %s169, 1
          %s1710 = scalar_lea.sflag [#allocation5], %s1709
          %s1711 = sand.u32 %s169, 1
          %s1712 = smul.addr %s1711, 256
          %s1713 = scalar_lea.vmem [#allocation9], %s1712
          %1714 = dma.done %s1710, 4096
        $region72: #{tpu_custom_call.1} parent=67 // pred_fallthru
          _
      $region68: #{tpu_custom_call.1} parent=5 // pred_fallthru
        _
    $region6: #{tpu_custom_call.1} parent=1 // loop_footer
      %s22 = sadd.s32 1, %s18
    $region7: #{tpu_custom_call.1} parent=1 // loop_footer_branch
      %17 = sbr.rel target = $region3
    $region8: #{tpu_custom_call.1} parent=1 // loop_exit
      _
    %1715 = vsyncpa [#allocation4], 1
    %s1716 = scalar_lea.sflag [#allocation4], 1
    %1717 = vsyncpa %s1716, 1
    %1718 = vsyncpa [#allocation7], 1
    %1719 = vsyncpa [#allocation5], 1
    %s1720 = scalar_lea.sflag [#allocation5], 1
    %1721 = vsyncpa %s1720, 1

// kernel: tpu_custom_call.1
$region0: #{tpu_custom_call.1}
  #allocation0 [shape = 'u32[]', space=smem, size = 0x4, offset = 0x4, fixed_abs, tag = 'smem constant byte address 0x4 - core index']
  #allocation1 [shape = 'u32[144,128]{1,0:T(1,128)}', space=vmem, size = 0x12000, scoped, tag = 'internal scratch']
  #allocation2 [shape = 'f32[256,128]{1,0:T(8,128)}', space=vmem, size = 0x20000, scoped, tag = 'scratch operand']
  %s0 = inlined_call_operand.hbm [shape: f32[512,128], index: 0, kind: input, shape index: {}]
  %s1 = inlined_call_operand.hbm [shape: bf16[128,256], index: 1, kind: input, shape index: {}]
  %s2 = inlined_call_operand.vmem [shape: f32[1,256], index: 2, kind: input, shape index: {}]
  %s3 = inlined_call_operand.hbm [shape: bf16[256,128], index: 3, kind: input, shape index: {}]
  %s4 = inlined_call_operand.vmem [shape: f32[1,128], index: 4, kind: input, shape index: {}]
  %s5 = inlined_call_operand.hbm [shape: f32[512,128], index: 5, kind: output, shape index: {}]
  %s6 = sld [smem:[#allocation0]]
  $region73: #{tpu_custom_call.1} parent=0
    _
  %s8 = ssub.s32 1, %s6
  %s9 = scalar_select 0, %s8, %s6
  $region1: #{tpu_custom_call.1} parent=0
    #allocation3 [shape = 'u8[262144]{0}', space=vmem, size = 0x40000, scoped, tag = 'input window, operand 0']
    #allocation4 [shape = 's32[2]{0}', space=sflag, size = 0x8, scoped, tag = 'scoped memory for tpu_custom_call.1']
    #allocation5 [shape = 's32[2]{0}', space=sflag, size = 0x8, scoped, tag = 'scoped memory for tpu_custom_call.1']
    #allocation6 [shape = 'u8[65536]{0}', space=vmem, size = 0x10000, scoped, tag = 'input window, operand 1, single buffered']
    #allocation7 [shape = 's32[1]{0}', space=sflag, size = 0x4, scoped, tag = 'scoped memory for tpu_custom_call.1']
    #allocation8 [shape = 'u8[65536]{0}', space=vmem, size = 0x10000, scoped, tag = 'input window, operand 3, single buffered']
    #allocation9 [shape = 'u8[262144]{0}', space=vmem, size = 0x40000, scoped, tag = 'output window, operand 0']
    %10 = vsyncpa [#allocation4], 0
    %s11 = scalar_lea.sflag [#allocation4], 1
    %12 = vsyncpa %s11, 0
    %13 = vsyncpa [#allocation7], 0
    %14 = vsyncpa [#allocation5], 0
    %s15 = scalar_lea.sflag [#allocation5], 1
    %16 = vsyncpa %s15, 0
    loop: start=0, step=1, limit=4
    $region2: #{tpu_custom_call.1} parent=1 // loop_pre_header
      _
    $region3: #{tpu_custom_call.1} parent=1 // loop_header
      %s18 = sphi 0, %s22
      %p19 = scmp.ge.s32.totalorder %s18, 4
      %s25 = sphi 0, %s37
      %s26 = sphi 0, %s33
      %s27 = sphi 0, %s25
      %s28 = sphi 0, %s26
      %s29 = sphi 0, %s27
      %s30 = sphi 0, %s28
      %s40 = sphi 0, %s42
      %s43 = sphi 0, %s40
      %s44 = sphi 0, %s43
      %s60 = sphi 0, %s44
      %s66 = sphi 0, %s68
      %s69 = sphi 0, %s66
      %s70 = sphi 0, %s69
      %s86 = sphi 0, %s70
      %s92 = sphi 0, %s94
      %s95 = sphi 0, %s92
      %s96 = sphi 0, %s95
      %s112 = sphi 0, %s96
      %s118 = sphi 0, %s120
      %s121 = sphi 0, %s118
      %s122 = sphi 0, %s121
      %s138 = sphi 0, %s122
      %s142 = sphi 0, %s142
      %s144 = sphi 0, %s142
      %s145 = sphi 0, %s144
      %s159 = sphi 0, %s145
      %s165 = sphi 0, %s167
      %s168 = sphi 0, %s165
      %s169 = sphi 0, %s168
      %s185 = sphi 0, %s169
    $region4: #{tpu_custom_call.1} parent=1 // loop_header_branch
      %21 = sbr.rel (%p19) target = $region8
    $region5: #{tpu_custom_call.1} parent=1 // loop_body
      %s23 = ssub.s32 %s18, 1
      %s24 = ssub.s32 %s18, 2
      %s31 = sadd.s32 1, %s26
      %p32 = scmp.ge.s32.totalorder %s31, 1
      %s33 = scalar_select %p32, 0, %s31
      %s34 = sadd.s32 1, %s25
      %s35 = scalar_select %p32, %s34, %s25
      %p36 = scmp.ge.s32.totalorder %s35, 2
      %s37 = scalar_select %p36, 0, %s35
      %s38 = ssub.s32 %s25, %s37
      %p39 = scmp.eq.s32.totalorder %s38, 0
      %s41 = sadd.s32 %s40, 1
      %s42 = scalar_select %p39, %s40, %s41
      %p45 = pneg %p39
      %p46 = scmp.eq.s32.totalorder %s18, 1
      %p47 = por %p45, %p46
      %p48 = scmp.ne.s32.totalorder %s40, %s43
      %p49 = scmp.eq.s32.totalorder %s18, 0
      %p50 = por %p48, %p49
      %p51 = scmp.ne.s32.totalorder %s40, %s43
      %p52 = scmp.eq.s32.totalorder %s23, 1
      %p53 = por %p51, %p52
      %p54 = scmp.ne.s32.totalorder %s43, %s44
      %p55 = scmp.eq.s32.totalorder %s23, 0
      %p56 = por %p54, %p55
      %p57 = scmp.ne.s32.totalorder %s43, %s44
      %p58 = scmp.eq.s32.totalorder %s24, 1
      %p59 = por %p57, %p58
      %p61 = scmp.ne.s32.totalorder %s44, %s60
      %p62 = scmp.eq.s32.totalorder %s24, 0
      %p63 = por %p61, %p62
      %s64 = ssub.s32 %s26, %s33
      %p65 = scmp.eq.s32.totalorder %s64, 0
      %s67 = sadd.s32 %s66, 1
      %s68 = scalar_select %p65, %s66, %s67
      %p71 = pneg %p65
      %p72 = scmp.eq.s32.totalorder %s18, 1
      %p73 = por %p71, %p72
      %p74 = scmp.ne.s32.totalorder %s66, %s69
      %p75 = scmp.eq.s32.totalorder %s18, 0
      %p76 = por %p74, %p75
      %p77 = scmp.ne.s32.totalorder %s66, %s69
      %p78 = scmp.eq.s32.totalorder %s23, 1
      %p79 = por %p77, %p78
      %p80 = scmp.ne.s32.totalorder %s69, %s70
      %p81 = scmp.eq.s32.totalorder %s23, 0
      %p82 = por %p80, %p81
      %p83 = scmp.ne.s32.totalorder %s69, %s70
      %p84 = scmp.eq.s32.totalorder %s24, 1
      %p85 = por %p83, %p84
      %p87 = scmp.ne.s32.totalorder %s70, %s86
      %p88 = scmp.eq.s32.totalorder %s24, 0
      %p89 = por %p87, %p88
      %s90 = ssub.s32 %s26, %s33
      %p91 = scmp.eq.s32.totalorder %s90, 0
      %s93 = sadd.s32 %s92, 1
      %s94 = scalar_select %p91, %s92, %s93
      %p97 = pneg %p91
      %p98 = scmp.eq.s32.totalorder %s18, 1
      %p99 = por %p97, %p98
      %p100 = scmp.ne.s32.totalorder %s92, %s95
      %p101 = scmp.eq.s32.totalorder %s18, 0
      %p102 = por %p100, %p101
      %p103 = scmp.ne.s32.totalorder %s92, %s95
      %p104 = scmp.eq.s32.totalorder %s23, 1
      %p105 = por %p103, %p104
      %p106 = scmp.ne.s32.totalorder %s95, %s96
      %p107 = scmp.eq.s32.totalorder %s23, 0
      %p108 = por %p106, %p107
      %p109 = scmp.ne.s32.totalorder %s95, %s96
      %p110 = scmp.eq.s32.totalorder %s24, 1
      %p111 = por %p109, %p110
      %p113 = scmp.ne.s32.totalorder %s96, %s112
      %p114 = scmp.eq.s32.totalorder %s24, 0
      %p115 = por %p113, %p114
      %s116 = ssub.s32 %s26, %s33
      %p117 = scmp.eq.s32.totalorder %s116, 0
      %s119 = sadd.s32 %s118, 1
      %s120 = scalar_select %p117, %s118, %s119
      %p123 = pneg %p117
      %p124 = scmp.eq.s32.totalorder %s18, 1
      %p125 = por %p123, %p124
      %p126 = scmp.ne.s32.totalorder %s118, %s121
      %p127 = scmp.eq.s32.totalorder %s18, 0
      %p128 = por %p126, %p127
      %p129 = scmp.ne.s32.totalorder %s118, %s121
      %p130 = scmp.eq.s32.totalorder %s23, 1
      %p131 = por %p129, %p130
      %p132 = scmp.ne.s32.totalorder %s121, %s122
      %p133 = scmp.eq.s32.totalorder %s23, 0
      %p134 = por %p132, %p133
      %p135 = scmp.ne.s32.totalorder %s121, %s122
      %p136 = scmp.eq.s32.totalorder %s24, 1
      %p137 = por %p135, %p136
      %p139 = scmp.ne.s32.totalorder %s122, %s138
      %p140 = scmp.eq.s32.totalorder %s24, 0
      %p141 = por %p139, %p140
      %s143 = sadd.s32 %s142, 1
      %p146 = scmp.eq.s32.totalorder %s18, 1
      %p147 = scmp.ne.s32.totalorder %s142, %s144
      %p148 = scmp.eq.s32.totalorder %s18, 0
      %p149 = por %p147, %p148
      %p150 = scmp.ne.s32.totalorder %s142, %s144
      %p151 = scmp.eq.s32.totalorder %s23, 1
      %p152 = por %p150, %p151
      %p153 = scmp.ne.s32.totalorder %s144, %s145
      %p154 = scmp.eq.s32.totalorder %s23, 0
      %p155 = por %p153, %p154
      %p156 = scmp.ne.s32.totalorder %s144, %s145
      %p157 = scmp.eq.s32.totalorder %s24, 1
      %p158 = por %p156, %p157
      %p160 = scmp.ne.s32.totalorder %s145, %s159
      %p161 = scmp.eq.s32.totalorder %s24, 0
      %p162 = por %p160, %p161
      %s163 = ssub.s32 %s25, %s37
      %p164 = scmp.eq.s32.totalorder %s163, 0
      %s166 = sadd.s32 %s165, 1
      %s167 = scalar_select %p164, %s165, %s166
      %p170 = pneg %p164
      %p171 = scmp.eq.s32.totalorder %s18, 1
      %p172 = por %p170, %p171
      %p173 = scmp.ne.s32.totalorder %s165, %s168
      %p174 = scmp.eq.s32.totalorder %s18, 0
      %p175 = por %p173, %p174
      %p176 = scmp.ne.s32.totalorder %s165, %s168
      %p177 = scmp.eq.s32.totalorder %s23, 1
      %p178 = por %p176, %p177
      %p179 = scmp.ne.s32.totalorder %s168, %s169
      %p180 = scmp.eq.s32.totalorder %s23, 0
      %p181 = por %p179, %p180
      %p182 = scmp.ne.s32.totalorder %s168, %s169
      %p183 = scmp.eq.s32.totalorder %s24, 1
      %p184 = por %p182, %p183
      %p186 = scmp.ne.s32.totalorder %s169, %s185
      %p187 = scmp.eq.s32.totalorder %s24, 0
      %p188 = por %p186, %p187
      %p189 = scmp.le.s32.totalorder 1, %s18
      %p190 = scmp.lt.s32.totalorder %s18, 3
      %p191 = pnand %p189, %p190
      %p192 = pneg %p191
      // Predicated region
      $region9: #{tpu_custom_call.1} parent=5 // pred_check
        _
      $region10: #{tpu_custom_call.1} parent=5 // pred_check_branch
        %194 = sbr.rel (%p191) target = $region12
      $region11: #{tpu_custom_call.1} parent=5 // pred_region
        %s195 = ssub.s32 %s18, 1
        // Predicated region
        $region13: #{tpu_custom_call.1} parent=11 // pred_check
          %p196 = pneg %p82
        $region14: #{tpu_custom_call.1} parent=11 // pred_check_branch
          %198 = sbr.rel (%p196) target = $region16
        $region15: #{tpu_custom_call.1} parent=11 // pred_region
          %s199 = smul.u32 2, %s28
          %s201 = ssub.s32 2048, 2048
          %202 = vsyncadd [#allocation7], %s201
          %s203 = smul.addr %s199, 64
          %s204 = scalar_lea.hbm %s1, %s203
          %s205 = sshll.u32 [#allocation6], 4
          %s206 = int_to_ptr.vmem [resolvable:$true] %s205
          %211 = dma.hbm_to_vmem [thread:$0]  %s204, 2048, %s206, [#allocation7], 128, 128, 8
        $region16: #{tpu_custom_call.1} parent=11 // pred_fallthru
          _
        // Predicated region
        $region17: #{tpu_custom_call.1} parent=11 // pred_check
          %p212 = pneg %p108
        $region18: #{tpu_custom_call.1} parent=11 // pred_check_branch
          %214 = sbr.rel (%p212) target = $region20
        $region19: #{tpu_custom_call.1} parent=11 // pred_region
          %s215 = smul.u32 2, %s28
          %p216 = scmp.lt.s32.totalorder %s215, 1
          %s217 = scalar_select %p216, %s215, 1
          %s218 = scalar_lea.vmem %s2, %s217
          %s219 = smul.u32 2, %s28
        $region20: #{tpu_custom_call.1} parent=11 // pred_fallthru
          _
        // Predicated region
        $region21: #{tpu_custom_call.1} parent=11 // pred_check
          %p220 = pneg %p134
        $region22: #{tpu_custom_call.1} parent=11 // pred_check_branch
          %222 = sbr.rel (%p220) target = $region24
        $region23: #{tpu_custom_call.1} parent=11 // pred_region
          %s223 = smul.u32 32, %s28
          %s225 = ssub.s32 2048, 2048
          %226 = vsyncadd [#allocation7], %s225
          %s227 = smul.addr %s223, 64
          %s228 = scalar_lea.hbm %s3, %s227
          %s229 = sshll.u32 [#allocation8], 4
          %s230 = int_to_ptr.vmem [resolvable:$true] %s229
          %235 = dma.hbm_to_vmem [thread:$0]  %s228, 2048, %s230, [#allocation7], 64, 64, 4
        $region24: #{tpu_custom_call.1} parent=11 // pred_fallthru
          _
        // Predicated region
        $region25: #{tpu_custom_call.1} parent=11 // pred_check
          %p236 = pneg %p155
        $region26: #{tpu_custom_call.1} parent=11 // pred_check_branch
          %238 = sbr.rel (%p236) target = $region28
        $region27: #{tpu_custom_call.1} parent=11 // pred_region
          _
        $region28: #{tpu_custom_call.1} parent=11 // pred_fallthru
          _
      $region12: #{tpu_custom_call.1} parent=5 // pred_fallthru
        _
      %p239 = scmp.lt.s32.totalorder %s18, 2
      // Predicated region
      $region29: #{tpu_custom_call.1} parent=5 // pred_check
        %p240 = pneg %p239
      $region30: #{tpu_custom_call.1} parent=5 // pred_check_branch
        %242 = sbr.rel (%p240) target = $region32
      $region31: #{tpu_custom_call.1} parent=5 // pred_region
        // Predicated region
        $region33: #{tpu_custom_call.1} parent=31 // pred_check
          %p243 = pneg %p50
        $region34: #{tpu_custom_call.1} parent=31 // pred_check_branch
          %245 = sbr.rel (%p243) target = $region36
        $region35: #{tpu_custom_call.1} parent=31 // pred_region
          %s246 = sand.u32 %s40, 1
          %s247 = scalar_lea.sflag [#allocation4], %s246
          %s248 = sand.u32 %s40, 1
          %s249 = smul.addr %s248, 256
          %s250 = scalar_lea.vmem [#allocation3], %s249
          %s251 = smul.u32 32, %s25
          %s253 = ssub.s32 4096, 4096
          %254 = vsyncadd %s247, %s253
          %s255 = smul.addr %s251, 128
          %s256 = scalar_lea.hbm %s0, %s255
          %s257 = sshll.u32 %s250, 4
          %s258 = int_to_ptr.vmem [resolvable:$true] %s257
          %263 = dma.hbm_to_vmem [thread:$0]  %s256, 4096, %s258, %s247, 128, 128, 8
        $region36: #{tpu_custom_call.1} parent=31 // pred_fallthru
          _
      $region32: #{tpu_custom_call.1} parent=5 // pred_fallthru
        _
      %p264 = scmp.le.s32.totalorder 1, %s18
      %p265 = scmp.lt.s32.totalorder %s18, 3
      %p266 = pnand %p264, %p265
      %p267 = pneg %p266
      // Predicated region
      $region37: #{tpu_custom_call.1} parent=5 // pred_check
        _
      $region38: #{tpu_custom_call.1} parent=5 // pred_check_branch
        %269 = sbr.rel (%p266) target = $region40
      $region39: #{tpu_custom_call.1} parent=5 // pred_region
        %s270 = ssub.s32 %s18, 1
        %s271 = sand.u32 %s43, 1
        %s272 = scalar_lea.sflag [#allocation4], %s271
        %s273 = sand.u32 %s43, 1
        %s274 = smul.addr %s273, 256
        %s275 = scalar_lea.vmem [#allocation3], %s274
        // Predicated region
        $region41: #{tpu_custom_call.1} parent=39 // pred_check
          %p276 = pneg %p56
        $region42: #{tpu_custom_call.1} parent=39 // pred_check_branch
          %278 = sbr.rel (%p276) target = $region44
        $region43: #{tpu_custom_call.1} parent=39 // pred_region
          %279 = dma.done %s272, 4096
        $region44: #{tpu_custom_call.1} parent=39 // pred_fallthru
          _
        // Predicated region
        $region45: #{tpu_custom_call.1} parent=39 // pred_check
          %p280 = pneg %p82
        $region46: #{tpu_custom_call.1} parent=39 // pred_check_branch
          %282 = sbr.rel (%p280) target = $region48
        $region47: #{tpu_custom_call.1} parent=39 // pred_region
          %283 = dma.done [#allocation7], 2048
        $region48: #{tpu_custom_call.1} parent=39 // pred_fallthru
          _
        // Predicated region
        $region49: #{tpu_custom_call.1} parent=39 // pred_check
          %p284 = pneg %p134
        $region50: #{tpu_custom_call.1} parent=39 // pred_check_branch
          %286 = sbr.rel (%p284) target = $region52
        $region51: #{tpu_custom_call.1} parent=39 // pred_region
          %287 = dma.done [#allocation7], 2048
        $region52: #{tpu_custom_call.1} parent=39 // pred_fallthru
          _
        %s288 = sand.u32 %s43, 1
        %s289 = scalar_lea.sflag [#allocation4], %s288
        %s290 = sand.u32 %s43, 1
        %s291 = smul.addr %s290, 256
        %s292 = scalar_lea.vmem [#allocation3], %s291
        %p293 = pneg %p56
        %p294 = pneg %p53
        %p295 = pneg %p82
        %p296 = pneg %p79
        %s297 = smul.u32 2, %s28
        %p298 = scmp.lt.s32.totalorder %s297, 1
        %s299 = scalar_select %p298, %s297, 1
        %s300 = scalar_lea.vmem %s2, %s299
        %p301 = pneg %p108
        %p302 = pneg %p105
        %p303 = pneg %p134
        %p304 = pneg %p131
        %p305 = pneg %p155
        %p306 = pneg %p152
        %p307 = pneg %p181
        %p308 = pneg %p178
        %s309 = sand.u32 %s168, 1
        %s310 = scalar_lea.sflag [#allocation5], %s309
        %s311 = sand.u32 %s168, 1
        %s312 = smul.addr %s311, 256
        %s313 = scalar_lea.vmem [#allocation9], %s312
        %s314 = smul.u32 32, %s27
        %s315 = smul.u32 2, %s28
        %s316 = smul.u32 2, %s28
        %p317 = scmp.lt.s32.totalorder %s316, 1
        %s318 = scalar_select %p317, %s316, 1
        %s319 = scalar_lea.vmem %s2, %s318
        %s320 = smul.u32 2, %s28
        %s321 = smul.u32 32, %s28
        %s322 = smul.u32 32, %s27
        %p324 = scmp.eq.s32.totalorder %s28, 0
        // Predicated region
        $region53: #{tpu_custom_call.1} parent=39 // pred_check
          %p325 = pneg %p324
        $region54: #{tpu_custom_call.1} parent=39 // pred_check_branch
          %327 = sbr.rel (%p325) target = $region56
        $region55: #{tpu_custom_call.1} parent=39 // pred_region
          %328 = vst [vmem:[#allocation2] sm:$0xff] 0.0
          %329 = vst [vmem:[#allocation2 + $0x8] sm:$0xff] 0.0
          %330 = vst [vmem:[#allocation2 + $0x10] sm:$0xff] 0.0
          %331 = vst [vmem:[#allocation2 + $0x18] sm:$0xff] 0.0
          %332 = vst [vmem:[#allocation2 + $0x20] sm:$0xff] 0.0
          %333 = vst [vmem:[#allocation2 + $0x28] sm:$0xff] 0.0
          %334 = vst [vmem:[#allocation2 + $0x30] sm:$0xff] 0.0
          %335 = vst [vmem:[#allocation2 + $0x38] sm:$0xff] 0.0
          %336 = vst [vmem:[#allocation2 + $0x40] sm:$0xff] 0.0
          %337 = vst [vmem:[#allocation2 + $0x48] sm:$0xff] 0.0
          %338 = vst [vmem:[#allocation2 + $0x50] sm:$0xff] 0.0
          %339 = vst [vmem:[#allocation2 + $0x58] sm:$0xff] 0.0
          %340 = vst [vmem:[#allocation2 + $0x60] sm:$0xff] 0.0
          %341 = vst [vmem:[#allocation2 + $0x68] sm:$0xff] 0.0
          %342 = vst [vmem:[#allocation2 + $0x70] sm:$0xff] 0.0
          %343 = vst [vmem:[#allocation2 + $0x78] sm:$0xff] 0.0
          %344 = vst [vmem:[#allocation2 + $0x80] sm:$0xff] 0.0
          %345 = vst [vmem:[#allocation2 + $0x88] sm:$0xff] 0.0
          %346 = vst [vmem:[#allocation2 + $0x90] sm:$0xff] 0.0
          %347 = vst [vmem:[#allocation2 + $0x98] sm:$0xff] 0.0
          %348 = vst [vmem:[#allocation2 + $0xa0] sm:$0xff] 0.0
          %349 = vst [vmem:[#allocation2 + $0xa8] sm:$0xff] 0.0
          %350 = vst [vmem:[#allocation2 + $0xb0] sm:$0xff] 0.0
          %351 = vst [vmem:[#allocation2 + $0xb8] sm:$0xff] 0.0
          %352 = vst [vmem:[#allocation2 + $0xc0] sm:$0xff] 0.0
          %353 = vst [vmem:[#allocation2 + $0xc8] sm:$0xff] 0.0
          %354 = vst [vmem:[#allocation2 + $0xd0] sm:$0xff] 0.0
          %355 = vst [vmem:[#allocation2 + $0xd8] sm:$0xff] 0.0
          %356 = vst [vmem:[#allocation2 + $0xe0] sm:$0xff] 0.0
          %357 = vst [vmem:[#allocation2 + $0xe8] sm:$0xff] 0.0
          %358 = vst [vmem:[#allocation2 + $0xf0] sm:$0xff] 0.0
          %359 = vst [vmem:[#allocation2 + $0xf8] sm:$0xff] 0.0
        $region56: #{tpu_custom_call.1} parent=39 // pred_fallthru
          _
        %v360 = vld [vmem:[%s275] sm:$0xff]
        %v361 = vld [vmem:[%s275 + $0x8] sm:$0xff]
        %v362 = vld [vmem:[%s275 + $0x10] sm:$0xff]
        %v363 = vld [vmem:[%s275 + $0x18] sm:$0xff]
        %v364 = vld [vmem:[%s275 + $0x20] sm:$0xff]
        %v365 = vld [vmem:[%s275 + $0x28] sm:$0xff]
        %v366 = vld [vmem:[%s275 + $0x30] sm:$0xff]
        %v367 = vld [vmem:[%s275 + $0x38] sm:$0xff]
        %v368 = vld [vmem:[%s275 + $0x40] sm:$0xff]
        %v369 = vld [vmem:[%s275 + $0x48] sm:$0xff]
        %v370 = vld [vmem:[%s275 + $0x50] sm:$0xff]
        %v371 = vld [vmem:[%s275 + $0x58] sm:$0xff]
        %v372 = vld [vmem:[%s275 + $0x60] sm:$0xff]
        %v373 = vld [vmem:[%s275 + $0x68] sm:$0xff]
        %v374 = vld [vmem:[%s275 + $0x70] sm:$0xff]
        %v375 = vld [vmem:[%s275 + $0x78] sm:$0xff]
        %v376 = vld [vmem:[%s275 + $0x80] sm:$0xff]
        %v377 = vld [vmem:[%s275 + $0x88] sm:$0xff]
        %v378 = vld [vmem:[%s275 + $0x90] sm:$0xff]
        %v379 = vld [vmem:[%s275 + $0x98] sm:$0xff]
        %v380 = vld [vmem:[%s275 + $0xa0] sm:$0xff]
        %v381 = vld [vmem:[%s275 + $0xa8] sm:$0xff]
        %v382 = vld [vmem:[%s275 + $0xb0] sm:$0xff]
        %v383 = vld [vmem:[%s275 + $0xb8] sm:$0xff]
        %v384 = vld [vmem:[%s275 + $0xc0] sm:$0xff]
        %v385 = vld [vmem:[%s275 + $0xc8] sm:$0xff]
        %v386 = vld [vmem:[%s275 + $0xd0] sm:$0xff]
        %v387 = vld [vmem:[%s275 + $0xd8] sm:$0xff]
        %v388 = vld [vmem:[%s275 + $0xe0] sm:$0xff]
        %v389 = vld [vmem:[%s275 + $0xe8] sm:$0xff]
        %v390 = vld [vmem:[%s275 + $0xf0] sm:$0xff]
        %v391 = vld [vmem:[%s275 + $0xf8] sm:$0xff]
        %v392 = vpack.c.bf16 %v361, %v360
        %v393 = vpack.c.bf16 %v363, %v362
        %v394 = vpack.c.bf16 %v365, %v364
        %v395 = vpack.c.bf16 %v367, %v366
        %v396 = vpack.c.bf16 %v369, %v368
        %v397 = vpack.c.bf16 %v371, %v370
        %v398 = vpack.c.bf16 %v373, %v372
        %v399 = vpack.c.bf16 %v375, %v374
        %v400 = vpack.c.bf16 %v377, %v376
        %v401 = vpack.c.bf16 %v379, %v378
        %v402 = vpack.c.bf16 %v381, %v380
        %v403 = vpack.c.bf16 %v383, %v382
        %v404 = vpack.c.bf16 %v385, %v384
        %v405 = vpack.c.bf16 %v387, %v386
        %v406 = vpack.c.bf16 %v389, %v388
        %v407 = vpack.c.bf16 %v391, %v390
        %v408 = vld [vmem:[#allocation6] sm:$0xff]
        %v409 = vld [vmem:[#allocation6 + $0x8] sm:$0xff]
        %v410 = vld [vmem:[#allocation6 + $0x10] sm:$0xff]
        %v411 = vld [vmem:[#allocation6 + $0x18] sm:$0xff]
        %v412 = vld [vmem:[#allocation6 + $0x20] sm:$0xff]
        %v413 = vld [vmem:[#allocation6 + $0x28] sm:$0xff]
        %v414 = vld [vmem:[#allocation6 + $0x30] sm:$0xff]
        %v415 = vld [vmem:[#allocation6 + $0x38] sm:$0xff]
        %v416 = vld [vmem:[#allocation6 + $0x40] sm:$0xff]
        %v417 = vld [vmem:[#allocation6 + $0x48] sm:$0xff]
        %v418 = vld [vmem:[#allocation6 + $0x50] sm:$0xff]
        %v419 = vld [vmem:[#allocation6 + $0x58] sm:$0xff]
        %v420 = vld [vmem:[#allocation6 + $0x60] sm:$0xff]
        %v421 = vld [vmem:[#allocation6 + $0x68] sm:$0xff]
        %v422 = vld [vmem:[#allocation6 + $0x70] sm:$0xff]
        %v423 = vld [vmem:[#allocation6 + $0x78] sm:$0xff]
        %v424 = vld [vmem:[%s319] sm:$0x3]
        %v426 = vlaneseq
        %v427 = vshrl.u32 %v426, 7
        %v428 = vsub.s32 0, %v427
        %v429 = vrot.slane %v424, %v428
        %v430 = vlaneseq
        %v431 = vshrl.u32 %v430, 7
        %v432 = vsub.s32 1, %v431
        %v433 = vrot.slane %v424, %v432
        %v452 = vunpack.c.l.b16 %v408
        %v453 = vunpack.c.h.b16 %v408
        %v454 = vunpack.c.l.b16 %v409
        %v455 = vunpack.c.h.b16 %v409
        %v456 = vunpack.c.l.b16 %v410
        %v457 = vunpack.c.h.b16 %v410
        %v458 = vunpack.c.l.b16 %v411
        %v459 = vunpack.c.h.b16 %v411
        %v460 = vunpack.c.l.b16 %v412
        %v461 = vunpack.c.h.b16 %v412
        %v462 = vunpack.c.l.b16 %v413
        %v463 = vunpack.c.h.b16 %v413
        %v464 = vunpack.c.l.b16 %v414
        %v465 = vunpack.c.h.b16 %v414
        %v466 = vunpack.c.l.b16 %v415
        %v467 = vunpack.c.h.b16 %v415
        %v468 = vunpack.c.l.b16 %v416
        %v469 = vunpack.c.h.b16 %v416
        %v470 = vunpack.c.l.b16 %v417
        %v471 = vunpack.c.h.b16 %v417
        %v472 = vunpack.c.l.b16 %v418
        %v473 = vunpack.c.h.b16 %v418
        %v474 = vunpack.c.l.b16 %v419
        %v475 = vunpack.c.h.b16 %v419
        %v476 = vunpack.c.l.b16 %v420
        %v477 = vunpack.c.h.b16 %v420
        %v478 = vunpack.c.l.b16 %v421
        %v479 = vunpack.c.h.b16 %v421
        %v480 = vunpack.c.l.b16 %v422
        %v481 = vunpack.c.h.b16 %v422
        %v482 = vunpack.c.l.b16 %v423
        %v483 = vunpack.c.h.b16 %v423
        %v484 = vpack.c.b16 %v454, %v452
        %v485 = vpack.c.b16 %v455, %v453
        %v486 = vpack.c.b16 %v458, %v456
        %v487 = vpack.c.b16 %v459, %v457
        %v488 = vpack.c.b16 %v462, %v460
        %v489 = vpack.c.b16 %v463, %v461
        %v490 = vpack.c.b16 %v466, %v464
        %v491 = vpack.c.b16 %v467, %v465
        %v492 = vpack.c.b16 %v470, %v468
        %v493 = vpack.c.b16 %v471, %v469
        %v494 = vpack.c.b16 %v474, %v472
        %v495 = vpack.c.b16 %v475, %v473
        %v496 = vpack.c.b16 %v478, %v476
        %v497 = vpack.c.b16 %v479, %v477
        %v498 = vpack.c.b16 %v482, %v480
        %v499 = vpack.c.b16 %v483, %v481
        %516 = vmatprep.subr.bf16.mxu0 %v485
        %517 = vmatpush1.bf16.msra.mxu0 %v484
        %518 = vmatprep.subr.bf16.mxu0 %v487
        %519 = vmatpush1.bf16.msra.mxu0 %v486
        %520 = vmatprep.subr.bf16.mxu0 %v489
        %521 = vmatpush1.bf16.msra.mxu0 %v488
        %522 = vmatprep.subr.bf16.mxu0 %v491
        %523 = vmatpush1.bf16.msra.mxu0 %v490
        %524 = vmatprep.subr.bf16.mxu0 %v493
        %525 = vmatpush1.bf16.msra.mxu0 %v492
        %526 = vmatprep.subr.bf16.mxu0 %v495
        %527 = vmatpush1.bf16.msra.mxu0 %v494
        %528 = vmatprep.subr.bf16.mxu0 %v497
        %529 = vmatpush1.bf16.msra.mxu0 %v496
        %530 = vmatprep.subr.bf16.mxu0 %v499
        %531 = vmatpush1.bf16.msra.mxu0 %v498
        %532 = vmatprep.subr.bf16.mxu0 0
        %533 = vmatpush1.bf16.msra.mxu0 0
        %534 = vmatprep.subr.bf16.mxu0 0
        %535 = vmatpush1.bf16.msra.mxu0 0
        %536 = vmatprep.subr.bf16.mxu0 0
        %537 = vmatpush1.bf16.msra.mxu0 0
        %538 = vmatprep.subr.bf16.mxu0 0
        %539 = vmatpush1.bf16.msra.mxu0 0
        %540 = vmatprep.subr.bf16.mxu0 0
        %541 = vmatpush1.bf16.msra.mxu0 0
        %542 = vmatprep.subr.bf16.mxu0 0
        %543 = vmatpush1.bf16.msra.mxu0 0
        %544 = vmatprep.subr.bf16.mxu0 0
        %545 = vmatpush1.bf16.msra.mxu0 0
        %546 = vmatprep.subr.bf16.mxu0 0
        %547 = vmatpush1.bf16.msra.mxu0 0
        %548 = vmatprep.mubr.bf16.mxu0 0
        %549 = vmatmul.mubr.bf16.gmra.mrb[0].mxu0 %v392
        %v550 = vpop.f32.mrb[0].mxu0
        %v551 = vadd.f32 %v429, %v550
        %v552 = vpop.f32.mrb[0].mxu0
        %v553 = vadd.f32 %v433, %v552
        %v554 = vpop.f32.mrb[0].mxu0
        %v555 = vadd.f32 %v429, %v554
        %v556 = vpop.f32.mrb[0].mxu0
        %v557 = vadd.f32 %v433, %v556
        %558 = vmatprep.mubr.bf16.mxu0 0
        %559 = vmatmul.mubr.bf16.gmra.mrb[0].mxu0 %v393
        %v560 = vpop.f32.mrb[0].mxu0
        %v561 = vadd.f32 %v429, %v560
        %v562 = vpop.f32.mrb[0].mxu0
        %v563 = vadd.f32 %v433, %v562
        %v564 = vpop.f32.mrb[0].mxu0
        %v565 = vadd.f32 %v429, %v564
        %v566 = vpop.f32.mrb[0].mxu0
        %v567 = vadd.f32 %v433, %v566
        %568 = vmatprep.mubr.bf16.mxu0 0
        %569 = vmatmul.mubr.bf16.gmra.mrb[0].mxu0 %v394
        %v570 = vpop.f32.mrb[0].mxu0
        %v571 = vadd.f32 %v429, %v570
        %v572 = vpop.f32.mrb[0].mxu0
        %v573 = vadd.f32 %v433, %v572
        %v574 = vpop.f32.mrb[0].mxu0
        %v575 = vadd.f32 %v429, %v574
        %v576 = vpop.f32.mrb[0].mxu0
        %v577 = vadd.f32 %v433, %v576
        %578 = vmatprep.mubr.bf16.mxu0 0
        %579 = vmatmul.mubr.bf16.gmra.mrb[0].mxu0 %v395
        %v580 = vpop.f32.mrb[0].mxu0
        %v581 = vadd.f32 %v429, %v580
        %v582 = vpop.f32.mrb[0].mxu0
        %v583 = vadd.f32 %v433, %v582
        %v584 = vpop.f32.mrb[0].mxu0
        %v585 = vadd.f32 %v429, %v584
        %v586 = vpop.f32.mrb[0].mxu0
        %v587 = vadd.f32 %v433, %v586
        %588 = vmatprep.mubr.bf16.mxu0 0
        %589 = vmatmul.mubr.bf16.gmra.mrb[0].mxu0 %v396
        %v590 = vpop.f32.mrb[0].mxu0
        %v591 = vadd.f32 %v429, %v590
        %v592 = vpop.f32.mrb[0].mxu0
        %v593 = vadd.f32 %v433, %v592
        %v594 = vpop.f32.mrb[0].mxu0
        %v595 = vadd.f32 %v429, %v594
        %v596 = vpop.f32.mrb[0].mxu0
        %v597 = vadd.f32 %v433, %v596
        %598 = vmatprep.mubr.bf16.mxu0 0
        %599 = vmatmul.mubr.bf16.gmra.mrb[0].mxu0 %v397
        %v600 = vpop.f32.mrb[0].mxu0
        %v601 = vadd.f32 %v429, %v600
        %v602 = vpop.f32.mrb[0].mxu0
        %v603 = vadd.f32 %v433, %v602
        %v604 = vpop.f32.mrb[0].mxu0
        %v605 = vadd.f32 %v429, %v604
        %v606 = vpop.f32.mrb[0].mxu0
        %v607 = vadd.f32 %v433, %v606
        %608 = vmatprep.mubr.bf16.mxu0 0
        %609 = vmatmul.mubr.bf16.gmra.mrb[0].mxu0 %v398
        %v610 = vpop.f32.mrb[0].mxu0
        %v611 = vadd.f32 %v429, %v610
        %v612 = vpop.f32.mrb[0].mxu0
        %v613 = vadd.f32 %v433, %v612
        %v614 = vpop.f32.mrb[0].mxu0
        %v615 = vadd.f32 %v429, %v614
        %v616 = vpop.f32.mrb[0].mxu0
        %v617 = vadd.f32 %v433, %v616
        %618 = vmatprep.mubr.bf16.mxu0 0
        %619 = vmatmul.mubr.bf16.gmra.mrb[0].mxu0 %v399
        %v620 = vpop.f32.mrb[0].mxu0
        %v621 = vadd.f32 %v429, %v620
        %v622 = vpop.f32.mrb[0].mxu0
        %v623 = vadd.f32 %v433, %v622
        %v624 = vpop.f32.mrb[0].mxu0
        %v625 = vadd.f32 %v429, %v624
        %v626 = vpop.f32.mrb[0].mxu0
        %v627 = vadd.f32 %v433, %v626
        %628 = vmatprep.mubr.bf16.mxu0 0
        %629 = vmatmul.mubr.bf16.gmra.mrb[0].mxu0 %v400
        %v630 = vpop.f32.mrb[0].mxu0
        %v631 = vadd.f32 %v429, %v630
        %v632 = vpop.f32.mrb[0].mxu0
        %v633 = vadd.f32 %v433, %v632
        %v634 = vpop.f32.mrb[0].mxu0
        %v635 = vadd.f32 %v429, %v634
        %v636 = vpop.f32.mrb[0].mxu0
        %v637 = vadd.f32 %v433, %v636
        %638 = vmatprep.mubr.bf16.mxu0 0
        %639 = vmatmul.mubr.bf16.gmra.mrb[0].mxu0 %v401
        %v640 = vpop.f32.mrb[0].mxu0
        %v641 = vadd.f32 %v429, %v640
        %v642 = vpop.f32.mrb[0].mxu0
        %v643 = vadd.f32 %v433, %v642
        %v644 = vpop.f32.mrb[0].mxu0
        %v645 = vadd.f32 %v429, %v644
        %v646 = vpop.f32.mrb[0].mxu0
        %v647 = vadd.f32 %v433, %v646
        %648 = vmatprep.mubr.bf16.mxu0 0
        %649 = vmatmul.mubr.bf16.gmra.mrb[0].mxu0 %v402
        %v650 = vpop.f32.mrb[0].mxu0
        %v651 = vadd.f32 %v429, %v650
        %v652 = vpop.f32.mrb[0].mxu0
        %v653 = vadd.f32 %v433, %v652
        %v654 = vpop.f32.mrb[0].mxu0
        %v655 = vadd.f32 %v429, %v654
        %v656 = vpop.f32.mrb[0].mxu0
        %v657 = vadd.f32 %v433, %v656
        %658 = vmatprep.mubr.bf16.mxu0 0
        %659 = vmatmul.mubr.bf16.gmra.mrb[0].mxu0 %v403
        %v660 = vpop.f32.mrb[0].mxu0
        %v661 = vadd.f32 %v429, %v660
        %v662 = vpop.f32.mrb[0].mxu0
        %v663 = vadd.f32 %v433, %v662
        %v664 = vpop.f32.mrb[0].mxu0
        %v665 = vadd.f32 %v429, %v664
        %v666 = vpop.f32.mrb[0].mxu0
        %v667 = vadd.f32 %v433, %v666
        %668 = vmatprep.mubr.bf16.mxu0 0
        %669 = vmatmul.mubr.bf16.gmra.mrb[0].mxu0 %v404
        %v670 = vpop.f32.mrb[0].mxu0
        %v671 = vadd.f32 %v429, %v670
        %v672 = vpop.f32.mrb[0].mxu0
        %v673 = vadd.f32 %v433, %v672
        %v674 = vpop.f32.mrb[0].mxu0
        %v675 = vadd.f32 %v429, %v674
        %v676 = vpop.f32.mrb[0].mxu0
        %v677 = vadd.f32 %v433, %v676
        %678 = vmatprep.mubr.bf16.mxu0 0
        %679 = vmatmul.mubr.bf16.gmra.mrb[0].mxu0 %v405
        %v680 = vpop.f32.mrb[0].mxu0
        %v681 = vadd.f32 %v429, %v680
        %v682 = vpop.f32.mrb[0].mxu0
        %v683 = vadd.f32 %v433, %v682
        %v684 = vpop.f32.mrb[0].mxu0
        %v685 = vadd.f32 %v429, %v684
        %v686 = vpop.f32.mrb[0].mxu0
        %v687 = vadd.f32 %v433, %v686
        %688 = vmatprep.mubr.bf16.mxu0 0
        %689 = vmatmul.mubr.bf16.gmra.mrb[0].mxu0 %v406
        %v690 = vpop.f32.mrb[0].mxu0
        %v691 = vadd.f32 %v429, %v690
        %v692 = vpop.f32.mrb[0].mxu0
        %v693 = vadd.f32 %v433, %v692
        %v694 = vpop.f32.mrb[0].mxu0
        %v695 = vadd.f32 %v429, %v694
        %v696 = vpop.f32.mrb[0].mxu0
        %v697 = vadd.f32 %v433, %v696
        %698 = vmatprep.mubr.bf16.mxu0 0
        %699 = vmatmul.mubr.bf16.gmra.mrb[0].mxu0 %v407
        %v700 = vpop.f32.mrb[0].mxu0
        %v701 = vadd.f32 %v429, %v700
        %v702 = vpop.f32.mrb[0].mxu0
        %v703 = vadd.f32 %v433, %v702
        %v704 = vpop.f32.mrb[0].mxu0
        %v705 = vadd.f32 %v429, %v704
        %v706 = vpop.f32.mrb[0].mxu0
        %v707 = vadd.f32 %v433, %v706
        %708 = vdwg.mxu0
        %v709 = vmul.f32 %v551, 0.5
        %v710 = vmul.f32 %v553, 0.5
        %v711 = vmul.f32 %v555, 0.5
        %v712 = vmul.f32 %v557, 0.5
        %v713 = vmul.f32 %v561, 0.5
        %v714 = vmul.f32 %v563, 0.5
        %v715 = vmul.f32 %v565, 0.5
        %v716 = vmul.f32 %v567, 0.5
        %v717 = vmul.f32 %v571, 0.5
        %v718 = vmul.f32 %v573, 0.5
        %v719 = vmul.f32 %v575, 0.5
        %v720 = vmul.f32 %v577, 0.5
        %v721 = vmul.f32 %v581, 0.5
        %v722 = vmul.f32 %v583, 0.5
        %v723 = vmul.f32 %v585, 0.5
        %v724 = vmul.f32 %v587, 0.5
        %v725 = vmul.f32 %v591, 0.5
        %v726 = vmul.f32 %v593, 0.5
        %v727 = vmul.f32 %v595, 0.5
        %v728 = vmul.f32 %v597, 0.5
        %v729 = vmul.f32 %v601, 0.5
        %v730 = vmul.f32 %v603, 0.5
        %v731 = vmul.f32 %v605, 0.5
        %v732 = vmul.f32 %v607, 0.5
        %v733 = vmul.f32 %v611, 0.5
        %v734 = vmul.f32 %v613, 0.5
        %v735 = vmul.f32 %v615, 0.5
        %v736 = vmul.f32 %v617, 0.5
        %v737 = vmul.f32 %v621, 0.5
        %v738 = vmul.f32 %v623, 0.5
        %v739 = vmul.f32 %v625, 0.5
        %v740 = vmul.f32 %v627, 0.5
        %v741 = vmul.f32 %v631, 0.5
        %v742 = vmul.f32 %v633, 0.5
        %v743 = vmul.f32 %v635, 0.5
        %v744 = vmul.f32 %v637, 0.5
        %v745 = vmul.f32 %v641, 0.5
        %v746 = vmul.f32 %v643, 0.5
        %v747 = vmul.f32 %v645, 0.5
        %v748 = vmul.f32 %v647, 0.5
        %v749 = vmul.f32 %v651, 0.5
        %v750 = vmul.f32 %v653, 0.5
        %v751 = vmul.f32 %v655, 0.5
        %v752 = vmul.f32 %v657, 0.5
        %v753 = vmul.f32 %v661, 0.5
        %v754 = vmul.f32 %v663, 0.5
        %v755 = vmul.f32 %v665, 0.5
        %v756 = vmul.f32 %v667, 0.5
        %v757 = vmul.f32 %v671, 0.5
        %v758 = vmul.f32 %v673, 0.5
        %v759 = vmul.f32 %v675, 0.5
        %v760 = vmul.f32 %v677, 0.5
        %v761 = vmul.f32 %v681, 0.5
        %v762 = vmul.f32 %v683, 0.5
        %v763 = vmul.f32 %v685, 0.5
        %v764 = vmul.f32 %v687, 0.5
        %v765 = vmul.f32 %v691, 0.5
        %v766 = vmul.f32 %v693, 0.5
        %v767 = vmul.f32 %v695, 0.5
        %v768 = vmul.f32 %v697, 0.5
        %v769 = vmul.f32 %v701, 0.5
        %v770 = vmul.f32 %v703, 0.5
        %v771 = vmul.f32 %v705, 0.5
        %v772 = vmul.f32 %v707, 0.5
        %v773 = vtanh.pop %v709
        %v774 = vtanh.pop %v710
        %v775 = vtanh.pop %v711
        %v776 = vtanh.pop %v712
        %v777 = vtanh.pop %v713
        %v778 = vtanh.pop %v714
        %v779 = vtanh.pop %v715
        %v780 = vtanh.pop %v716
        %v781 = vtanh.pop %v717
        %v782 = vtanh.pop %v718
        %v783 = vtanh.pop %v719
        %v784 = vtanh.pop %v720
        %v785 = vtanh.pop %v721
        %v786 = vtanh.pop %v722
        %v787 = vtanh.pop %v723
        %v788 = vtanh.pop %v724
        %v789 = vtanh.pop %v725
        %v790 = vtanh.pop %v726
        %v791 = vtanh.pop %v727
        %v792 = vtanh.pop %v728
        %v793 = vtanh.pop %v729
        %v794 = vtanh.pop %v730
        %v795 = vtanh.pop %v731
        %v796 = vtanh.pop %v732
        %v797 = vtanh.pop %v733
        %v798 = vtanh.pop %v734
        %v799 = vtanh.pop %v735
        %v800 = vtanh.pop %v736
        %v801 = vtanh.pop %v737
        %v802 = vtanh.pop %v738
        %v803 = vtanh.pop %v739
        %v804 = vtanh.pop %v740
        %v805 = vtanh.pop %v741
        %v806 = vtanh.pop %v742
        %v807 = vtanh.pop %v743
        %v808 = vtanh.pop %v744
        %v809 = vtanh.pop %v745
        %v810 = vtanh.pop %v746
        %v811 = vtanh.pop %v747
        %v812 = vtanh.pop %v748
        %v813 = vtanh.pop %v749
        %v814 = vtanh.pop %v750
        %v815 = vtanh.pop %v751
        %v816 = vtanh.pop %v752
        %v817 = vtanh.pop %v753
        %v818 = vtanh.pop %v754
        %v819 = vtanh.pop %v755
        %v820 = vtanh.pop %v756
        %v821 = vtanh.pop %v757
        %v822 = vtanh.pop %v758
        %v823 = vtanh.pop %v759
        %v824 = vtanh.pop %v760
        %v825 = vtanh.pop %v761
        %v826 = vtanh.pop %v762
        %v827 = vtanh.pop %v763
        %v828 = vtanh.pop %v764
        %v829 = vtanh.pop %v765
        %v830 = vtanh.pop %v766
        %v831 = vtanh.pop %v767
        %v832 = vtanh.pop %v768
        %v833 = vtanh.pop %v769
        %v834 = vtanh.pop %v770
        %v835 = vtanh.pop %v771
        %v836 = vtanh.pop %v772
        %v837 = vmul.f32 %v773, 0.5
        %v838 = vmul.f32 %v774, 0.5
        %v839 = vmul.f32 %v775, 0.5
        %v840 = vmul.f32 %v776, 0.5
        %v841 = vmul.f32 %v777, 0.5
        %v842 = vmul.f32 %v778, 0.5
        %v843 = vmul.f32 %v779, 0.5
        %v844 = vmul.f32 %v780, 0.5
        %v845 = vmul.f32 %v781, 0.5
        %v846 = vmul.f32 %v782, 0.5
        %v847 = vmul.f32 %v783, 0.5
        %v848 = vmul.f32 %v784, 0.5
        %v849 = vmul.f32 %v785, 0.5
        %v850 = vmul.f32 %v786, 0.5
        %v851 = vmul.f32 %v787, 0.5
        %v852 = vmul.f32 %v788, 0.5
        %v853 = vmul.f32 %v789, 0.5
        %v854 = vmul.f32 %v790, 0.5
        %v855 = vmul.f32 %v791, 0.5
        %v856 = vmul.f32 %v792, 0.5
        %v857 = vmul.f32 %v793, 0.5
        %v858 = vmul.f32 %v794, 0.5
        %v859 = vmul.f32 %v795, 0.5
        %v860 = vmul.f32 %v796, 0.5
        %v861 = vmul.f32 %v797, 0.5
        %v862 = vmul.f32 %v798, 0.5
        %v863 = vmul.f32 %v799, 0.5
        %v864 = vmul.f32 %v800, 0.5
        %v865 = vmul.f32 %v801, 0.5
        %v866 = vmul.f32 %v802, 0.5
        %v867 = vmul.f32 %v803, 0.5
        %v868 = vmul.f32 %v804, 0.5
        %v869 = vmul.f32 %v805, 0.5
        %v870 = vmul.f32 %v806, 0.5
        %v871 = vmul.f32 %v807, 0.5
        %v872 = vmul.f32 %v808, 0.5
        %v873 = vmul.f32 %v809, 0.5
        %v874 = vmul.f32 %v810, 0.5
        %v875 = vmul.f32 %v811, 0.5
        %v876 = vmul.f32 %v812, 0.5
        %v877 = vmul.f32 %v813, 0.5
        %v878 = vmul.f32 %v814, 0.5
        %v879 = vmul.f32 %v815, 0.5
        %v880 = vmul.f32 %v816, 0.5
        %v881 = vmul.f32 %v817, 0.5
        %v882 = vmul.f32 %v818, 0.5
        %v883 = vmul.f32 %v819, 0.5
        %v884 = vmul.f32 %v820, 0.5
        %v885 = vmul.f32 %v821, 0.5
        %v886 = vmul.f32 %v822, 0.5
        %v887 = vmul.f32 %v823, 0.5
        %v888 = vmul.f32 %v824, 0.5
        %v889 = vmul.f32 %v825, 0.5
        %v890 = vmul.f32 %v826, 0.5
        %v891 = vmul.f32 %v827, 0.5
        %v892 = vmul.f32 %v828, 0.5
        %v893 = vmul.f32 %v829, 0.5
        %v894 = vmul.f32 %v830, 0.5
        %v895 = vmul.f32 %v831, 0.5
        %v896 = vmul.f32 %v832, 0.5
        %v897 = vmul.f32 %v833, 0.5
        %v898 = vmul.f32 %v834, 0.5
        %v899 = vmul.f32 %v835, 0.5
        %v900 = vmul.f32 %v836, 0.5
        %v901 = vadd.f32 %v837, 0.5
        %v902 = vadd.f32 %v838, 0.5
        %v903 = vadd.f32 %v839, 0.5
        %v904 = vadd.f32 %v840, 0.5
        %v905 = vadd.f32 %v841, 0.5
        %v906 = vadd.f32 %v842, 0.5
        %v907 = vadd.f32 %v843, 0.5
        %v908 = vadd.f32 %v844, 0.5
        %v909 = vadd.f32 %v845, 0.5
        %v910 = vadd.f32 %v846, 0.5
        %v911 = vadd.f32 %v847, 0.5
        %v912 = vadd.f32 %v848, 0.5
        %v913 = vadd.f32 %v849, 0.5
        %v914 = vadd.f32 %v850, 0.5
        %v915 = vadd.f32 %v851, 0.5
        %v916 = vadd.f32 %v852, 0.5
        %v917 = vadd.f32 %v853, 0.5
        %v918 = vadd.f32 %v854, 0.5
        %v919 = vadd.f32 %v855, 0.5
        %v920 = vadd.f32 %v856, 0.5
        %v921 = vadd.f32 %v857, 0.5
        %v922 = vadd.f32 %v858, 0.5
        %v923 = vadd.f32 %v859, 0.5
        %v924 = vadd.f32 %v860, 0.5
        %v925 = vadd.f32 %v861, 0.5
        %v926 = vadd.f32 %v862, 0.5
        %v927 = vadd.f32 %v863, 0.5
        %v928 = vadd.f32 %v864, 0.5
        %v929 = vadd.f32 %v865, 0.5
        %v930 = vadd.f32 %v866, 0.5
        %v931 = vadd.f32 %v867, 0.5
        %v932 = vadd.f32 %v868, 0.5
        %v933 = vadd.f32 %v869, 0.5
        %v934 = vadd.f32 %v870, 0.5
        %v935 = vadd.f32 %v871, 0.5
        %v936 = vadd.f32 %v872, 0.5
        %v937 = vadd.f32 %v873, 0.5
        %v938 = vadd.f32 %v874, 0.5
        %v939 = vadd.f32 %v875, 0.5
        %v940 = vadd.f32 %v876, 0.5
        %v941 = vadd.f32 %v877, 0.5
        %v942 = vadd.f32 %v878, 0.5
        %v943 = vadd.f32 %v879, 0.5
        %v944 = vadd.f32 %v880, 0.5
        %v945 = vadd.f32 %v881, 0.5
        %v946 = vadd.f32 %v882, 0.5
        %v947 = vadd.f32 %v883, 0.5
        %v948 = vadd.f32 %v884, 0.5
        %v949 = vadd.f32 %v885, 0.5
        %v950 = vadd.f32 %v886, 0.5
        %v951 = vadd.f32 %v887, 0.5
        %v952 = vadd.f32 %v888, 0.5
        %v953 = vadd.f32 %v889, 0.5
        %v954 = vadd.f32 %v890, 0.5
        %v955 = vadd.f32 %v891, 0.5
        %v956 = vadd.f32 %v892, 0.5
        %v957 = vadd.f32 %v893, 0.5
        %v958 = vadd.f32 %v894, 0.5
        %v959 = vadd.f32 %v895, 0.5
        %v960 = vadd.f32 %v896, 0.5
        %v961 = vadd.f32 %v897, 0.5
        %v962 = vadd.f32 %v898, 0.5
        %v963 = vadd.f32 %v899, 0.5
        %v964 = vadd.f32 %v900, 0.5
        %v965 = vld [vmem:[#allocation2] sm:$0xff]
        %v966 = vld [vmem:[#allocation2 + $0x8] sm:$0xff]
        %v967 = vld [vmem:[#allocation2 + $0x10] sm:$0xff]
        %v968 = vld [vmem:[#allocation2 + $0x18] sm:$0xff]
        %v969 = vld [vmem:[#allocation2 + $0x20] sm:$0xff]
        %v970 = vld [vmem:[#allocation2 + $0x28] sm:$0xff]
        %v971 = vld [vmem:[#allocation2 + $0x30] sm:$0xff]
        %v972 = vld [vmem:[#allocation2 + $0x38] sm:$0xff]
        %v973 = vld [vmem:[#allocation2 + $0x40] sm:$0xff]
        %v974 = vld [vmem:[#allocation2 + $0x48] sm:$0xff]
        %v975 = vld [vmem:[#allocation2 + $0x50] sm:$0xff]
        %v976 = vld [vmem:[#allocation2 + $0x58] sm:$0xff]
        %v977 = vld [vmem:[#allocation2 + $0x60] sm:$0xff]
        %v978 = vld [vmem:[#allocation2 + $0x68] sm:$0xff]
        %v979 = vld [vmem:[#allocation2 + $0x70] sm:$0xff]
        %v980 = vld [vmem:[#allocation2 + $0x78] sm:$0xff]
        %v981 = vld [vmem:[#allocation2 + $0x80] sm:$0xff]
        %v982 = vld [vmem:[#allocation2 + $0x88] sm:$0xff]
        %v983 = vld [vmem:[#allocation2 + $0x90] sm:$0xff]
        %v984 = vld [vmem:[#allocation2 + $0x98] sm:$0xff]
        %v985 = vld [vmem:[#allocation2 + $0xa0] sm:$0xff]
        %v986 = vld [vmem:[#allocation2 + $0xa8] sm:$0xff]
        %v987 = vld [vmem:[#allocation2 + $0xb0] sm:$0xff]
        %v988 = vld [vmem:[#allocation2 + $0xb8] sm:$0xff]
        %v989 = vld [vmem:[#allocation2 + $0xc0] sm:$0xff]
        %v990 = vld [vmem:[#allocation2 + $0xc8] sm:$0xff]
        %v991 = vld [vmem:[#allocation2 + $0xd0] sm:$0xff]
        %v992 = vld [vmem:[#allocation2 + $0xd8] sm:$0xff]
        %v993 = vld [vmem:[#allocation2 + $0xe0] sm:$0xff]
        %v994 = vld [vmem:[#allocation2 + $0xe8] sm:$0xff]
        %v995 = vld [vmem:[#allocation2 + $0xf0] sm:$0xff]
        %v996 = vld [vmem:[#allocation2 + $0xf8] sm:$0xff]
        %v997 = vpack.c.bf16 %v903, %v901
        %v998 = vpack.c.bf16 %v904, %v902
        %v999 = vpack.c.bf16 %v907, %v905
        %v1000 = vpack.c.bf16 %v908, %v906
        %v1001 = vpack.c.bf16 %v911, %v909
        %v1002 = vpack.c.bf16 %v912, %v910
        %v1003 = vpack.c.bf16 %v915, %v913
        %v1004 = vpack.c.bf16 %v916, %v914
        %v1005 = vpack.c.bf16 %v919, %v917
        %v1006 = vpack.c.bf16 %v920, %v918
        %v1007 = vpack.c.bf16 %v923, %v921
        %v1008 = vpack.c.bf16 %v924, %v922
        %v1009 = vpack.c.bf16 %v927, %v925
        %v1010 = vpack.c.bf16 %v928, %v926
        %v1011 = vpack.c.bf16 %v931, %v929
        %v1012 = vpack.c.bf16 %v932, %v930
        %v1013 = vpack.c.bf16 %v935, %v933
        %v1014 = vpack.c.bf16 %v936, %v934
        %v1015 = vpack.c.bf16 %v939, %v937
        %v1016 = vpack.c.bf16 %v940, %v938
        %v1017 = vpack.c.bf16 %v943, %v941
        %v1018 = vpack.c.bf16 %v944, %v942
        %v1019 = vpack.c.bf16 %v947, %v945
        %v1020 = vpack.c.bf16 %v948, %v946
        %v1021 = vpack.c.bf16 %v951, %v949
        %v1022 = vpack.c.bf16 %v952, %v950
        %v1023 = vpack.c.bf16 %v955, %v953
        %v1024 = vpack.c.bf16 %v956, %v954
        %v1025 = vpack.c.bf16 %v959, %v957
        %v1026 = vpack.c.bf16 %v960, %v958
        %v1027 = vpack.c.bf16 %v963, %v961
        %v1028 = vpack.c.bf16 %v964, %v962
        %v1029 = vld [vmem:[#allocation8] sm:$0xf]
        %v1030 = vld [vmem:[#allocation8 + $0x4] sm:$0xf]
        %v1031 = vld [vmem:[#allocation8 + $0x8] sm:$0xf]
        %v1032 = vld [vmem:[#allocation8 + $0xc] sm:$0xf]
        %v1033 = vld [vmem:[#allocation8 + $0x10] sm:$0xf]
        %v1034 = vld [vmem:[#allocation8 + $0x14] sm:$0xf]
        %v1035 = vld [vmem:[#allocation8 + $0x18] sm:$0xf]
        %v1036 = vld [vmem:[#allocation8 + $0x1c] sm:$0xf]
        %v1037 = vld [vmem:[#allocation8 + $0x20] sm:$0xf]
        %v1038 = vld [vmem:[#allocation8 + $0x24] sm:$0xf]
        %v1039 = vld [vmem:[#allocation8 + $0x28] sm:$0xf]
        %v1040 = vld [vmem:[#allocation8 + $0x2c] sm:$0xf]
        %v1041 = vld [vmem:[#allocation8 + $0x30] sm:$0xf]
        %v1042 = vld [vmem:[#allocation8 + $0x34] sm:$0xf]
        %v1043 = vld [vmem:[#allocation8 + $0x38] sm:$0xf]
        %v1044 = vld [vmem:[#allocation8 + $0x3c] sm:$0xf]
        %v1045 = vld [vmem:[#allocation8 + $0x40] sm:$0xf]
        %v1046 = vld [vmem:[#allocation8 + $0x44] sm:$0xf]
        %v1047 = vld [vmem:[#allocation8 + $0x48] sm:$0xf]
        %v1048 = vld [vmem:[#allocation8 + $0x4c] sm:$0xf]
        %v1049 = vld [vmem:[#allocation8 + $0x50] sm:$0xf]
        %v1050 = vld [vmem:[#allocation8 + $0x54] sm:$0xf]
        %v1051 = vld [vmem:[#allocation8 + $0x58] sm:$0xf]
        %v1052 = vld [vmem:[#allocation8 + $0x5c] sm:$0xf]
        %v1053 = vld [vmem:[#allocation8 + $0x60] sm:$0xf]
        %v1054 = vld [vmem:[#allocation8 + $0x64] sm:$0xf]
        %v1055 = vld [vmem:[#allocation8 + $0x68] sm:$0xf]
        %v1056 = vld [vmem:[#allocation8 + $0x6c] sm:$0xf]
        %v1057 = vld [vmem:[#allocation8 + $0x70] sm:$0xf]
        %v1058 = vld [vmem:[#allocation8 + $0x74] sm:$0xf]
        %v1059 = vld [vmem:[#allocation8 + $0x78] sm:$0xf]
        %v1060 = vld [vmem:[#allocation8 + $0x7c] sm:$0xf]
        %v1093 = vunpack.c.l.b16 %v1029
        %v1094 = vunpack.c.l.b16 %v1030
        %v1095 = vunpack.c.l.b16 %v1031
        %v1096 = vunpack.c.l.b16 %v1032
        %v1097 = vunpack.c.l.b16 %v1033
        %v1098 = vunpack.c.l.b16 %v1034
        %v1099 = vunpack.c.l.b16 %v1035
        %v1100 = vunpack.c.l.b16 %v1036
        %v1101 = vunpack.c.l.b16 %v1037
        %v1102 = vunpack.c.l.b16 %v1038
        %v1103 = vunpack.c.l.b16 %v1039
        %v1104 = vunpack.c.l.b16 %v1040
        %v1105 = vunpack.c.l.b16 %v1041
        %v1106 = vunpack.c.l.b16 %v1042
        %v1107 = vunpack.c.l.b16 %v1043
        %v1108 = vunpack.c.l.b16 %v1044
        %v1109 = vunpack.c.l.b16 %v1045
        %v1110 = vunpack.c.l.b16 %v1046
        %v1111 = vunpack.c.l.b16 %v1047
        %v1112 = vunpack.c.l.b16 %v1048
        %v1113 = vunpack.c.l.b16 %v1049
        %v1114 = vunpack.c.l.b16 %v1050
        %v1115 = vunpack.c.l.b16 %v1051
        %v1116 = vunpack.c.l.b16 %v1052
        %v1117 = vunpack.c.l.b16 %v1053
        %v1118 = vunpack.c.l.b16 %v1054
        %v1119 = vunpack.c.l.b16 %v1055
        %v1120 = vunpack.c.l.b16 %v1056
        %v1121 = vunpack.c.l.b16 %v1057
        %v1122 = vunpack.c.l.b16 %v1058
        %v1123 = vunpack.c.l.b16 %v1059
        %v1124 = vunpack.c.l.b16 %v1060
        %v1125 = vpack.c.b16 %v1094, %v1093
        %v1126 = vpack.c.b16 %v1096, %v1095
        %v1127 = vpack.c.b16 %v1098, %v1097
        %v1128 = vpack.c.b16 %v1100, %v1099
        %v1129 = vpack.c.b16 %v1102, %v1101
        %v1130 = vpack.c.b16 %v1104, %v1103
        %v1131 = vpack.c.b16 %v1106, %v1105
        %v1132 = vpack.c.b16 %v1108, %v1107
        %v1133 = vpack.c.b16 %v1110, %v1109
        %v1134 = vpack.c.b16 %v1112, %v1111
        %v1135 = vpack.c.b16 %v1114, %v1113
        %v1136 = vpack.c.b16 %v1116, %v1115
        %v1137 = vpack.c.b16 %v1118, %v1117
        %v1138 = vpack.c.b16 %v1120, %v1119
        %v1139 = vpack.c.b16 %v1122, %v1121
        %v1140 = vpack.c.b16 %v1124, %v1123
        %1157 = vmatprep.subr.bf16.mxu0 0
        %1158 = vmatpush1.bf16.msra.mxu0 %v1125
        %1159 = vmatprep.subr.bf16.mxu0 0
        %1160 = vmatpush1.bf16.msra.mxu0 %v1126
        %1161 = vmatprep.subr.bf16.mxu0 0
        %1162 = vmatpush1.bf16.msra.mxu0 %v1127
        %1163 = vmatprep.subr.bf16.mxu0 0
        %1164 = vmatpush1.bf16.msra.mxu0 %v1128
        %1165 = vmatprep.subr.bf16.mxu0 0
        %1166 = vmatpush1.bf16.msra.mxu0 %v1129
        %1167 = vmatprep.subr.bf16.mxu0 0
        %1168 = vmatpush1.bf16.msra.mxu0 %v1130
        %1169 = vmatprep.subr.bf16.mxu0 0
        %1170 = vmatpush1.bf16.msra.mxu0 %v1131
        %1171 = vmatprep.subr.bf16.mxu0 0
        %1172 = vmatpush1.bf16.msra.mxu0 %v1132
        %1173 = vmatprep.subr.bf16.mxu0 0
        %1174 = vmatpush1.bf16.msra.mxu0 %v1133
        %1175 = vmatprep.subr.bf16.mxu0 0
        %1176 = vmatpush1.bf16.msra.mxu0 %v1134
        %1177 = vmatprep.subr.bf16.mxu0 0
        %1178 = vmatpush1.bf16.msra.mxu0 %v1135
        %1179 = vmatprep.subr.bf16.mxu0 0
        %1180 = vmatpush1.bf16.msra.mxu0 %v1136
        %1181 = vmatprep.subr.bf16.mxu0 0
        %1182 = vmatpush1.bf16.msra.mxu0 %v1137
        %1183 = vmatprep.subr.bf16.mxu0 0
        %1184 = vmatpush1.bf16.msra.mxu0 %v1138
        %1185 = vmatprep.subr.bf16.mxu0 0
        %1186 = vmatpush1.bf16.msra.mxu0 %v1139
        %1187 = vmatprep.subr.bf16.mxu0 0
        %1188 = vmatpush1.bf16.msra.mxu0 %v1140
        %1189 = vmatprep.mubr.bf16.mxu0 %v998
        %1190 = vmatmul.mubr.bf16.gmra.mrb[0].mxu0 %v997
        %v1191 = vpop.f32.mrb[0].mxu0
        %v1192 = vadd.f32 0.0, %v1191
        %v1193 = vpop.f32.mrb[0].mxu0
        %v1194 = vpop.f32.mrb[0].mxu0
        %v1195 = vadd.f32 0.0, %v1194
        %v1196 = vpop.f32.mrb[0].mxu0
        %1197 = vmatprep.mubr.bf16.mxu0 %v1000
        %1198 = vmatmul.mubr.bf16.gmra.mrb[0].mxu0 %v999
        %v1199 = vpop.f32.mrb[0].mxu0
        %v1200 = vadd.f32 0.0, %v1199
        %v1201 = vpop.f32.mrb[0].mxu0
        %v1202 = vpop.f32.mrb[0].mxu0
        %v1203 = vadd.f32 0.0, %v1202
        %v1204 = vpop.f32.mrb[0].mxu0
        %1205 = vmatprep.mubr.bf16.mxu0 %v1002
        %1206 = vmatmul.mubr.bf16.gmra.mrb[0].mxu0 %v1001
        %v1207 = vpop.f32.mrb[0].mxu0
        %v1208 = vadd.f32 0.0, %v1207
        %v1209 = vpop.f32.mrb[0].mxu0
        %v1210 = vpop.f32.mrb[0].mxu0
        %v1211 = vadd.f32 0.0, %v1210
        %v1212 = vpop.f32.mrb[0].mxu0
        %1213 = vmatprep.mubr.bf16.mxu0 %v1004
        %1214 = vmatmul.mubr.bf16.gmra.mrb[0].mxu0 %v1003
        %v1215 = vpop.f32.mrb[0].mxu0
        %v1216 = vadd.f32 0.0, %v1215
        %v1217 = vpop.f32.mrb[0].mxu0
        %v1218 = vpop.f32.mrb[0].mxu0
        %v1219 = vadd.f32 0.0, %v1218
        %v1220 = vpop.f32.mrb[0].mxu0
        %1221 = vmatprep.mubr.bf16.mxu0 %v1006
        %1222 = vmatmul.mubr.bf16.gmra.mrb[0].mxu0 %v1005
        %v1223 = vpop.f32.mrb[0].mxu0
        %v1224 = vadd.f32 0.0, %v1223
        %v1225 = vpop.f32.mrb[0].mxu0
        %v1226 = vpop.f32.mrb[0].mxu0
        %v1227 = vadd.f32 0.0, %v1226
        %v1228 = vpop.f32.mrb[0].mxu0
        %1229 = vmatprep.mubr.bf16.mxu0 %v1008
        %1230 = vmatmul.mubr.bf16.gmra.mrb[0].mxu0 %v1007
        %v1231 = vpop.f32.mrb[0].mxu0
        %v1232 = vadd.f32 0.0, %v1231
        %v1233 = vpop.f32.mrb[0].mxu0
        %v1234 = vpop.f32.mrb[0].mxu0
        %v1235 = vadd.f32 0.0, %v1234
        %v1236 = vpop.f32.mrb[0].mxu0
        %1237 = vmatprep.mubr.bf16.mxu0 %v1010
        %1238 = vmatmul.mubr.bf16.gmra.mrb[0].mxu0 %v1009
        %v1239 = vpop.f32.mrb[0].mxu0
        %v1240 = vadd.f32 0.0, %v1239
        %v1241 = vpop.f32.mrb[0].mxu0
        %v1242 = vpop.f32.mrb[0].mxu0
        %v1243 = vadd.f32 0.0, %v1242
        %v1244 = vpop.f32.mrb[0].mxu0
        %1245 = vmatprep.mubr.bf16.mxu0 %v1012
        %1246 = vmatmul.mubr.bf16.gmra.mrb[0].mxu0 %v1011
        %v1247 = vpop.f32.mrb[0].mxu0
        %v1248 = vadd.f32 0.0, %v1247
        %v1249 = vpop.f32.mrb[0].mxu0
        %v1250 = vpop.f32.mrb[0].mxu0
        %v1251 = vadd.f32 0.0, %v1250
        %v1252 = vpop.f32.mrb[0].mxu0
        %1253 = vmatprep.mubr.bf16.mxu0 %v1014
        %1254 = vmatmul.mubr.bf16.gmra.mrb[0].mxu0 %v1013
        %v1255 = vpop.f32.mrb[0].mxu0
        %v1256 = vadd.f32 0.0, %v1255
        %v1257 = vpop.f32.mrb[0].mxu0
        %v1258 = vpop.f32.mrb[0].mxu0
        %v1259 = vadd.f32 0.0, %v1258
        %v1260 = vpop.f32.mrb[0].mxu0
        %1261 = vmatprep.mubr.bf16.mxu0 %v1016
        %1262 = vmatmul.mubr.bf16.gmra.mrb[0].mxu0 %v1015
        %v1263 = vpop.f32.mrb[0].mxu0
        %v1264 = vadd.f32 0.0, %v1263
        %v1265 = vpop.f32.mrb[0].mxu0
        %v1266 = vpop.f32.mrb[0].mxu0
        %v1267 = vadd.f32 0.0, %v1266
        %v1268 = vpop.f32.mrb[0].mxu0
        %1269 = vmatprep.mubr.bf16.mxu0 %v1018
        %1270 = vmatmul.mubr.bf16.gmra.mrb[0].mxu0 %v1017
        %v1271 = vpop.f32.mrb[0].mxu0
        %v1272 = vadd.f32 0.0, %v1271
        %v1273 = vpop.f32.mrb[0].mxu0
        %v1274 = vpop.f32.mrb[0].mxu0
        %v1275 = vadd.f32 0.0, %v1274
        %v1276 = vpop.f32.mrb[0].mxu0
        %1277 = vmatprep.mubr.bf16.mxu0 %v1020
        %1278 = vmatmul.mubr.bf16.gmra.mrb[0].mxu0 %v1019
        %v1279 = vpop.f32.mrb[0].mxu0
        %v1280 = vadd.f32 0.0, %v1279
        %v1281 = vpop.f32.mrb[0].mxu0
        %v1282 = vpop.f32.mrb[0].mxu0
        %v1283 = vadd.f32 0.0, %v1282
        %v1284 = vpop.f32.mrb[0].mxu0
        %1285 = vmatprep.mubr.bf16.mxu0 %v1022
        %1286 = vmatmul.mubr.bf16.gmra.mrb[0].mxu0 %v1021
        %v1287 = vpop.f32.mrb[0].mxu0
        %v1288 = vadd.f32 0.0, %v1287
        %v1289 = vpop.f32.mrb[0].mxu0
        %v1290 = vpop.f32.mrb[0].mxu0
        %v1291 = vadd.f32 0.0, %v1290
        %v1292 = vpop.f32.mrb[0].mxu0
        %1293 = vmatprep.mubr.bf16.mxu0 %v1024
        %1294 = vmatmul.mubr.bf16.gmra.mrb[0].mxu0 %v1023
        %v1295 = vpop.f32.mrb[0].mxu0
        %v1296 = vadd.f32 0.0, %v1295
        %v1297 = vpop.f32.mrb[0].mxu0
        %v1298 = vpop.f32.mrb[0].mxu0
        %v1299 = vadd.f32 0.0, %v1298
        %v1300 = vpop.f32.mrb[0].mxu0
        %1301 = vmatprep.mubr.bf16.mxu0 %v1026
        %1302 = vmatmul.mubr.bf16.gmra.mrb[0].mxu0 %v1025
        %v1303 = vpop.f32.mrb[0].mxu0
        %v1304 = vadd.f32 0.0, %v1303
        %v1305 = vpop.f32.mrb[0].mxu0
        %v1306 = vpop.f32.mrb[0].mxu0
        %v1307 = vadd.f32 0.0, %v1306
        %v1308 = vpop.f32.mrb[0].mxu0
        %1309 = vmatprep.mubr.bf16.mxu0 %v1028
        %1310 = vmatmul.mubr.bf16.gmra.mrb[0].mxu0 %v1027
        %v1311 = vpop.f32.mrb[0].mxu0
        %v1312 = vadd.f32 0.0, %v1311
        %v1313 = vpop.f32.mrb[0].mxu0
        %v1314 = vpop.f32.mrb[0].mxu0
        %v1315 = vadd.f32 0.0, %v1314
        %v1316 = vpop.f32.mrb[0].mxu0
        %1317 = vdwg.mxu0
        %v1318 = vadd.f32 %v965, %v1192
        %v1319 = vadd.f32 %v966, %v1195
        %v1320 = vadd.f32 %v967, %v1200
        %v1321 = vadd.f32 %v968, %v1203
        %v1322 = vadd.f32 %v969, %v1208
        %v1323 = vadd.f32 %v970, %v1211
        %v1324 = vadd.f32 %v971, %v1216
        %v1325 = vadd.f32 %v972, %v1219
        %v1326 = vadd.f32 %v973, %v1224
        %v1327 = vadd.f32 %v974, %v1227
        %v1328 = vadd.f32 %v975, %v1232
        %v1329 = vadd.f32 %v976, %v1235
        %v1330 = vadd.f32 %v977, %v1240
        %v1331 = vadd.f32 %v978, %v1243
        %v1332 = vadd.f32 %v979, %v1248
        %v1333 = vadd.f32 %v980, %v1251
        %v1334 = vadd.f32 %v981, %v1256
        %v1335 = vadd.f32 %v982, %v1259
        %v1336 = vadd.f32 %v983, %v1264
        %v1337 = vadd.f32 %v984, %v1267
        %v1338 = vadd.f32 %v985, %v1272
        %v1339 = vadd.f32 %v986, %v1275
        %v1340 = vadd.f32 %v987, %v1280
        %v1341 = vadd.f32 %v988, %v1283
        %v1342 = vadd.f32 %v989, %v1288
        %v1343 = vadd.f32 %v990, %v1291
        %v1344 = vadd.f32 %v991, %v1296
        %v1345 = vadd.f32 %v992, %v1299
        %v1346 = vadd.f32 %v993, %v1304
        %v1347 = vadd.f32 %v994, %v1307
        %v1348 = vadd.f32 %v995, %v1312
        %v1349 = vadd.f32 %v996, %v1315
        %1350 = vst [vmem:[#allocation2] sm:$0xff] %v1318
        %1351 = vst [vmem:[#allocation2 + $0x8] sm:$0xff] %v1319
        %1352 = vst [vmem:[#allocation2 + $0x10] sm:$0xff] %v1320
        %1353 = vst [vmem:[#allocation2 + $0x18] sm:$0xff] %v1321
        %1354 = vst [vmem:[#allocation2 + $0x20] sm:$0xff] %v1322
        %1355 = vst [vmem:[#allocation2 + $0x28] sm:$0xff] %v1323
        %1356 = vst [vmem:[#allocation2 + $0x30] sm:$0xff] %v1324
        %1357 = vst [vmem:[#allocation2 + $0x38] sm:$0xff] %v1325
        %1358 = vst [vmem:[#allocation2 + $0x40] sm:$0xff] %v1326
        %1359 = vst [vmem:[#allocation2 + $0x48] sm:$0xff] %v1327
        %1360 = vst [vmem:[#allocation2 + $0x50] sm:$0xff] %v1328
        %1361 = vst [vmem:[#allocation2 + $0x58] sm:$0xff] %v1329
        %1362 = vst [vmem:[#allocation2 + $0x60] sm:$0xff] %v1330
        %1363 = vst [vmem:[#allocation2 + $0x68] sm:$0xff] %v1331
        %1364 = vst [vmem:[#allocation2 + $0x70] sm:$0xff] %v1332
        %1365 = vst [vmem:[#allocation2 + $0x78] sm:$0xff] %v1333
        %1366 = vst [vmem:[#allocation2 + $0x80] sm:$0xff] %v1334
        %1367 = vst [vmem:[#allocation2 + $0x88] sm:$0xff] %v1335
        %1368 = vst [vmem:[#allocation2 + $0x90] sm:$0xff] %v1336
        %1369 = vst [vmem:[#allocation2 + $0x98] sm:$0xff] %v1337
        %1370 = vst [vmem:[#allocation2 + $0xa0] sm:$0xff] %v1338
        %1371 = vst [vmem:[#allocation2 + $0xa8] sm:$0xff] %v1339
        %1372 = vst [vmem:[#allocation2 + $0xb0] sm:$0xff] %v1340
        %1373 = vst [vmem:[#allocation2 + $0xb8] sm:$0xff] %v1341
        %1374 = vst [vmem:[#allocation2 + $0xc0] sm:$0xff] %v1342
        %1375 = vst [vmem:[#allocation2 + $0xc8] sm:$0xff] %v1343
        %1376 = vst [vmem:[#allocation2 + $0xd0] sm:$0xff] %v1344
        %1377 = vst [vmem:[#allocation2 + $0xd8] sm:$0xff] %v1345
        %1378 = vst [vmem:[#allocation2 + $0xe0] sm:$0xff] %v1346
        %1379 = vst [vmem:[#allocation2 + $0xe8] sm:$0xff] %v1347
        %1380 = vst [vmem:[#allocation2 + $0xf0] sm:$0xff] %v1348
        %1381 = vst [vmem:[#allocation2 + $0xf8] sm:$0xff] %v1349
        // Predicated region
        $region57: #{tpu_custom_call.1} parent=39 // pred_check
          %p1382 = pneg %p324
        $region58: #{tpu_custom_call.1} parent=39 // pred_check_branch
          %1384 = sbr.rel (%p1382) target = $region60
        $region59: #{tpu_custom_call.1} parent=39 // pred_region
          %v1385 = vld [vmem:[#allocation2] sm:$0xff]
          %v1386 = vld [vmem:[#allocation2 + $0x8] sm:$0xff]
          %v1387 = vld [vmem:[#allocation2 + $0x10] sm:$0xff]
          %v1388 = vld [vmem:[#allocation2 + $0x18] sm:$0xff]
          %v1389 = vld [vmem:[#allocation2 + $0x20] sm:$0xff]
          %v1390 = vld [vmem:[#allocation2 + $0x28] sm:$0xff]
          %v1391 = vld [vmem:[#allocation2 + $0x30] sm:$0xff]
          %v1392 = vld [vmem:[#allocation2 + $0x38] sm:$0xff]
          %v1393 = vld [vmem:[#allocation2 + $0x40] sm:$0xff]
          %v1394 = vld [vmem:[#allocation2 + $0x48] sm:$0xff]
          %v1395 = vld [vmem:[#allocation2 + $0x50] sm:$0xff]
          %v1396 = vld [vmem:[#allocation2 + $0x58] sm:$0xff]
          %v1397 = vld [vmem:[#allocation2 + $0x60] sm:$0xff]
          %v1398 = vld [vmem:[#allocation2 + $0x68] sm:$0xff]
          %v1399 = vld [vmem:[#allocation2 + $0x70] sm:$0xff]
          %v1400 = vld [vmem:[#allocation2 + $0x78] sm:$0xff]
          %v1401 = vld [vmem:[#allocation2 + $0x80] sm:$0xff]
          %v1402 = vld [vmem:[#allocation2 + $0x88] sm:$0xff]
          %v1403 = vld [vmem:[#allocation2 + $0x90] sm:$0xff]
          %v1404 = vld [vmem:[#allocation2 + $0x98] sm:$0xff]
          %v1405 = vld [vmem:[#allocation2 + $0xa0] sm:$0xff]
          %v1406 = vld [vmem:[#allocation2 + $0xa8] sm:$0xff]
          %v1407 = vld [vmem:[#allocation2 + $0xb0] sm:$0xff]
          %v1408 = vld [vmem:[#allocation2 + $0xb8] sm:$0xff]
          %v1409 = vld [vmem:[#allocation2 + $0xc0] sm:$0xff]
          %v1410 = vld [vmem:[#allocation2 + $0xc8] sm:$0xff]
          %v1411 = vld [vmem:[#allocation2 + $0xd0] sm:$0xff]
          %v1412 = vld [vmem:[#allocation2 + $0xd8] sm:$0xff]
          %v1413 = vld [vmem:[#allocation2 + $0xe0] sm:$0xff]
          %v1414 = vld [vmem:[#allocation2 + $0xe8] sm:$0xff]
          %v1415 = vld [vmem:[#allocation2 + $0xf0] sm:$0xff]
          %v1416 = vld [vmem:[#allocation2 + $0xf8] sm:$0xff]
          %v1417 = vld [vmem:[%s4] sm:$0x1]
          %v1419 = vlaneseq
          %v1420 = vshrl.u32 %v1419, 7
          %v1421 = vsub.s32 0, %v1420
          %v1422 = vrot.slane %v1417, %v1421
          %v1424 = vadd.f32 %v1385, %v1422
          %v1425 = vadd.f32 %v1386, %v1422
          %v1426 = vadd.f32 %v1387, %v1422
          %v1427 = vadd.f32 %v1388, %v1422
          %v1428 = vadd.f32 %v1389, %v1422
          %v1429 = vadd.f32 %v1390, %v1422
          %v1430 = vadd.f32 %v1391, %v1422
          %v1431 = vadd.f32 %v1392, %v1422
          %v1432 = vadd.f32 %v1393, %v1422
          %v1433 = vadd.f32 %v1394, %v1422
          %v1434 = vadd.f32 %v1395, %v1422
          %v1435 = vadd.f32 %v1396, %v1422
          %v1436 = vadd.f32 %v1397, %v1422
          %v1437 = vadd.f32 %v1398, %v1422
          %v1438 = vadd.f32 %v1399, %v1422
          %v1439 = vadd.f32 %v1400, %v1422
          %v1440 = vadd.f32 %v1401, %v1422
          %v1441 = vadd.f32 %v1402, %v1422
          %v1442 = vadd.f32 %v1403, %v1422
          %v1443 = vadd.f32 %v1404, %v1422
          %v1444 = vadd.f32 %v1405, %v1422
          %v1445 = vadd.f32 %v1406, %v1422
          %v1446 = vadd.f32 %v1407, %v1422
          %v1447 = vadd.f32 %v1408, %v1422
          %v1448 = vadd.f32 %v1409, %v1422
          %v1449 = vadd.f32 %v1410, %v1422
          %v1450 = vadd.f32 %v1411, %v1422
          %v1451 = vadd.f32 %v1412, %v1422
          %v1452 = vadd.f32 %v1413, %v1422
          %v1453 = vadd.f32 %v1414, %v1422
          %v1454 = vadd.f32 %v1415, %v1422
          %v1455 = vadd.f32 %v1416, %v1422
          %v1456 = vmul.f32 %v1424, %v1424
          %v1457 = vmul.f32 %v1425, %v1425
          %v1458 = vmul.f32 %v1426, %v1426
          %v1459 = vmul.f32 %v1427, %v1427
          %v1460 = vmul.f32 %v1428, %v1428
          %v1461 = vmul.f32 %v1429, %v1429
          %v1462 = vmul.f32 %v1430, %v1430
          %v1463 = vmul.f32 %v1431, %v1431
          %v1464 = vmul.f32 %v1432, %v1432
          %v1465 = vmul.f32 %v1433, %v1433
          %v1466 = vmul.f32 %v1434, %v1434
          %v1467 = vmul.f32 %v1435, %v1435
          %v1468 = vmul.f32 %v1436, %v1436
          %v1469 = vmul.f32 %v1437, %v1437
          %v1470 = vmul.f32 %v1438, %v1438
          %v1471 = vmul.f32 %v1439, %v1439
          %v1472 = vmul.f32 %v1440, %v1440
          %v1473 = vmul.f32 %v1441, %v1441
          %v1474 = vmul.f32 %v1442, %v1442
          %v1475 = vmul.f32 %v1443, %v1443
          %v1476 = vmul.f32 %v1444, %v1444
          %v1477 = vmul.f32 %v1445, %v1445
          %v1478 = vmul.f32 %v1446, %v1446
          %v1479 = vmul.f32 %v1447, %v1447
          %v1480 = vmul.f32 %v1448, %v1448
          %v1481 = vmul.f32 %v1449, %v1449
          %v1482 = vmul.f32 %v1450, %v1450
          %v1483 = vmul.f32 %v1451, %v1451
          %v1484 = vmul.f32 %v1452, %v1452
          %v1485 = vmul.f32 %v1453, %v1453
          %v1486 = vmul.f32 %v1454, %v1454
          %v1487 = vmul.f32 %v1455, %v1455
          %1488 = vadd.xlane.f32.xlu0 %v1456
          %v1489 = vpop.xlane.xlu0 %1488
          %1490 = vadd.xlane.f32.xlu0 %v1457
          %v1491 = vpop.xlane.xlu0 %1490
          %1492 = vadd.xlane.f32.xlu0 %v1458
          %v1493 = vpop.xlane.xlu0 %1492
          %1494 = vadd.xlane.f32.xlu0 %v1459
          %v1495 = vpop.xlane.xlu0 %1494
          %1496 = vadd.xlane.f32.xlu0 %v1460
          %v1497 = vpop.xlane.xlu0 %1496
          %1498 = vadd.xlane.f32.xlu0 %v1461
          %v1499 = vpop.xlane.xlu0 %1498
          %1500 = vadd.xlane.f32.xlu0 %v1462
          %v1501 = vpop.xlane.xlu0 %1500
          %1502 = vadd.xlane.f32.xlu0 %v1463
          %v1503 = vpop.xlane.xlu0 %1502
          %1504 = vadd.xlane.f32.xlu0 %v1464
          %v1505 = vpop.xlane.xlu0 %1504
          %1506 = vadd.xlane.f32.xlu0 %v1465
          %v1507 = vpop.xlane.xlu0 %1506
          %1508 = vadd.xlane.f32.xlu0 %v1466
          %v1509 = vpop.xlane.xlu0 %1508
          %1510 = vadd.xlane.f32.xlu0 %v1467
          %v1511 = vpop.xlane.xlu0 %1510
          %1512 = vadd.xlane.f32.xlu0 %v1468
          %v1513 = vpop.xlane.xlu0 %1512
          %1514 = vadd.xlane.f32.xlu0 %v1469
          %v1515 = vpop.xlane.xlu0 %1514
          %1516 = vadd.xlane.f32.xlu0 %v1470
          %v1517 = vpop.xlane.xlu0 %1516
          %1518 = vadd.xlane.f32.xlu0 %v1471
          %v1519 = vpop.xlane.xlu0 %1518
          %1520 = vadd.xlane.f32.xlu0 %v1472
          %v1521 = vpop.xlane.xlu0 %1520
          %1522 = vadd.xlane.f32.xlu0 %v1473
          %v1523 = vpop.xlane.xlu0 %1522
          %1524 = vadd.xlane.f32.xlu0 %v1474
          %v1525 = vpop.xlane.xlu0 %1524
          %1526 = vadd.xlane.f32.xlu0 %v1475
          %v1527 = vpop.xlane.xlu0 %1526
          %1528 = vadd.xlane.f32.xlu0 %v1476
          %v1529 = vpop.xlane.xlu0 %1528
          %1530 = vadd.xlane.f32.xlu0 %v1477
          %v1531 = vpop.xlane.xlu0 %1530
          %1532 = vadd.xlane.f32.xlu0 %v1478
          %v1533 = vpop.xlane.xlu0 %1532
          %1534 = vadd.xlane.f32.xlu0 %v1479
          %v1535 = vpop.xlane.xlu0 %1534
          %1536 = vadd.xlane.f32.xlu0 %v1480
          %v1537 = vpop.xlane.xlu0 %1536
          %1538 = vadd.xlane.f32.xlu0 %v1481
          %v1539 = vpop.xlane.xlu0 %1538
          %1540 = vadd.xlane.f32.xlu0 %v1482
          %v1541 = vpop.xlane.xlu0 %1540
          %1542 = vadd.xlane.f32.xlu0 %v1483
          %v1543 = vpop.xlane.xlu0 %1542
          %1544 = vadd.xlane.f32.xlu0 %v1484
          %v1545 = vpop.xlane.xlu0 %1544
          %1546 = vadd.xlane.f32.xlu0 %v1485
          %v1547 = vpop.xlane.xlu0 %1546
          %1548 = vadd.xlane.f32.xlu0 %v1486
          %v1549 = vpop.xlane.xlu0 %1548
          %1550 = vadd.xlane.f32.xlu0 %v1487
          %v1551 = vpop.xlane.xlu0 %1550
          %v1552 = vmax.f32 %v1489, 1e-24
          %v1553 = vmax.f32 %v1491, 1e-24
          %v1554 = vmax.f32 %v1493, 1e-24
          %v1555 = vmax.f32 %v1495, 1e-24
          %v1556 = vmax.f32 %v1497, 1e-24
          %v1557 = vmax.f32 %v1499, 1e-24
          %v1558 = vmax.f32 %v1501, 1e-24
          %v1559 = vmax.f32 %v1503, 1e-24
          %v1560 = vmax.f32 %v1505, 1e-24
          %v1561 = vmax.f32 %v1507, 1e-24
          %v1562 = vmax.f32 %v1509, 1e-24
          %v1563 = vmax.f32 %v1511, 1e-24
          %v1564 = vmax.f32 %v1513, 1e-24
          %v1565 = vmax.f32 %v1515, 1e-24
          %v1566 = vmax.f32 %v1517, 1e-24
          %v1567 = vmax.f32 %v1519, 1e-24
          %v1568 = vmax.f32 %v1521, 1e-24
          %v1569 = vmax.f32 %v1523, 1e-24
          %v1570 = vmax.f32 %v1525, 1e-24
          %v1571 = vmax.f32 %v1527, 1e-24
          %v1572 = vmax.f32 %v1529, 1e-24
          %v1573 = vmax.f32 %v1531, 1e-24
          %v1574 = vmax.f32 %v1533, 1e-24
          %v1575 = vmax.f32 %v1535, 1e-24
          %v1576 = vmax.f32 %v1537, 1e-24
          %v1577 = vmax.f32 %v1539, 1e-24
          %v1578 = vmax.f32 %v1541, 1e-24
          %v1579 = vmax.f32 %v1543, 1e-24
          %v1580 = vmax.f32 %v1545, 1e-24
          %v1581 = vmax.f32 %v1547, 1e-24
          %v1582 = vmax.f32 %v1549, 1e-24
          %v1583 = vmax.f32 %v1551, 1e-24
          %v1584 = vrsqrt.pop %v1552
          %v1585 = vrsqrt.pop %v1553
          %v1586 = vrsqrt.pop %v1554
          %v1587 = vrsqrt.pop %v1555
          %v1588 = vrsqrt.pop %v1556
          %v1589 = vrsqrt.pop %v1557
          %v1590 = vrsqrt.pop %v1558
          %v1591 = vrsqrt.pop %v1559
          %v1592 = vrsqrt.pop %v1560
          %v1593 = vrsqrt.pop %v1561
          %v1594 = vrsqrt.pop %v1562
          %v1595 = vrsqrt.pop %v1563
          %v1596 = vrsqrt.pop %v1564
          %v1597 = vrsqrt.pop %v1565
          %v1598 = vrsqrt.pop %v1566
          %v1599 = vrsqrt.pop %v1567
          %v1600 = vrsqrt.pop %v1568
          %v1601 = vrsqrt.pop %v1569
          %v1602 = vrsqrt.pop %v1570
          %v1603 = vrsqrt.pop %v1571
          %v1604 = vrsqrt.pop %v1572
          %v1605 = vrsqrt.pop %v1573
          %v1606 = vrsqrt.pop %v1574
          %v1607 = vrsqrt.pop %v1575
          %v1608 = vrsqrt.pop %v1576
          %v1609 = vrsqrt.pop %v1577
          %v1610 = vrsqrt.pop %v1578
          %v1611 = vrsqrt.pop %v1579
          %v1612 = vrsqrt.pop %v1580
          %v1613 = vrsqrt.pop %v1581
          %v1614 = vrsqrt.pop %v1582
          %v1615 = vrsqrt.pop %v1583
          %v1616 = vmul.f32 %v1424, %v1584
          %v1617 = vmul.f32 %v1425, %v1585
          %v1618 = vmul.f32 %v1426, %v1586
          %v1619 = vmul.f32 %v1427, %v1587
          %v1620 = vmul.f32 %v1428, %v1588
          %v1621 = vmul.f32 %v1429, %v1589
          %v1622 = vmul.f32 %v1430, %v1590
          %v1623 = vmul.f32 %v1431, %v1591
          %v1624 = vmul.f32 %v1432, %v1592
          %v1625 = vmul.f32 %v1433, %v1593
          %v1626 = vmul.f32 %v1434, %v1594
          %v1627 = vmul.f32 %v1435, %v1595
          %v1628 = vmul.f32 %v1436, %v1596
          %v1629 = vmul.f32 %v1437, %v1597
          %v1630 = vmul.f32 %v1438, %v1598
          %v1631 = vmul.f32 %v1439, %v1599
          %v1632 = vmul.f32 %v1440, %v1600
          %v1633 = vmul.f32 %v1441, %v1601
          %v1634 = vmul.f32 %v1442, %v1602
          %v1635 = vmul.f32 %v1443, %v1603
          %v1636 = vmul.f32 %v1444, %v1604
          %v1637 = vmul.f32 %v1445, %v1605
          %v1638 = vmul.f32 %v1446, %v1606
          %v1639 = vmul.f32 %v1447, %v1607
          %v1640 = vmul.f32 %v1448, %v1608
          %v1641 = vmul.f32 %v1449, %v1609
          %v1642 = vmul.f32 %v1450, %v1610
          %v1643 = vmul.f32 %v1451, %v1611
          %v1644 = vmul.f32 %v1452, %v1612
          %v1645 = vmul.f32 %v1453, %v1613
          %v1646 = vmul.f32 %v1454, %v1614
          %v1647 = vmul.f32 %v1455, %v1615
          %1648 = vst [vmem:[%s313] sm:$0xff] %v1616
          %1649 = vst [vmem:[%s313 + $0x8] sm:$0xff] %v1617
          %1650 = vst [vmem:[%s313 + $0x10] sm:$0xff] %v1618
          %1651 = vst [vmem:[%s313 + $0x18] sm:$0xff] %v1619
          %1652 = vst [vmem:[%s313 + $0x20] sm:$0xff] %v1620
          %1653 = vst [vmem:[%s313 + $0x28] sm:$0xff] %v1621
          %1654 = vst [vmem:[%s313 + $0x30] sm:$0xff] %v1622
          %1655 = vst [vmem:[%s313 + $0x38] sm:$0xff] %v1623
          %1656 = vst [vmem:[%s313 + $0x40] sm:$0xff] %v1624
          %1657 = vst [vmem:[%s313 + $0x48] sm:$0xff] %v1625
          %1658 = vst [vmem:[%s313 + $0x50] sm:$0xff] %v1626
          %1659 = vst [vmem:[%s313 + $0x58] sm:$0xff] %v1627
          %1660 = vst [vmem:[%s313 + $0x60] sm:$0xff] %v1628
          %1661 = vst [vmem:[%s313 + $0x68] sm:$0xff] %v1629
          %1662 = vst [vmem:[%s313 + $0x70] sm:$0xff] %v1630
          %1663 = vst [vmem:[%s313 + $0x78] sm:$0xff] %v1631
          %1664 = vst [vmem:[%s313 + $0x80] sm:$0xff] %v1632
          %1665 = vst [vmem:[%s313 + $0x88] sm:$0xff] %v1633
          %1666 = vst [vmem:[%s313 + $0x90] sm:$0xff] %v1634
          %1667 = vst [vmem:[%s313 + $0x98] sm:$0xff] %v1635
          %1668 = vst [vmem:[%s313 + $0xa0] sm:$0xff] %v1636
          %1669 = vst [vmem:[%s313 + $0xa8] sm:$0xff] %v1637
          %1670 = vst [vmem:[%s313 + $0xb0] sm:$0xff] %v1638
          %1671 = vst [vmem:[%s313 + $0xb8] sm:$0xff] %v1639
          %1672 = vst [vmem:[%s313 + $0xc0] sm:$0xff] %v1640
          %1673 = vst [vmem:[%s313 + $0xc8] sm:$0xff] %v1641
          %1674 = vst [vmem:[%s313 + $0xd0] sm:$0xff] %v1642
          %1675 = vst [vmem:[%s313 + $0xd8] sm:$0xff] %v1643
          %1676 = vst [vmem:[%s313 + $0xe0] sm:$0xff] %v1644
          %1677 = vst [vmem:[%s313 + $0xe8] sm:$0xff] %v1645
          %1678 = vst [vmem:[%s313 + $0xf0] sm:$0xff] %v1646
          %1679 = vst [vmem:[%s313 + $0xf8] sm:$0xff] %v1647
        $region60: #{tpu_custom_call.1} parent=39 // pred_fallthru
          _
        %s1680 = sand.u32 %s168, 1
        %s1681 = scalar_lea.sflag [#allocation5], %s1680
        %s1682 = sand.u32 %s168, 1
        %s1683 = smul.addr %s1682, 256
        %s1684 = scalar_lea.vmem [#allocation9], %s1683
        // Predicated region
        $region61: #{tpu_custom_call.1} parent=39 // pred_check
          %p1685 = pneg %p178
        $region62: #{tpu_custom_call.1} parent=39 // pred_check_branch
          %1687 = sbr.rel (%p1685) target = $region64
        $region63: #{tpu_custom_call.1} parent=39 // pred_region
          %s1688 = smul.u32 32, %s27
          %s1690 = ssub.s32 4096, 4096
          %1691 = vsyncadd %s1681, %s1690
          %s1692 = smul.addr %s1688, 128
          %s1693 = scalar_lea.hbm %s5, %s1692
          %s1694 = sshll.u32 %s1684, 4
          %s1695 = int_to_ptr.vmem [resolvable:$true] %s1694
          %1700 = dma.vmem_to_hbm [thread:$0]  %s1695, 4096, %s1693, %s1681, 128, 128, 8
        $region64: #{tpu_custom_call.1} parent=39 // pred_fallthru
          _
      $region40: #{tpu_custom_call.1} parent=5 // pred_fallthru
        _
      %p1701 = scmp.le.s32.totalorder 2, %s18
      // Predicated region
      $region65: #{tpu_custom_call.1} parent=5 // pred_check
        %p1702 = pneg %p1701
      $region66: #{tpu_custom_call.1} parent=5 // pred_check_branch
        %1704 = sbr.rel (%p1702) target = $region68
      $region67: #{tpu_custom_call.1} parent=5 // pred_region
        %s1705 = ssub.s32 %s18, 2
        // Predicated region
        $region69: #{tpu_custom_call.1} parent=67 // pred_check
          %p1706 = pneg %p184
        $region70: #{tpu_custom_call.1} parent=67 // pred_check_branch
          %1708 = sbr.rel (%p1706) target = $region72
        $region71: #{tpu_custom_call.1} parent=67 // pred_region
          %s1709 = sand.u32 %s169, 1
          %s1710 = scalar_lea.sflag [#allocation5], %s1709
          %s1711 = sand.u32 %s169, 1
          %s1712 = smul.addr %s1711, 256
          %s1713 = scalar_lea.vmem [#allocation9], %s1712
          %1714 = dma.done %s1710, 4096
        $region72: #{tpu_custom_call.1} parent=67 // pred_fallthru
          _
      $region68: #{tpu_custom_call.1} parent=5 // pred_fallthru
        _
    $region6: #{tpu_custom_call.1} parent=1 // loop_footer
      %s22 = sadd.s32 1, %s18
    $region7: #{tpu_custom_call.1} parent=1 // loop_footer_branch
      %17 = sbr.rel target = $region3
    $region8: #{tpu_custom_call.1} parent=1 // loop_exit
      _
    %1715 = vsyncpa [#allocation4], 1
    %s1716 = scalar_lea.sflag [#allocation4], 1
    %1717 = vsyncpa %s1716, 1
    %1718 = vsyncpa [#allocation7], 1
    %1719 = vsyncpa [#allocation5], 1
    %s1720 = scalar_lea.sflag [#allocation5], 1
    %1721 = vsyncpa %s1720, 1

</llo_original>
